<compile_context>
chip_gen: v6e
topology: v6e:2x2x1
jax: 0.10.0
libtpu: 0.0.40
codegen_flags: <defaults>
</compile_context>

<pallas_src>
import functools
import math

import jax
import jax.numpy as jnp
from jax import lax
from jax.experimental import pallas as pl
from jax.experimental.pallas import tpu as pltpu

LANE = 128


def _round_up(x, m):
    return (x + m - 1) // m * m


def _same_pad(k, s):
    # Matches the PyTorch module: total p = k - s, left = ceil(p/2), right = floor(p/2)
    p = k - s
    return (p // 2 + p % 2, p // 2)


def _preferred_cout_tile():
    # v6e/v7x MXUs are 256 wide on the N dimension; v5e and older are 128 wide.
    try:
        kind = jax.devices()[0].device_kind.lower()
    except Exception:
        return 256
    if any(t in kind for t in ("v2", "v3", "v4", "v5")):
        return 128
    return 256


def _vmem_limit_bytes(needed_bytes):
    # Size the scoped-VMEM limit from the actual block bytes, capped below the
    # chip's physical VMEM (don't hardcode 64 MiB, which is all of v7x's VMEM).
    try:
        cap = int(pltpu.get_tpu_info().vmem_capacity_bytes)
    except Exception:
        cap = 64 * 1024 * 1024
    want = int(needed_bytes) + (8 << 20)
    return int(max(min(want, int(cap * 0.9)), 16 << 20))


def _conv3d_kernel(x_ref, w_ref, b_ref, o_ref, acc_ref, *, kH, kW, sH, sW, Ho, Wo):
    """One grid step = one (batch, cout-tile, out-depth, kd) cell.

    x_ref:   (Hp, Wp, Cin_p)         padded input depth slice d = do*sD + kd
    w_ref:   (kD*kH*kW, Cin_p, TCo)  tap-major weight slab for this Cout tile
    b_ref:   (1, TCo)                f32 bias tile
    o_ref:   (Ho, Wo, Co_out)        output tile (written on the last kd step)
    acc_ref: (Ho*Wo, TCo) f32        accumulator, persistent across the kd axis
    """
    kd = pl.program_id(3)
    Cin_p = x_ref.shape[-1]
    TCo = acc_ref.shape[-1]

    @pl.when(kd == 0)
    def _():
        acc_ref[...] = jnp.zeros_like(acc_ref)

    # Strided-spatial fallback loads the full slice once (TODO(synk): pre-split
    # W by sW in the wrapper so sH/sW > 1 taps stay contiguous, avoiding
    # strided in-VMEM slices on the sublane/lane axes).
    x_full = x_ref[...] if (sH != 1 or sW != 1) else None

    acc = acc_ref[...]
    for kh in range(kH):            # static unroll (kH, kW are small)
        for kw in range(kW):
            if sH == 1 and sW == 1:
                tap = x_ref[kh:kh + Ho, kw:kw + Wo, :]          # contiguous slice
            else:
                tap = lax.slice(x_full, (kh, kw, 0),
                                (kh + sH * (Ho - 1) + 1, kw + sW * (Wo - 1) + 1, Cin_p),
                                (sH, sW, 1))
            w_tap = w_ref[kd * (kH * kW) + kh * kW + kw]        # (Cin_p, TCo)
            # Per-tap accumulating MXU matmul (K = Cin_p), f32 accumulation.
            acc = acc + jnp.dot(tap.reshape(Ho * Wo, Cin_p), w_tap,
                                preferred_element_type=jnp.float32)
    acc_ref[...] = acc

    @pl.when(kd == pl.num_programs(3) - 1)
    def _():
        out = (acc_ref[...] + b_ref[...]).reshape(Ho, Wo, TCo)
        o_ref[...] = out[:, :, :o_ref.shape[-1]].astype(o_ref.dtype)


def same_pad_conv3d(x, weight, bias, stride=(1, 1, 1), compute_dtype=jnp.bfloat16):
    """SamePadConv3d.forward. x: (N,Cin,D,H,W), weight: (Cout,Cin,kD,kH,kW), bias: (Cout,).

    compute_dtype: MXU input dtype (bf16 by default; pass jnp.float32 for
    accuracy-sensitive layers with very large contractions).
    """
    if isinstance(stride, int):
        stride = (stride,) * 3
    N, Cin, D, H, W = x.shape
    Cout, Cin_w, kD, kH, kW = weight.shape
    assert Cin_w == Cin, (Cin_w, Cin)
    sD, sH, sW = stride
    for k_, s_ in zip((kD, kH, kW), stride):
        if k_ < s_:
            raise ValueError(f"same-pad conv requires kernel_size >= stride, got {k_} < {s_}")

    pd, ph, pw = _same_pad(kD, sD), _same_pad(kH, sH), _same_pad(kW, sW)
    Dp, Hp, Wp = D + sum(pd), H + sum(ph), W + sum(pw)
    Do, Ho, Wo = (Dp - kD) // sD + 1, (Hp - kH) // sH + 1, (Wp - kW) // sW + 1

    # Lane-dense channel padding.
    # TODO(synk): for small-channel layers (Cin << 128) repack (kh,kw,cin) into a
    # single contraction axis padded once to 128 to avoid ~Cin_p/Cin wasted MXU
    # work and inflated DMA.
    Cin_p = _round_up(Cin, LANE)
    Cout_p = _round_up(Cout, LANE)
    TCo = _preferred_cout_tile()
    if Cout_p % TCo != 0:
        TCo = LANE
    n_co = Cout_p // TCo
    # Single-tile case: emit exactly Cout channels (no padded-Cout write amplification).
    Co_out = Cout if n_co == 1 else Cout_p

    # NCDHW -> NDHWC, fused spatial same-pad + channel pad, cast to MXU dtype.
    # TODO(synk): keep channel-last (NDHWC) end-to-end in the surrounding model to
    # avoid this transpose and the final NCDHW transpose.
    x_nd = jnp.transpose(x, (0, 2, 3, 4, 1))
    x_p = jnp.pad(x_nd, ((0, 0), pd, ph, pw, (0, Cin_p - Cin))).astype(compute_dtype)

    # OIDHW -> (kD,kH,kW,Cin,Cout) -> channel pad -> tap-major (kD*kH*kW, Cin_p, Cout_p).
    w_t = jnp.transpose(weight, (2, 3, 4, 1, 0))
    w_p = jnp.pad(w_t, ((0, 0), (0, 0), (0, 0), (0, Cin_p - Cin), (0, Cout_p - Cout)))
    w_r = w_p.reshape(kD * kH * kW, Cin_p, Cout_p).astype(compute_dtype)
    b_p = jnp.pad(bias, (0, Cout_p - Cout)).astype(jnp.float32).reshape(1, Cout_p)

    kernel = functools.partial(_conv3d_kernel, kH=kH, kW=kW, sH=sH, sW=sW, Ho=Ho, Wo=Wo)

    # VMEM budget: double-buffered input/weight/bias/output blocks + f32 accumulator.
    cb = jnp.dtype(compute_dtype).itemsize
    ob = jnp.dtype(x.dtype).itemsize
    blk_bytes = (Hp * Wp * Cin_p * cb + kD * kH * kW * Cin_p * TCo * cb
                 + TCo * 4 + Ho * Wo * Co_out * ob)
    need = 2 * blk_bytes + Ho * Wo * TCo * 4
    # TODO(synk): add spatial (H) tiling with halo for very large H*W so the
    # per-step slice and accumulator stay bounded.

    out = pl.pallas_call(
        kernel,
        out_shape=jax.ShapeDtypeStruct((N, Do, Ho, Wo, Co_out), x.dtype),
        grid=(N, n_co, Do, kD),
        in_specs=[
            # One padded depth slice d = do*sD + kd: depth-banded streaming;
            # only O(Hp*Wp*Cin_p) resident (x2 pipeline buffers).
            pl.BlockSpec((None, None, Hp, Wp, Cin_p),
                         lambda n, co, do, kd: (n, do * sD + kd, 0, 0, 0)),
            # Weight/bias depend only on co -> VMEM-resident across all Do*kD steps.
            pl.BlockSpec((kD * kH * kW, Cin_p, TCo),
                         lambda n, co, do, kd: (0, 0, co)),
            pl.BlockSpec((1, TCo), lambda n, co, do, kd: (0, co)),
        ],
        out_specs=pl.BlockSpec((None, None, Ho, Wo, Cout if n_co == 1 else TCo),
                               lambda n, co, do, kd: (n, do, 0, 0, co)),
        scratch_shapes=[pltpu.VMEM((Ho * Wo, TCo), jnp.float32)],
        compiler_params=pltpu.CompilerParams(
            dimension_semantics=("parallel", "parallel", "parallel", "arbitrary"),
            vmem_limit_bytes=_vmem_limit_bytes(need),
        ),
    )(x_p, w_r, b_p)

    out = out[..., :Cout]                        # no-op when n_co == 1
    return jnp.transpose(out, (0, 4, 1, 2, 3))   # back to NCDHW (module contract)


def _reference(x, weight, bias, stride):
    if isinstance(stride, int):
        stride = (stride,) * 3
    kD, kH, kW = weight.shape[2:]
    pads = [_same_pad(k, s) for k, s in zip((kD, kH, kW), stride)]
    out = lax.conv_general_dilated(
        x.astype(jnp.float32), weight.astype(jnp.float32),
        window_strides=stride, padding=pads,
        dimension_numbers=("NCDHW", "OIDHW", "NCDHW"))
    return out + bias[None, :, None, None, None]


if __name__ == "__main__":
    key = jax.random.PRNGKey(0)
    k_x, k_w, k_b = jax.random.split(key, 3)

    # SamePadConv3d(in_channels=4, out_channels=8, kernel_size=3)
    N, Cin, Cout, D, H, W = 2, 4, 8, 8, 16, 16
    kD = kH = kW = 3
    x = jax.random.normal(k_x, (N, Cin, D, H, W), dtype=jnp.float32)

    # PyTorch Conv3d default init (kaiming-uniform bound).
    fan_in = Cin * kD * kH * kW
    bound = 1.0 / math.sqrt(fan_in)
    weight = jax.random.uniform(k_w, (Cout, Cin, kD, kH, kW), jnp.float32, -bound, bound)
    bias = jax.random.uniform(k_b, (Cout,), jnp.float32, -bound, bound)

    # stride=1 (module default) and a depth-strided variant (temporal downsample).
    for stride in ((1, 1, 1), (2, 1, 1)):
        out = jax.block_until_ready(same_pad_conv3d(x, weight, bias, stride=stride))
        ref = _reference(x, weight, bias, stride)
        assert out.shape == ref.shape, (out.shape, ref.shape)
        # bf16 MXU inputs vs f32 reference -> loose tolerance (K = 108 here).
        err = float(jnp.max(jnp.abs(out - ref)))
        assert err < 5e-2, ("mismatch vs reference", err)

    print("KERNEL_OK")
</pallas_src>

<mosaic_0001>
module attributes {stable_mosaic.version = 11 : i64} {
  func.func @_conv3d_kernel(%arg0: i32, %arg1: i32, %arg2: i32, %arg3: i32, %arg4: memref<1x1x18x18x128xbf16, #tpu.memory_space<vmem>>, %arg5: memref<27x128x128xbf16, #tpu.memory_space<vmem>>, %arg6: memref<1x128xf32, #tpu.memory_space<vmem>>, %arg7: memref<1x1x16x16x8xf32, #tpu.memory_space<vmem>>, %arg8: memref<256x128xf32, #tpu.memory_space<vmem>>) attributes {dimension_semantics = [#tpu.dimension_semantics<parallel>, #tpu.dimension_semantics<parallel>, #tpu.dimension_semantics<parallel>, #tpu.dimension_semantics<arbitrary>], iteration_bounds = array<i64: 2, 1, 8, 3>, scalar_prefetch = 0 : i64, scratch_operands = 1 : i64, tpu.core_type = #tpu.core_type<tc>, window_params = [{transform_indices = @transform_0, window_bounds = array<i64: 1, 1, 18, 18, 128>}, {transform_indices = @transform_1, window_bounds = array<i64: 27, 128, 128>}, {transform_indices = @transform_2, window_bounds = array<i64: 1, 128>}, {transform_indices = @transform_3, window_bounds = array<i64: 1, 1, 16, 16, 8>}]} {
    %c0_i32 = arith.constant 0 : i32
    %0 = arith.cmpi eq, %arg3, %c0_i32 : i32
    %1 = arith.extui %0 : i1 to i32
    %c0_i32_0 = arith.constant 0 : i32
    %2 = arith.cmpi ne, %1, %c0_i32_0 : i32
    scf.if %2 {
      %cst_97 = arith.constant 0.000000e+00 : f32
      %107 = vector.broadcast %cst_97 : f32 to vector<256x128xf32>
      %c0_98 = arith.constant 0 : index
      %c0_99 = arith.constant 0 : index
      %108 = vector.load %arg8[%c0_98, %c0_99] : memref<256x128xf32, #tpu.memory_space<vmem>>, vector<256x128xf32>
      tpu.vector_store %arg8[%c0_98, %c0_99], %107 {strides = array<i32>} : memref<256x128xf32, #tpu.memory_space<vmem>>, vector<256x128xf32>,
    } else {
    }
    %c0 = arith.constant 0 : index
    %c0_1 = arith.constant 0 : index
    %3 = vector.load %arg8[%c0, %c0_1] : memref<256x128xf32, #tpu.memory_space<vmem>>, vector<256x128xf32>
    %c0_2 = arith.constant 0 : index
    %c0_3 = arith.constant 0 : index
    %c0_4 = arith.constant 0 : index
    %c0_5 = arith.constant 0 : index
    %c0_6 = arith.constant 0 : index
    %4 = vector.load %arg4[%c0_2, %c0_3, %c0_4, %c0_5, %c0_6] : memref<1x1x18x18x128xbf16, #tpu.memory_space<vmem>>, vector<1x1x16x16x128xbf16>
    %5 = vector.shape_cast %4 : vector<1x1x16x16x128xbf16> to vector<16x16x128xbf16>
    %c9_i32 = arith.constant 9 : i32
    %6 = arith.muli %arg3, %c9_i32 : i32
    %c0_i32_7 = arith.constant 0 : i32
    %7 = arith.addi %6, %c0_i32_7 : i32
    %c0_i32_8 = arith.constant 0 : i32
    %8 = arith.addi %7, %c0_i32_8 : i32
    %9 = arith.index_cast %8 : i32 to index
    %c0_9 = arith.constant 0 : index
    %c0_10 = arith.constant 0 : index
    %10 = vector.load %arg5[%9, %c0_9, %c0_10] : memref<27x128x128xbf16, #tpu.memory_space<vmem>>, vector<1x128x128xbf16>
    %11 = vector.shape_cast %10 : vector<1x128x128xbf16> to vector<128x128xbf16>
    %12 = vector.shape_cast %5 : vector<16x16x128xbf16> to vector<256x128xbf16>
    %cst = arith.constant dense<0.000000e+00> : vector<256x128xf32>
    %13 = tpu.matmul %12, %11, %cst {dimension_numbers = #tpu.dot_dimension_numbers<[1], [0], [0], [1], [0, 0, 1, 1], [], []>} : vector<256x128xbf16>, vector<128x128xbf16>, vector<256x128xf32> -> vector<256x128xf32>
    %14 = arith.addf %3, %13 : vector<256x128xf32>
    %c0_11 = arith.constant 0 : index
    %c0_12 = arith.constant 0 : index
    %c0_13 = arith.constant 0 : index
    %c1 = arith.constant 1 : index
    %c0_14 = arith.constant 0 : index
    %15 = vector.load %arg4[%c0_11, %c0_12, %c0_13, %c1, %c0_14] : memref<1x1x18x18x128xbf16, #tpu.memory_space<vmem>>, vector<1x1x16x16x128xbf16>
    %16 = vector.shape_cast %15 : vector<1x1x16x16x128xbf16> to vector<16x16x128xbf16>
    %c9_i32_15 = arith.constant 9 : i32
    %17 = arith.muli %arg3, %c9_i32_15 : i32
    %c0_i32_16 = arith.constant 0 : i32
    %18 = arith.addi %17, %c0_i32_16 : i32
    %c1_i32 = arith.constant 1 : i32
    %19 = arith.addi %18, %c1_i32 : i32
    %20 = arith.index_cast %19 : i32 to index
    %c0_17 = arith.constant 0 : index
    %c0_18 = arith.constant 0 : index
    %21 = vector.load %arg5[%20, %c0_17, %c0_18] : memref<27x128x128xbf16, #tpu.memory_space<vmem>>, vector<1x128x128xbf16>
    %22 = vector.shape_cast %21 : vector<1x128x128xbf16> to vector<128x128xbf16>
    %23 = vector.shape_cast %16 : vector<16x16x128xbf16> to vector<256x128xbf16>
    %cst_19 = arith.constant dense<0.000000e+00> : vector<256x128xf32>
    %24 = tpu.matmul %23, %22, %cst_19 {dimension_numbers = #tpu.dot_dimension_numbers<[1], [0], [0], [1], [0, 0, 1, 1], [], []>} : vector<256x128xbf16>, vector<128x128xbf16>, vector<256x128xf32> -> vector<256x128xf32>
    %25 = arith.addf %14, %24 : vector<256x128xf32>
    %c0_20 = arith.constant 0 : index
    %c0_21 = arith.constant 0 : index
    %c0_22 = arith.constant 0 : index
    %c2 = arith.constant 2 : index
    %c0_23 = arith.constant 0 : index
    %26 = vector.load %arg4[%c0_20, %c0_21, %c0_22, %c2, %c0_23] : memref<1x1x18x18x128xbf16, #tpu.memory_space<vmem>>, vector<1x1x16x16x128xbf16>
    %27 = vector.shape_cast %26 : vector<1x1x16x16x128xbf16> to vector<16x16x128xbf16>
    %c9_i32_24 = arith.constant 9 : i32
    %28 = arith.muli %arg3, %c9_i32_24 : i32
    %c0_i32_25 = arith.constant 0 : i32
    %29 = arith.addi %28, %c0_i32_25 : i32
    %c2_i32 = arith.constant 2 : i32
    %30 = arith.addi %29, %c2_i32 : i32
    %31 = arith.index_cast %30 : i32 to index
    %c0_26 = arith.constant 0 : index
    %c0_27 = arith.constant 0 : index
    %32 = vector.load %arg5[%31, %c0_26, %c0_27] : memref<27x128x128xbf16, #tpu.memory_space<vmem>>, vector<1x128x128xbf16>
    %33 = vector.shape_cast %32 : vector<1x128x128xbf16> to vector<128x128xbf16>
    %34 = vector.shape_cast %27 : vector<16x16x128xbf16> to vector<256x128xbf16>
    %cst_28 = arith.constant dense<0.000000e+00> : vector<256x128xf32>
    %35 = tpu.matmul %34, %33, %cst_28 {dimension_numbers = #tpu.dot_dimension_numbers<[1], [0], [0], [1], [0, 0, 1, 1], [], []>} : vector<256x128xbf16>, vector<128x128xbf16>, vector<256x128xf32> -> vector<256x128xf32>
    %36 = arith.addf %25, %35 : vector<256x128xf32>
    %c0_29 = arith.constant 0 : index
    %c0_30 = arith.constant 0 : index
    %c1_31 = arith.constant 1 : index
    %c0_32 = arith.constant 0 : index
    %c0_33 = arith.constant 0 : index
    %37 = vector.load %arg4[%c0_29, %c0_30, %c1_31, %c0_32, %c0_33] : memref<1x1x18x18x128xbf16, #tpu.memory_space<vmem>>, vector<1x1x16x16x128xbf16>
    %38 = vector.shape_cast %37 : vector<1x1x16x16x128xbf16> to vector<16x16x128xbf16>
    %c9_i32_34 = arith.constant 9 : i32
    %39 = arith.muli %arg3, %c9_i32_34 : i32
    %c3_i32 = arith.constant 3 : i32
    %40 = arith.addi %39, %c3_i32 : i32
    %c0_i32_35 = arith.constant 0 : i32
    %41 = arith.addi %40, %c0_i32_35 : i32
    %42 = arith.index_cast %41 : i32 to index
    %c0_36 = arith.constant 0 : index
    %c0_37 = arith.constant 0 : index
    %43 = vector.load %arg5[%42, %c0_36, %c0_37] : memref<27x128x128xbf16, #tpu.memory_space<vmem>>, vector<1x128x128xbf16>
    %44 = vector.shape_cast %43 : vector<1x128x128xbf16> to vector<128x128xbf16>
    %45 = vector.shape_cast %38 : vector<16x16x128xbf16> to vector<256x128xbf16>
    %cst_38 = arith.constant dense<0.000000e+00> : vector<256x128xf32>
    %46 = tpu.matmul %45, %44, %cst_38 {dimension_numbers = #tpu.dot_dimension_numbers<[1], [0], [0], [1], [0, 0, 1, 1], [], []>} : vector<256x128xbf16>, vector<128x128xbf16>, vector<256x128xf32> -> vector<256x128xf32>
    %47 = arith.addf %36, %46 : vector<256x128xf32>
    %c0_39 = arith.constant 0 : index
    %c0_40 = arith.constant 0 : index
    %c1_41 = arith.constant 1 : index
    %c1_42 = arith.constant 1 : index
    %c0_43 = arith.constant 0 : index
    %48 = vector.load %arg4[%c0_39, %c0_40, %c1_41, %c1_42, %c0_43] : memref<1x1x18x18x128xbf16, #tpu.memory_space<vmem>>, vector<1x1x16x16x128xbf16>
    %49 = vector.shape_cast %48 : vector<1x1x16x16x128xbf16> to vector<16x16x128xbf16>
    %c9_i32_44 = arith.constant 9 : i32
    %50 = arith.muli %arg3, %c9_i32_44 : i32
    %c3_i32_45 = arith.constant 3 : i32
    %51 = arith.addi %50, %c3_i32_45 : i32
    %c1_i32_46 = arith.constant 1 : i32
    %52 = arith.addi %51, %c1_i32_46 : i32
    %53 = arith.index_cast %52 : i32 to index
    %c0_47 = arith.constant 0 : index
    %c0_48 = arith.constant 0 : index
    %54 = vector.load %arg5[%53, %c0_47, %c0_48] : memref<27x128x128xbf16, #tpu.memory_space<vmem>>, vector<1x128x128xbf16>
    %55 = vector.shape_cast %54 : vector<1x128x128xbf16> to vector<128x128xbf16>
    %56 = vector.shape_cast %49 : vector<16x16x128xbf16> to vector<256x128xbf16>
    %cst_49 = arith.constant dense<0.000000e+00> : vector<256x128xf32>
    %57 = tpu.matmul %56, %55, %cst_49 {dimension_numbers = #tpu.dot_dimension_numbers<[1], [0], [0], [1], [0, 0, 1, 1], [], []>} : vector<256x128xbf16>, vector<128x128xbf16>, vector<256x128xf32> -> vector<256x128xf32>
    %58 = arith.addf %47, %57 : vector<256x128xf32>
    %c0_50 = arith.constant 0 : index
    %c0_51 = arith.constant 0 : index
    %c1_52 = arith.constant 1 : index
    %c2_53 = arith.constant 2 : index
    %c0_54 = arith.constant 0 : index
    %59 = vector.load %arg4[%c0_50, %c0_51, %c1_52, %c2_53, %c0_54] : memref<1x1x18x18x128xbf16, #tpu.memory_space<vmem>>, vector<1x1x16x16x128xbf16>
    %60 = vector.shape_cast %59 : vector<1x1x16x16x128xbf16> to vector<16x16x128xbf16>
    %c9_i32_55 = arith.constant 9 : i32
    %61 = arith.muli %arg3, %c9_i32_55 : i32
    %c3_i32_56 = arith.constant 3 : i32
    %62 = arith.addi %61, %c3_i32_56 : i32
    %c2_i32_57 = arith.constant 2 : i32
    %63 = arith.addi %62, %c2_i32_57 : i32
    %64 = arith.index_cast %63 : i32 to index
    %c0_58 = arith.constant 0 : index
    %c0_59 = arith.constant 0 : index
    %65 = vector.load %arg5[%64, %c0_58, %c0_59] : memref<27x128x128xbf16, #tpu.memory_space<vmem>>, vector<1x128x128xbf16>
    %66 = vector.shape_cast %65 : vector<1x128x128xbf16> to vector<128x128xbf16>
    %67 = vector.shape_cast %60 : vector<16x16x128xbf16> to vector<256x128xbf16>
    %cst_60 = arith.constant dense<0.000000e+00> : vector<256x128xf32>
    %68 = tpu.matmul %67, %66, %cst_60 {dimension_numbers = #tpu.dot_dimension_numbers<[1], [0], [0], [1], [0, 0, 1, 1], [], []>} : vector<256x128xbf16>, vector<128x128xbf16>, vector<256x128xf32> -> vector<256x128xf32>
    %69 = arith.addf %58, %68 : vector<256x128xf32>
    %c0_61 = arith.constant 0 : index
    %c0_62 = arith.constant 0 : index
    %c2_63 = arith.constant 2 : index
    %c0_64 = arith.constant 0 : index
    %c0_65 = arith.constant 0 : index
    %70 = vector.load %arg4[%c0_61, %c0_62, %c2_63, %c0_64, %c0_65] : memref<1x1x18x18x128xbf16, #tpu.memory_space<vmem>>, vector<1x1x16x16x128xbf16>
    %71 = vector.shape_cast %70 : vector<1x1x16x16x128xbf16> to vector<16x16x128xbf16>
    %c9_i32_66 = arith.constant 9 : i32
    %72 = arith.muli %arg3, %c9_i32_66 : i32
    %c6_i32 = arith.constant 6 : i32
    %73 = arith.addi %72, %c6_i32 : i32
    %c0_i32_67 = arith.constant 0 : i32
    %74 = arith.addi %73, %c0_i32_67 : i32
    %75 = arith.index_cast %74 : i32 to index
    %c0_68 = arith.constant 0 : index
    %c0_69 = arith.constant 0 : index
    %76 = vector.load %arg5[%75, %c0_68, %c0_69] : memref<27x128x128xbf16, #tpu.memory_space<vmem>>, vector<1x128x128xbf16>
    %77 = vector.shape_cast %76 : vector<1x128x128xbf16> to vector<128x128xbf16>
    %78 = vector.shape_cast %71 : vector<16x16x128xbf16> to vector<256x128xbf16>
    %cst_70 = arith.constant dense<0.000000e+00> : vector<256x128xf32>
    %79 = tpu.matmul %78, %77, %cst_70 {dimension_numbers = #tpu.dot_dimension_numbers<[1], [0], [0], [1], [0, 0, 1, 1], [], []>} : vector<256x128xbf16>, vector<128x128xbf16>, vector<256x128xf32> -> vector<256x128xf32>
    %80 = arith.addf %69, %79 : vector<256x128xf32>
    %c0_71 = arith.constant 0 : index
    %c0_72 = arith.constant 0 : index
    %c2_73 = arith.constant 2 : index
    %c1_74 = arith.constant 1 : index
    %c0_75 = arith.constant 0 : index
    %81 = vector.load %arg4[%c0_71, %c0_72, %c2_73, %c1_74, %c0_75] : memref<1x1x18x18x128xbf16, #tpu.memory_space<vmem>>, vector<1x1x16x16x128xbf16>
    %82 = vector.shape_cast %81 : vector<1x1x16x16x128xbf16> to vector<16x16x128xbf16>
    %c9_i32_76 = arith.constant 9 : i32
    %83 = arith.muli %arg3, %c9_i32_76 : i32
    %c6_i32_77 = arith.constant 6 : i32
    %84 = arith.addi %83, %c6_i32_77 : i32
    %c1_i32_78 = arith.constant 1 : i32
    %85 = arith.addi %84, %c1_i32_78 : i32
    %86 = arith.index_cast %85 : i32 to index
    %c0_79 = arith.constant 0 : index
    %c0_80 = arith.constant 0 : index
    %87 = vector.load %arg5[%86, %c0_79, %c0_80] : memref<27x128x128xbf16, #tpu.memory_space<vmem>>, vector<1x128x128xbf16>
    %88 = vector.shape_cast %87 : vector<1x128x128xbf16> to vector<128x128xbf16>
    %89 = vector.shape_cast %82 : vector<16x16x128xbf16> to vector<256x128xbf16>
    %cst_81 = arith.constant dense<0.000000e+00> : vector<256x128xf32>
    %90 = tpu.matmul %89, %88, %cst_81 {dimension_numbers = #tpu.dot_dimension_numbers<[1], [0], [0], [1], [0, 0, 1, 1], [], []>} : vector<256x128xbf16>, vector<128x128xbf16>, vector<256x128xf32> -> vector<256x128xf32>
    %91 = arith.addf %80, %90 : vector<256x128xf32>
    %c0_82 = arith.constant 0 : index
    %c0_83 = arith.constant 0 : index
    %c2_84 = arith.constant 2 : index
    %c2_85 = arith.constant 2 : index
    %c0_86 = arith.constant 0 : index
    %92 = vector.load %arg4[%c0_82, %c0_83, %c2_84, %c2_85, %c0_86] : memref<1x1x18x18x128xbf16, #tpu.memory_space<vmem>>, vector<1x1x16x16x128xbf16>
    %93 = vector.shape_cast %92 : vector<1x1x16x16x128xbf16> to vector<16x16x128xbf16>
    %c9_i32_87 = arith.constant 9 : i32
    %94 = arith.muli %arg3, %c9_i32_87 : i32
    %c6_i32_88 = arith.constant 6 : i32
    %95 = arith.addi %94, %c6_i32_88 : i32
    %c2_i32_89 = arith.constant 2 : i32
    %96 = arith.addi %95, %c2_i32_89 : i32
    %97 = arith.index_cast %96 : i32 to index
    %c0_90 = arith.constant 0 : index
    %c0_91 = arith.constant 0 : index
    %98 = vector.load %arg5[%97, %c0_90, %c0_91] : memref<27x128x128xbf16, #tpu.memory_space<vmem>>, vector<1x128x128xbf16>
    %99 = vector.shape_cast %98 : vector<1x128x128xbf16> to vector<128x128xbf16>
    %100 = vector.shape_cast %93 : vector<16x16x128xbf16> to vector<256x128xbf16>
    %cst_92 = arith.constant dense<0.000000e+00> : vector<256x128xf32>
    %101 = tpu.matmul %100, %99, %cst_92 {dimension_numbers = #tpu.dot_dimension_numbers<[1], [0], [0], [1], [0, 0, 1, 1], [], []>} : vector<256x128xbf16>, vector<128x128xbf16>, vector<256x128xf32> -> vector<256x128xf32>
    %102 = arith.addf %91, %101 : vector<256x128xf32>
    %c0_93 = arith.constant 0 : index
    %c0_94 = arith.constant 0 : index
    %103 = vector.load %arg8[%c0_93, %c0_94] : memref<256x128xf32, #tpu.memory_space<vmem>>, vector<256x128xf32>
    tpu.vector_store %arg8[%c0_93, %c0_94], %102 {strides = array<i32>} : memref<256x128xf32, #tpu.memory_space<vmem>>, vector<256x128xf32>,
    %c2_i32_95 = arith.constant 2 : i32
    %104 = arith.cmpi eq, %arg3, %c2_i32_95 : i32
    %105 = arith.extui %104 : i1 to i32
    %c0_i32_96 = arith.constant 0 : i32
    %106 = arith.cmpi ne, %105, %c0_i32_96 : i32
    scf.if %106 {
      %c0_97 = arith.constant 0 : index
      %c0_98 = arith.constant 0 : index
      %107 = vector.load %arg8[%c0_97, %c0_98] : memref<256x128xf32, #tpu.memory_space<vmem>>, vector<256x128xf32>
      %c0_99 = arith.constant 0 : index
      %c0_100 = arith.constant 0 : index
      %108 = vector.load %arg6[%c0_99, %c0_100] : memref<1x128xf32, #tpu.memory_space<vmem>>, vector<1x128xf32>
      %109 = vector.broadcast %108 : vector<1x128xf32> to vector<256x128xf32>
      %110 = arith.addf %107, %109 : vector<256x128xf32>
      %111 = vector.shape_cast %110 : vector<256x128xf32> to vector<16x16x128xf32>
      %112 = vector.extract_strided_slice %111 {offsets = [0, 0, 0], sizes = [16, 16, 8], strides = [1, 1, 1]} : vector<16x16x128xf32> to vector<16x16x8xf32>
      %c0_101 = arith.constant 0 : index
      %c0_102 = arith.constant 0 : index
      %c0_103 = arith.constant 0 : index
      %c0_104 = arith.constant 0 : index
      %c0_105 = arith.constant 0 : index
      %113 = vector.load %arg7[%c0_101, %c0_102, %c0_103, %c0_104, %c0_105] : memref<1x1x16x16x8xf32, #tpu.memory_space<vmem>>, vector<1x1x16x16x8xf32>
      %114 = vector.shape_cast %113 : vector<1x1x16x16x8xf32> to vector<16x16x8xf32>
      %115 = vector.shape_cast %112 : vector<16x16x8xf32> to vector<1x1x16x16x8xf32>
      tpu.vector_store %arg7[%c0_101, %c0_102, %c0_103, %c0_104, %c0_105], %115 {strides = array<i32>} : memref<1x1x16x16x8xf32, #tpu.memory_space<vmem>>, vector<1x1x16x16x8xf32>,
    } else {
    }
    return
  }
  func.func @transform_0(%arg0: i32, %arg1: i32, %arg2: i32, %arg3: i32) -> (i32, i32, i32, i32, i32) {
    %c1_i32 = arith.constant 1 : i32
    %0 = arith.muli %arg2, %c1_i32 : i32
    %1 = arith.addi %0, %arg3 : i32
    %c0_i32 = arith.constant 0 : i32
    %c0_i32_0 = arith.constant 0 : i32
    %c0_i32_1 = arith.constant 0 : i32
    %c0_i32_2 = arith.constant 0 : i32
    return %arg0, %1, %c0_i32, %c0_i32_0, %c0_i32_1 : i32, i32, i32, i32, i32
  }
  func.func @transform_1(%arg0: i32, %arg1: i32, %arg2: i32, %arg3: i32) -> (i32, i32, i32) {
    %c0_i32 = arith.constant 0 : i32
    %c0_i32_0 = arith.constant 0 : i32
    %c0_i32_1 = arith.constant 0 : i32
    return %c0_i32, %c0_i32_0, %arg1 : i32, i32, i32
  }
  func.func @transform_2(%arg0: i32, %arg1: i32, %arg2: i32, %arg3: i32) -> (i32, i32) {
    %c0_i32 = arith.constant 0 : i32
    %c0_i32_0 = arith.constant 0 : i32
    return %c0_i32, %arg1 : i32, i32
  }
  func.func @transform_3(%arg0: i32, %arg1: i32, %arg2: i32, %arg3: i32) -> (i32, i32, i32, i32, i32) {
    %c0_i32 = arith.constant 0 : i32
    %c0_i32_0 = arith.constant 0 : i32
    %c0_i32_1 = arith.constant 0 : i32
    return %arg0, %arg2, %c0_i32, %c0_i32_0, %arg1 : i32, i32, i32, i32, i32
  }
}

</mosaic_0001>

<llo_original>
// kernel: tpu_custom_call.1
$region0: #{tpu_custom_call.1}
  #allocation0 [shape = 'u32[]', space=smem, size = 0x4, offset = 0x4, fixed_abs, tag = 'smem constant byte address 0x4 - core index']
  #allocation1 [shape = 'u32[144,128]{1,0:T(1,128)}', space=vmem, size = 0x12000, scoped, tag = 'internal scratch']
  #allocation2 [shape = 'f32[256,128]{1,0:T(8,128)}', space=vmem, size = 0x20000, scoped, tag = 'scratch operand']
  %s0 = inlined_call_operand.vmem [shape: bf16[2,10,18,18,128], index: 0, kind: input, shape index: {}]
  %s1 = inlined_call_operand.vmem [shape: bf16[27,128,128], index: 1, kind: input, shape index: {}]
  %s2 = inlined_call_operand.vmem [shape: f32[1,128], index: 2, kind: input, shape index: {}]
  %s3 = inlined_call_operand.vmem [shape: f32[2,8,16,16,8], index: 3, kind: output, shape index: {}]
  %s4 = sld [smem:[#allocation0]]
  $region53: #{tpu_custom_call.1} parent=0
    _
  %s6 = ssub.s32 1, %s4
  %s7 = scalar_select 0, %s6, %s4
  loop: start=0, step=1, limit=50
  $region2: #{tpu_custom_call.1} parent=0 // loop_pre_header
    _
  $region3: #{tpu_custom_call.1} parent=0 // loop_header
    %s9 = sphi 0, %s13
    %p10 = scmp.ge.s32.totalorder %s9, 50
    %s16 = sphi 0, %s42
    %s17 = sphi 0, %s38
    %s18 = sphi 0, %s34
    %s19 = sphi 0, %s30
    %s20 = sphi 0, %s16
    %s21 = sphi 0, %s17
    %s22 = sphi 0, %s18
    %s23 = sphi 0, %s19
    %s24 = sphi 0, %s20
    %s25 = sphi 0, %s21
    %s26 = sphi 0, %s22
    %s27 = sphi 0, %s23
    %s49 = sphi 0, %s51
    %s52 = sphi 0, %s49
    %s53 = sphi 0, %s52
    %s69 = sphi 0, %s53
    %s75 = sphi 0, %s77
    %s78 = sphi 0, %s75
    %s79 = sphi 0, %s78
    %s95 = sphi 0, %s79
    %s101 = sphi 0, %s103
    %s104 = sphi 0, %s101
    %s105 = sphi 0, %s104
    %s121 = sphi 0, %s105
    %s131 = sphi 0, %s133
    %s134 = sphi 0, %s131
    %s135 = sphi 0, %s134
    %s151 = sphi 0, %s135
  $region4: #{tpu_custom_call.1} parent=0 // loop_header_branch
    %12 = sbr.rel (%p10) target = $region8
  $region5: #{tpu_custom_call.1} parent=0 // loop_body
    %s14 = ssub.s32 %s9, 1
    %s15 = ssub.s32 %s9, 2
    %s28 = sadd.s32 1, %s19
    %p29 = scmp.ge.s32.totalorder %s28, 3
    %s30 = scalar_select %p29, 0, %s28
    %s31 = sadd.s32 1, %s18
    %s32 = scalar_select %p29, %s31, %s18
    %p33 = scmp.ge.s32.totalorder %s32, 8
    %s34 = scalar_select %p33, 0, %s32
    %s35 = sadd.s32 1, %s17
    %s36 = scalar_select %p33, %s35, %s17
    %p37 = scmp.ge.s32.totalorder %s36, 1
    %s38 = scalar_select %p37, 0, %s36
    %s39 = sadd.s32 1, %s16
    %s40 = scalar_select %p37, %s39, %s16
    %p41 = scmp.ge.s32.totalorder %s40, 2
    %s42 = scalar_select %p41, 0, %s40
    %s43 = sadd.s32 %s18, %s19
    %s44 = sadd.s32 %s34, %s30
    %s45 = ssub.s32 %s16, %s42
    %s46 = ssub.s32 %s43, %s44
    %s47 = sor.u32 %s45, %s46
    %p48 = scmp.eq.s32.totalorder %s47, 0
    %s50 = sadd.s32 %s49, 1
    %s51 = scalar_select %p48, %s49, %s50
    %p54 = pneg %p48
    %p55 = scmp.eq.s32.totalorder %s9, 47
    %p56 = por %p54, %p55
    %p57 = scmp.ne.s32.totalorder %s49, %s52
    %p58 = scmp.eq.s32.totalorder %s9, 0
    %p59 = por %p57, %p58
    %p60 = scmp.ne.s32.totalorder %s49, %s52
    %p61 = scmp.eq.s32.totalorder %s14, 47
    %p62 = por %p60, %p61
    %p63 = scmp.ne.s32.totalorder %s52, %s53
    %p64 = scmp.eq.s32.totalorder %s14, 0
    %p65 = por %p63, %p64
    %p66 = scmp.ne.s32.totalorder %s52, %s53
    %p67 = scmp.eq.s32.totalorder %s15, 47
    %p68 = por %p66, %p67
    %p70 = scmp.ne.s32.totalorder %s53, %s69
    %p71 = scmp.eq.s32.totalorder %s15, 0
    %p72 = por %p70, %p71
    %s73 = ssub.s32 %s17, %s38
    %p74 = scmp.eq.s32.totalorder %s73, 0
    %s76 = sadd.s32 %s75, 1
    %s77 = scalar_select %p74, %s75, %s76
    %p80 = pneg %p74
    %p81 = scmp.eq.s32.totalorder %s9, 47
    %p82 = por %p80, %p81
    %p83 = scmp.ne.s32.totalorder %s75, %s78
    %p84 = scmp.eq.s32.totalorder %s9, 0
    %p85 = por %p83, %p84
    %p86 = scmp.ne.s32.totalorder %s75, %s78
    %p87 = scmp.eq.s32.totalorder %s14, 47
    %p88 = por %p86, %p87
    %p89 = scmp.ne.s32.totalorder %s78, %s79
    %p90 = scmp.eq.s32.totalorder %s14, 0
    %p91 = por %p89, %p90
    %p92 = scmp.ne.s32.totalorder %s78, %s79
    %p93 = scmp.eq.s32.totalorder %s15, 47
    %p94 = por %p92, %p93
    %p96 = scmp.ne.s32.totalorder %s79, %s95
    %p97 = scmp.eq.s32.totalorder %s15, 0
    %p98 = por %p96, %p97
    %s99 = ssub.s32 %s17, %s38
    %p100 = scmp.eq.s32.totalorder %s99, 0
    %s102 = sadd.s32 %s101, 1
    %s103 = scalar_select %p100, %s101, %s102
    %p106 = pneg %p100
    %p107 = scmp.eq.s32.totalorder %s9, 47
    %p108 = por %p106, %p107
    %p109 = scmp.ne.s32.totalorder %s101, %s104
    %p110 = scmp.eq.s32.totalorder %s9, 0
    %p111 = por %p109, %p110
    %p112 = scmp.ne.s32.totalorder %s101, %s104
    %p113 = scmp.eq.s32.totalorder %s14, 47
    %p114 = por %p112, %p113
    %p115 = scmp.ne.s32.totalorder %s104, %s105
    %p116 = scmp.eq.s32.totalorder %s14, 0
    %p117 = por %p115, %p116
    %p118 = scmp.ne.s32.totalorder %s104, %s105
    %p119 = scmp.eq.s32.totalorder %s15, 47
    %p120 = por %p118, %p119
    %p122 = scmp.ne.s32.totalorder %s105, %s121
    %p123 = scmp.eq.s32.totalorder %s15, 0
    %p124 = por %p122, %p123
    %s125 = ssub.s32 %s16, %s42
    %s126 = ssub.s32 %s18, %s34
    %s127 = sor.u32 %s125, %s126
    %s128 = ssub.s32 %s17, %s38
    %s129 = sor.u32 %s127, %s128
    %p130 = scmp.eq.s32.totalorder %s129, 0
    %s132 = sadd.s32 %s131, 1
    %s133 = scalar_select %p130, %s131, %s132
    %p136 = pneg %p130
    %p137 = scmp.eq.s32.totalorder %s9, 47
    %p138 = por %p136, %p137
    %p139 = scmp.ne.s32.totalorder %s131, %s134
    %p140 = scmp.eq.s32.totalorder %s9, 0
    %p141 = por %p139, %p140
    %p142 = scmp.ne.s32.totalorder %s131, %s134
    %p143 = scmp.eq.s32.totalorder %s14, 47
    %p144 = por %p142, %p143
    %p145 = scmp.ne.s32.totalorder %s134, %s135
    %p146 = scmp.eq.s32.totalorder %s14, 0
    %p147 = por %p145, %p146
    %p148 = scmp.ne.s32.totalorder %s134, %s135
    %p149 = scmp.eq.s32.totalorder %s15, 47
    %p150 = por %p148, %p149
    %p152 = scmp.ne.s32.totalorder %s135, %s151
    %p153 = scmp.eq.s32.totalorder %s15, 0
    %p154 = por %p152, %p153
    %p155 = scmp.le.s32.totalorder 1, %s9
    %p156 = scmp.lt.s32.totalorder %s9, 49
    %p157 = pnand %p155, %p156
    %p158 = pneg %p157
    // Predicated region
    $region9: #{tpu_custom_call.1} parent=5 // pred_check
      _
    $region10: #{tpu_custom_call.1} parent=5 // pred_check_branch
      %160 = sbr.rel (%p157) target = $region12
    $region11: #{tpu_custom_call.1} parent=5 // pred_region
      %s161 = ssub.s32 %s9, 1
      // Predicated region
      $region13: #{tpu_custom_call.1} parent=11 // pred_check
        %p162 = pneg %p91
      $region14: #{tpu_custom_call.1} parent=11 // pred_check_branch
        %164 = sbr.rel (%p162) target = $region16
      $region15: #{tpu_custom_call.1} parent=11 // pred_region
        %p165 = scmp.lt.s32.totalorder %s21, 0
        %s166 = scalar_select %p165, %s21, 0
        %s167 = smul.addr %s166, 4
        %s168 = scalar_lea.vmem %s1, %s167
      $region16: #{tpu_custom_call.1} parent=11 // pred_fallthru
        _
      // Predicated region
      $region17: #{tpu_custom_call.1} parent=11 // pred_check
        %p169 = pneg %p117
      $region18: #{tpu_custom_call.1} parent=11 // pred_check_branch
        %171 = sbr.rel (%p169) target = $region20
      $region19: #{tpu_custom_call.1} parent=11 // pred_region
        %p172 = scmp.lt.s32.totalorder %s21, 0
        %s173 = scalar_select %p172, %s21, 0
        %s174 = scalar_lea.vmem %s2, %s173
      $region20: #{tpu_custom_call.1} parent=11 // pred_fallthru
        _
    $region12: #{tpu_custom_call.1} parent=5 // pred_fallthru
      _
    %p175 = scmp.lt.s32.totalorder %s9, 48
    // Predicated region
    $region21: #{tpu_custom_call.1} parent=5 // pred_check
      %p176 = pneg %p175
    $region22: #{tpu_custom_call.1} parent=5 // pred_check_branch
      %178 = sbr.rel (%p176) target = $region24
    $region23: #{tpu_custom_call.1} parent=5 // pred_region
      // Predicated region
      $region25: #{tpu_custom_call.1} parent=23 // pred_check
        %p179 = pneg %p59
      $region26: #{tpu_custom_call.1} parent=23 // pred_check_branch
        %181 = sbr.rel (%p179) target = $region28
      $region27: #{tpu_custom_call.1} parent=23 // pred_region
        %s182 = sadd.s32 %s18, %s19
        %p183 = scmp.lt.s32.totalorder %s16, 1
        %s184 = scalar_select %p183, %s16, 1
        %p185 = scmp.lt.s32.totalorder %s182, 9
        %s186 = scalar_select %p185, %s182, 9
        %s187 = smul.addr %s186, 54
        %s188 = smul.addr %s184, 540
        %s189 = sadd.s32 %s187, %s188
        %s190 = smul.addr %s189, 4
        %s191 = scalar_lea.vmem %s0, %s190
        %s192 = sadd.s32 %s18, %s19
      $region28: #{tpu_custom_call.1} parent=23 // pred_fallthru
        _
    $region24: #{tpu_custom_call.1} parent=5 // pred_fallthru
      _
    %p193 = scmp.le.s32.totalorder 1, %s9
    %p194 = scmp.lt.s32.totalorder %s9, 49
    %p195 = pnand %p193, %p194
    %p196 = pneg %p195
    // Predicated region
    $region29: #{tpu_custom_call.1} parent=5 // pred_check
      _
    $region30: #{tpu_custom_call.1} parent=5 // pred_check_branch
      %198 = sbr.rel (%p195) target = $region32
    $region31: #{tpu_custom_call.1} parent=5 // pred_region
      %s199 = ssub.s32 %s9, 1
      %s200 = sadd.s32 %s22, %s23
      %p201 = scmp.lt.s32.totalorder %s20, 1
      %s202 = scalar_select %p201, %s20, 1
      %p203 = scmp.lt.s32.totalorder %s200, 9
      %s204 = scalar_select %p203, %s200, 9
      %s205 = smul.addr %s204, 54
      %s206 = smul.addr %s202, 540
      %s207 = sadd.s32 %s205, %s206
      %s208 = smul.addr %s207, 4
      %s209 = scalar_lea.vmem %s0, %s208
      %p210 = pneg %p65
      %p211 = pneg %p62
      %p212 = scmp.lt.s32.totalorder %s21, 0
      %s213 = scalar_select %p212, %s21, 0
      %s214 = smul.addr %s213, 4
      %s215 = scalar_lea.vmem %s1, %s214
      %p216 = pneg %p91
      %p217 = pneg %p88
      %p218 = scmp.lt.s32.totalorder %s21, 0
      %s219 = scalar_select %p218, %s21, 0
      %s220 = scalar_lea.vmem %s2, %s219
      %p221 = pneg %p117
      %p222 = pneg %p114
      %p223 = pneg %p147
      %p224 = pneg %p144
      %p225 = scmp.lt.s32.totalorder %s20, 1
      %s226 = scalar_select %p225, %s20, 1
      %p227 = scmp.lt.s32.totalorder %s22, 7
      %s228 = scalar_select %p227, %s22, 7
      %p229 = scmp.lt.s32.totalorder %s21, 0
      %s230 = scalar_select %p229, %s21, 0
      %s231 = smul.addr %s228, 32
      %s232 = sadd.s32 %s230, %s231
      %s233 = smul.addr %s226, 256
      %s234 = sadd.s32 %s232, %s233
      %s235 = smul.addr %s234, 8
      %s236 = scalar_lea.vmem %s3, %s235
      %s237 = sadd.s32 %s22, %s23
      %p238 = scmp.lt.s32.totalorder %s20, 1
      %s239 = scalar_select %p238, %s20, 1
      %p240 = scmp.lt.s32.totalorder %s237, 9
      %s241 = scalar_select %p240, %s237, 9
      %s242 = smul.addr %s241, 54
      %s243 = smul.addr %s239, 540
      %s244 = sadd.s32 %s242, %s243
      %s245 = smul.addr %s244, 4
      %s246 = scalar_lea.vmem %s0, %s245
      %s247 = sadd.s32 %s22, %s23
      %p248 = scmp.lt.s32.totalorder %s21, 0
      %s249 = scalar_select %p248, %s21, 0
      %s250 = smul.addr %s249, 4
      %s251 = scalar_lea.vmem %s1, %s250
      %p252 = scmp.lt.s32.totalorder %s21, 0
      %s253 = scalar_select %p252, %s21, 0
      %s254 = scalar_lea.vmem %s2, %s253
      %p255 = scmp.lt.s32.totalorder %s20, 1
      %s256 = scalar_select %p255, %s20, 1
      %p257 = scmp.lt.s32.totalorder %s22, 7
      %s258 = scalar_select %p257, %s22, 7
      %p259 = scmp.lt.s32.totalorder %s21, 0
      %s260 = scalar_select %p259, %s21, 0
      %s261 = smul.addr %s258, 32
      %s262 = sadd.s32 %s260, %s261
      %s263 = smul.addr %s256, 256
      %s264 = sadd.s32 %s262, %s263
      %s265 = smul.addr %s264, 8
      %s266 = scalar_lea.vmem %s3, %s265
      %p268 = scmp.eq.s32.totalorder %s23, 0
      // Predicated region
      $region33: #{tpu_custom_call.1} parent=31 // pred_check
        %p269 = pneg %p268
      $region34: #{tpu_custom_call.1} parent=31 // pred_check_branch
        %271 = sbr.rel (%p269) target = $region36
      $region35: #{tpu_custom_call.1} parent=31 // pred_region
        %272 = vst [vmem:[#allocation2] sm:$0xff] 0.0
        %273 = vst [vmem:[#allocation2 + $0x8] sm:$0xff] 0.0
        %274 = vst [vmem:[#allocation2 + $0x10] sm:$0xff] 0.0
        %275 = vst [vmem:[#allocation2 + $0x18] sm:$0xff] 0.0
        %276 = vst [vmem:[#allocation2 + $0x20] sm:$0xff] 0.0
        %277 = vst [vmem:[#allocation2 + $0x28] sm:$0xff] 0.0
        %278 = vst [vmem:[#allocation2 + $0x30] sm:$0xff] 0.0
        %279 = vst [vmem:[#allocation2 + $0x38] sm:$0xff] 0.0
        %280 = vst [vmem:[#allocation2 + $0x40] sm:$0xff] 0.0
        %281 = vst [vmem:[#allocation2 + $0x48] sm:$0xff] 0.0
        %282 = vst [vmem:[#allocation2 + $0x50] sm:$0xff] 0.0
        %283 = vst [vmem:[#allocation2 + $0x58] sm:$0xff] 0.0
        %284 = vst [vmem:[#allocation2 + $0x60] sm:$0xff] 0.0
        %285 = vst [vmem:[#allocation2 + $0x68] sm:$0xff] 0.0
        %286 = vst [vmem:[#allocation2 + $0x70] sm:$0xff] 0.0
        %287 = vst [vmem:[#allocation2 + $0x78] sm:$0xff] 0.0
        %288 = vst [vmem:[#allocation2 + $0x80] sm:$0xff] 0.0
        %289 = vst [vmem:[#allocation2 + $0x88] sm:$0xff] 0.0
        %290 = vst [vmem:[#allocation2 + $0x90] sm:$0xff] 0.0
        %291 = vst [vmem:[#allocation2 + $0x98] sm:$0xff] 0.0
        %292 = vst [vmem:[#allocation2 + $0xa0] sm:$0xff] 0.0
        %293 = vst [vmem:[#allocation2 + $0xa8] sm:$0xff] 0.0
        %294 = vst [vmem:[#allocation2 + $0xb0] sm:$0xff] 0.0
        %295 = vst [vmem:[#allocation2 + $0xb8] sm:$0xff] 0.0
        %296 = vst [vmem:[#allocation2 + $0xc0] sm:$0xff] 0.0
        %297 = vst [vmem:[#allocation2 + $0xc8] sm:$0xff] 0.0
        %298 = vst [vmem:[#allocation2 + $0xd0] sm:$0xff] 0.0
        %299 = vst [vmem:[#allocation2 + $0xd8] sm:$0xff] 0.0
        %300 = vst [vmem:[#allocation2 + $0xe0] sm:$0xff] 0.0
        %301 = vst [vmem:[#allocation2 + $0xe8] sm:$0xff] 0.0
        %302 = vst [vmem:[#allocation2 + $0xf0] sm:$0xff] 0.0
        %303 = vst [vmem:[#allocation2 + $0xf8] sm:$0xff] 0.0
      $region36: #{tpu_custom_call.1} parent=31 // pred_fallthru
        _
      %v304 = vld [vmem:[#allocation2] sm:$0xff]
      %v305 = vld [vmem:[#allocation2 + $0x8] sm:$0xff]
      %v306 = vld [vmem:[#allocation2 + $0x10] sm:$0xff]
      %v307 = vld [vmem:[#allocation2 + $0x18] sm:$0xff]
      %v308 = vld [vmem:[#allocation2 + $0x20] sm:$0xff]
      %v309 = vld [vmem:[#allocation2 + $0x28] sm:$0xff]
      %v310 = vld [vmem:[#allocation2 + $0x30] sm:$0xff]
      %v311 = vld [vmem:[#allocation2 + $0x38] sm:$0xff]
      %v312 = vld [vmem:[#allocation2 + $0x40] sm:$0xff]
      %v313 = vld [vmem:[#allocation2 + $0x48] sm:$0xff]
      %v314 = vld [vmem:[#allocation2 + $0x50] sm:$0xff]
      %v315 = vld [vmem:[#allocation2 + $0x58] sm:$0xff]
      %v316 = vld [vmem:[#allocation2 + $0x60] sm:$0xff]
      %v317 = vld [vmem:[#allocation2 + $0x68] sm:$0xff]
      %v318 = vld [vmem:[#allocation2 + $0x70] sm:$0xff]
      %v319 = vld [vmem:[#allocation2 + $0x78] sm:$0xff]
      %v320 = vld [vmem:[#allocation2 + $0x80] sm:$0xff]
      %v321 = vld [vmem:[#allocation2 + $0x88] sm:$0xff]
      %v322 = vld [vmem:[#allocation2 + $0x90] sm:$0xff]
      %v323 = vld [vmem:[#allocation2 + $0x98] sm:$0xff]
      %v324 = vld [vmem:[#allocation2 + $0xa0] sm:$0xff]
      %v325 = vld [vmem:[#allocation2 + $0xa8] sm:$0xff]
      %v326 = vld [vmem:[#allocation2 + $0xb0] sm:$0xff]
      %v327 = vld [vmem:[#allocation2 + $0xb8] sm:$0xff]
      %v328 = vld [vmem:[#allocation2 + $0xc0] sm:$0xff]
      %v329 = vld [vmem:[#allocation2 + $0xc8] sm:$0xff]
      %v330 = vld [vmem:[#allocation2 + $0xd0] sm:$0xff]
      %v331 = vld [vmem:[#allocation2 + $0xd8] sm:$0xff]
      %v332 = vld [vmem:[#allocation2 + $0xe0] sm:$0xff]
      %v333 = vld [vmem:[#allocation2 + $0xe8] sm:$0xff]
      %v334 = vld [vmem:[#allocation2 + $0xf0] sm:$0xff]
      %v335 = vld [vmem:[#allocation2 + $0xf8] sm:$0xff]
      %v336 = vld [vmem:[%s246] sm:$0xf]
      %v337 = vld [vmem:[%s246 + $0x4] sm:$0xf]
      %v338 = vld [vmem:[%s246 + $0xc] sm:$0xf]
      %v339 = vld [vmem:[%s246 + $0x10] sm:$0xf]
      %v340 = vld [vmem:[%s246 + $0x18] sm:$0xf]
      %v341 = vld [vmem:[%s246 + $0x1c] sm:$0xf]
      %v342 = vld [vmem:[%s246 + $0x24] sm:$0xf]
      %v343 = vld [vmem:[%s246 + $0x28] sm:$0xf]
      %v344 = vld [vmem:[%s246 + $0x30] sm:$0xf]
      %v345 = vld [vmem:[%s246 + $0x34] sm:$0xf]
      %v346 = vld [vmem:[%s246 + $0x3c] sm:$0xf]
      %v347 = vld [vmem:[%s246 + $0x40] sm:$0xf]
      %v348 = vld [vmem:[%s246 + $0x48] sm:$0xf]
      %v349 = vld [vmem:[%s246 + $0x4c] sm:$0xf]
      %v350 = vld [vmem:[%s246 + $0x54] sm:$0xf]
      %v351 = vld [vmem:[%s246 + $0x58] sm:$0xf]
      %v352 = vld [vmem:[%s246 + $0x60] sm:$0xf]
      %v353 = vld [vmem:[%s246 + $0x64] sm:$0xf]
      %v354 = vld [vmem:[%s246 + $0x6c] sm:$0xf]
      %v355 = vld [vmem:[%s246 + $0x70] sm:$0xf]
      %v356 = vld [vmem:[%s246 + $0x78] sm:$0xf]
      %v357 = vld [vmem:[%s246 + $0x7c] sm:$0xf]
      %v358 = vld [vmem:[%s246 + $0x84] sm:$0xf]
      %v359 = vld [vmem:[%s246 + $0x88] sm:$0xf]
      %v360 = vld [vmem:[%s246 + $0x90] sm:$0xf]
      %v361 = vld [vmem:[%s246 + $0x94] sm:$0xf]
      %v362 = vld [vmem:[%s246 + $0x9c] sm:$0xf]
      %v363 = vld [vmem:[%s246 + $0xa0] sm:$0xf]
      %v364 = vld [vmem:[%s246 + $0xa8] sm:$0xf]
      %v365 = vld [vmem:[%s246 + $0xac] sm:$0xf]
      %v366 = vld [vmem:[%s246 + $0xb4] sm:$0xf]
      %v367 = vld [vmem:[%s246 + $0xb8] sm:$0xf]
      %s368 = smul.u32 %s23, 9
      %s369 = smul.u32 %s368, 16
      %s370 = smul.addr %s369, 4
      %s371 = scalar_lea.vmem %s251, %s370
      %v372 = vld [vmem:[%s371] sm:$0xf]
      %v373 = vld [vmem:[%s371 + $0x4] sm:$0xf]
      %v374 = vld [vmem:[%s371 + $0x8] sm:$0xf]
      %v375 = vld [vmem:[%s371 + $0xc] sm:$0xf]
      %v376 = vld [vmem:[%s371 + $0x10] sm:$0xf]
      %v377 = vld [vmem:[%s371 + $0x14] sm:$0xf]
      %v378 = vld [vmem:[%s371 + $0x18] sm:$0xf]
      %v379 = vld [vmem:[%s371 + $0x1c] sm:$0xf]
      %v380 = vld [vmem:[%s371 + $0x20] sm:$0xf]
      %v381 = vld [vmem:[%s371 + $0x24] sm:$0xf]
      %v382 = vld [vmem:[%s371 + $0x28] sm:$0xf]
      %v383 = vld [vmem:[%s371 + $0x2c] sm:$0xf]
      %v384 = vld [vmem:[%s371 + $0x30] sm:$0xf]
      %v385 = vld [vmem:[%s371 + $0x34] sm:$0xf]
      %v386 = vld [vmem:[%s371 + $0x38] sm:$0xf]
      %v387 = vld [vmem:[%s371 + $0x3c] sm:$0xf]
      %v420 = vunpack.c.l.b16 %v336
      %v421 = vunpack.c.l.b16 %v337
      %v422 = vunpack.c.l.b16 %v338
      %v423 = vunpack.c.l.b16 %v339
      %v424 = vunpack.c.l.b16 %v340
      %v425 = vunpack.c.l.b16 %v341
      %v426 = vunpack.c.l.b16 %v342
      %v427 = vunpack.c.l.b16 %v343
      %v428 = vunpack.c.l.b16 %v344
      %v429 = vunpack.c.l.b16 %v345
      %v430 = vunpack.c.l.b16 %v346
      %v431 = vunpack.c.l.b16 %v347
      %v432 = vunpack.c.l.b16 %v348
      %v433 = vunpack.c.l.b16 %v349
      %v434 = vunpack.c.l.b16 %v350
      %v435 = vunpack.c.l.b16 %v351
      %v436 = vunpack.c.l.b16 %v352
      %v437 = vunpack.c.l.b16 %v353
      %v438 = vunpack.c.l.b16 %v354
      %v439 = vunpack.c.l.b16 %v355
      %v440 = vunpack.c.l.b16 %v356
      %v441 = vunpack.c.l.b16 %v357
      %v442 = vunpack.c.l.b16 %v358
      %v443 = vunpack.c.l.b16 %v359
      %v444 = vunpack.c.l.b16 %v360
      %v445 = vunpack.c.l.b16 %v361
      %v446 = vunpack.c.l.b16 %v362
      %v447 = vunpack.c.l.b16 %v363
      %v448 = vunpack.c.l.b16 %v364
      %v449 = vunpack.c.l.b16 %v365
      %v450 = vunpack.c.l.b16 %v366
      %v451 = vunpack.c.l.b16 %v367
      %v452 = vpack.c.b16 %v421, %v420
      %v453 = vpack.c.b16 %v423, %v422
      %v454 = vpack.c.b16 %v425, %v424
      %v455 = vpack.c.b16 %v427, %v426
      %v456 = vpack.c.b16 %v429, %v428
      %v457 = vpack.c.b16 %v431, %v430
      %v458 = vpack.c.b16 %v433, %v432
      %v459 = vpack.c.b16 %v435, %v434
      %v460 = vpack.c.b16 %v437, %v436
      %v461 = vpack.c.b16 %v439, %v438
      %v462 = vpack.c.b16 %v441, %v440
      %v463 = vpack.c.b16 %v443, %v442
      %v464 = vpack.c.b16 %v445, %v444
      %v465 = vpack.c.b16 %v447, %v446
      %v466 = vpack.c.b16 %v449, %v448
      %v467 = vpack.c.b16 %v451, %v450
      %v500 = vunpack.c.l.b16 %v372
      %v501 = vunpack.c.l.b16 %v373
      %v502 = vunpack.c.l.b16 %v374
      %v503 = vunpack.c.l.b16 %v375
      %v504 = vunpack.c.l.b16 %v376
      %v505 = vunpack.c.l.b16 %v377
      %v506 = vunpack.c.l.b16 %v378
      %v507 = vunpack.c.l.b16 %v379
      %v508 = vunpack.c.l.b16 %v380
      %v509 = vunpack.c.l.b16 %v381
      %v510 = vunpack.c.l.b16 %v382
      %v511 = vunpack.c.l.b16 %v383
      %v512 = vunpack.c.l.b16 %v384
      %v513 = vunpack.c.l.b16 %v385
      %v514 = vunpack.c.l.b16 %v386
      %v515 = vunpack.c.l.b16 %v387
      %v516 = vpack.c.b16 %v501, %v500
      %v517 = vpack.c.b16 %v503, %v502
      %v518 = vpack.c.b16 %v505, %v504
      %v519 = vpack.c.b16 %v507, %v506
      %v520 = vpack.c.b16 %v509, %v508
      %v521 = vpack.c.b16 %v511, %v510
      %v522 = vpack.c.b16 %v513, %v512
      %v523 = vpack.c.b16 %v515, %v514
      %532 = vmatprep.subr.bf16.mxu0 0
      %533 = vmatpush1.bf16.msra.mxu0 %v523
      %534 = vmatprep.subr.bf16.mxu0 0
      %535 = vmatpush1.bf16.msra.mxu0 %v522
      %536 = vmatprep.subr.bf16.mxu0 0
      %537 = vmatpush1.bf16.msra.mxu0 %v521
      %538 = vmatprep.subr.bf16.mxu0 0
      %539 = vmatpush1.bf16.msra.mxu0 %v520
      %540 = vmatprep.subr.bf16.mxu0 0
      %541 = vmatpush1.bf16.msra.mxu0 %v519
      %542 = vmatprep.subr.bf16.mxu0 0
      %543 = vmatpush1.bf16.msra.mxu0 %v518
      %544 = vmatprep.subr.bf16.mxu0 0
      %545 = vmatpush1.bf16.msra.mxu0 %v517
      %546 = vmatprep.subr.bf16.mxu0 0
      %547 = vmatpush1.bf16.msra.mxu0 %v516
      %548 = vmatprep.subr.bf16.mxu0 0
      %549 = vmatpush2.bf16.msra.mxu0 0
      %550 = vmatprep.subr.bf16.mxu0 0
      %551 = vmatpush2.bf16.msra.mxu0 0
      %552 = vmatprep.subr.bf16.mxu0 0
      %553 = vmatpush2.bf16.msra.mxu0 0
      %554 = vmatprep.subr.bf16.mxu0 0
      %555 = vmatpush2.bf16.msra.mxu0 0
      %556 = vmatprep.subr.bf16.mxu0 0
      %557 = vmatpush2.bf16.msra.mxu0 0
      %558 = vmatprep.subr.bf16.mxu0 0
      %559 = vmatpush2.bf16.msra.mxu0 0
      %560 = vmatprep.subr.bf16.mxu0 0
      %561 = vmatpush2.bf16.msra.mxu0 0
      %562 = vmatprep.subr.bf16.mxu0 0
      %563 = vmatpush2.bf16.msra.mxu0 0
      %564 = vmatprep.mubr.bf16.mxu0 0
      %565 = vmatmul.mubr.bf16.gmra.mxu0 %v452
      %v566 = vpop.f32.mrf.mxu0
      %v567 = vadd.f32 0.0, %v566
      %v568 = vpop.f32.mrf.mxu0
      %v569 = vpop.f32.mrf.mxu0
      %v570 = vadd.f32 0.0, %v569
      %v571 = vpop.f32.mrf.mxu0
      %572 = vmatprep.mubr.bf16.mxu0 0
      %573 = vmatmul.mubr.bf16.gmra.mxu0 %v453
      %v574 = vpop.f32.mrf.mxu0
      %v575 = vadd.f32 0.0, %v574
      %v576 = vpop.f32.mrf.mxu0
      %v577 = vpop.f32.mrf.mxu0
      %v578 = vadd.f32 0.0, %v577
      %v579 = vpop.f32.mrf.mxu0
      %580 = vmatprep.mubr.bf16.mxu0 0
      %581 = vmatmul.mubr.bf16.gmra.mxu0 %v454
      %v582 = vpop.f32.mrf.mxu0
      %v583 = vadd.f32 0.0, %v582
      %v584 = vpop.f32.mrf.mxu0
      %v585 = vpop.f32.mrf.mxu0
      %v586 = vadd.f32 0.0, %v585
      %v587 = vpop.f32.mrf.mxu0
      %588 = vmatprep.mubr.bf16.mxu0 0
      %589 = vmatmul.mubr.bf16.gmra.mxu0 %v455
      %v590 = vpop.f32.mrf.mxu0
      %v591 = vadd.f32 0.0, %v590
      %v592 = vpop.f32.mrf.mxu0
      %v593 = vpop.f32.mrf.mxu0
      %v594 = vadd.f32 0.0, %v593
      %v595 = vpop.f32.mrf.mxu0
      %596 = vmatprep.mubr.bf16.mxu0 0
      %597 = vmatmul.mubr.bf16.gmra.mxu0 %v456
      %v598 = vpop.f32.mrf.mxu0
      %v599 = vadd.f32 0.0, %v598
      %v600 = vpop.f32.mrf.mxu0
      %v601 = vpop.f32.mrf.mxu0
      %v602 = vadd.f32 0.0, %v601
      %v603 = vpop.f32.mrf.mxu0
      %604 = vmatprep.mubr.bf16.mxu0 0
      %605 = vmatmul.mubr.bf16.gmra.mxu0 %v457
      %v606 = vpop.f32.mrf.mxu0
      %v607 = vadd.f32 0.0, %v606
      %v608 = vpop.f32.mrf.mxu0
      %v609 = vpop.f32.mrf.mxu0
      %v610 = vadd.f32 0.0, %v609
      %v611 = vpop.f32.mrf.mxu0
      %612 = vmatprep.mubr.bf16.mxu0 0
      %613 = vmatmul.mubr.bf16.gmra.mxu0 %v458
      %v614 = vpop.f32.mrf.mxu0
      %v615 = vadd.f32 0.0, %v614
      %v616 = vpop.f32.mrf.mxu0
      %v617 = vpop.f32.mrf.mxu0
      %v618 = vadd.f32 0.0, %v617
      %v619 = vpop.f32.mrf.mxu0
      %620 = vmatprep.mubr.bf16.mxu0 0
      %621 = vmatmul.mubr.bf16.gmra.mxu0 %v459
      %v622 = vpop.f32.mrf.mxu0
      %v623 = vadd.f32 0.0, %v622
      %v624 = vpop.f32.mrf.mxu0
      %v625 = vpop.f32.mrf.mxu0
      %v626 = vadd.f32 0.0, %v625
      %v627 = vpop.f32.mrf.mxu0
      %628 = vmatprep.mubr.bf16.mxu0 0
      %629 = vmatmul.mubr.bf16.gmra.mxu0 %v460
      %v630 = vpop.f32.mrf.mxu0
      %v631 = vadd.f32 0.0, %v630
      %v632 = vpop.f32.mrf.mxu0
      %v633 = vpop.f32.mrf.mxu0
      %v634 = vadd.f32 0.0, %v633
      %v635 = vpop.f32.mrf.mxu0
      %636 = vmatprep.mubr.bf16.mxu0 0
      %637 = vmatmul.mubr.bf16.gmra.mxu0 %v461
      %v638 = vpop.f32.mrf.mxu0
      %v639 = vadd.f32 0.0, %v638
      %v640 = vpop.f32.mrf.mxu0
      %v641 = vpop.f32.mrf.mxu0
      %v642 = vadd.f32 0.0, %v641
      %v643 = vpop.f32.mrf.mxu0
      %644 = vmatprep.mubr.bf16.mxu0 0
      %645 = vmatmul.mubr.bf16.gmra.mxu0 %v462
      %v646 = vpop.f32.mrf.mxu0
      %v647 = vadd.f32 0.0, %v646
      %v648 = vpop.f32.mrf.mxu0
      %v649 = vpop.f32.mrf.mxu0
      %v650 = vadd.f32 0.0, %v649
      %v651 = vpop.f32.mrf.mxu0
      %652 = vmatprep.mubr.bf16.mxu0 0
      %653 = vmatmul.mubr.bf16.gmra.mxu0 %v463
      %v654 = vpop.f32.mrf.mxu0
      %v655 = vadd.f32 0.0, %v654
      %v656 = vpop.f32.mrf.mxu0
      %v657 = vpop.f32.mrf.mxu0
      %v658 = vadd.f32 0.0, %v657
      %v659 = vpop.f32.mrf.mxu0
      %660 = vmatprep.mubr.bf16.mxu0 0
      %661 = vmatmul.mubr.bf16.gmra.mxu0 %v464
      %v662 = vpop.f32.mrf.mxu0
      %v663 = vadd.f32 0.0, %v662
      %v664 = vpop.f32.mrf.mxu0
      %v665 = vpop.f32.mrf.mxu0
      %v666 = vadd.f32 0.0, %v665
      %v667 = vpop.f32.mrf.mxu0
      %668 = vmatprep.mubr.bf16.mxu0 0
      %669 = vmatmul.mubr.bf16.gmra.mxu0 %v465
      %v670 = vpop.f32.mrf.mxu0
      %v671 = vadd.f32 0.0, %v670
      %v672 = vpop.f32.mrf.mxu0
      %v673 = vpop.f32.mrf.mxu0
      %v674 = vadd.f32 0.0, %v673
      %v675 = vpop.f32.mrf.mxu0
      %676 = vmatprep.mubr.bf16.mxu0 0
      %677 = vmatmul.mubr.bf16.gmra.mxu0 %v466
      %v678 = vpop.f32.mrf.mxu0
      %v679 = vadd.f32 0.0, %v678
      %v680 = vpop.f32.mrf.mxu0
      %v681 = vpop.f32.mrf.mxu0
      %v682 = vadd.f32 0.0, %v681
      %v683 = vpop.f32.mrf.mxu0
      %684 = vmatprep.mubr.bf16.mxu0 0
      %685 = vmatmul.mubr.bf16.gmra.mxu0 %v467
      %v686 = vpop.f32.mrf.mxu0
      %v687 = vadd.f32 0.0, %v686
      %v688 = vpop.f32.mrf.mxu0
      %v689 = vpop.f32.mrf.mxu0
      %v690 = vadd.f32 0.0, %v689
      %v691 = vpop.f32.mrf.mxu0
      %692 = vdwg.mxu0
      %v693 = vadd.f32 %v304, %v567
      %v694 = vadd.f32 %v305, %v570
      %v695 = vadd.f32 %v306, %v575
      %v696 = vadd.f32 %v307, %v578
      %v697 = vadd.f32 %v308, %v583
      %v698 = vadd.f32 %v309, %v586
      %v699 = vadd.f32 %v310, %v591
      %v700 = vadd.f32 %v311, %v594
      %v701 = vadd.f32 %v312, %v599
      %v702 = vadd.f32 %v313, %v602
      %v703 = vadd.f32 %v314, %v607
      %v704 = vadd.f32 %v315, %v610
      %v705 = vadd.f32 %v316, %v615
      %v706 = vadd.f32 %v317, %v618
      %v707 = vadd.f32 %v318, %v623
      %v708 = vadd.f32 %v319, %v626
      %v709 = vadd.f32 %v320, %v631
      %v710 = vadd.f32 %v321, %v634
      %v711 = vadd.f32 %v322, %v639
      %v712 = vadd.f32 %v323, %v642
      %v713 = vadd.f32 %v324, %v647
      %v714 = vadd.f32 %v325, %v650
      %v715 = vadd.f32 %v326, %v655
      %v716 = vadd.f32 %v327, %v658
      %v717 = vadd.f32 %v328, %v663
      %v718 = vadd.f32 %v329, %v666
      %v719 = vadd.f32 %v330, %v671
      %v720 = vadd.f32 %v331, %v674
      %v721 = vadd.f32 %v332, %v679
      %v722 = vadd.f32 %v333, %v682
      %v723 = vadd.f32 %v334, %v687
      %v724 = vadd.f32 %v335, %v690
      %v725 = vld [vmem:[%s246] sm:$0xf]
      %v726 = vld [vmem:[%s246 + $0x4] sm:$0xf]
      %v727 = vld [vmem:[%s246 + $0x8] sm:$0x1]
      %v728 = vld [vmem:[%s246 + $0xc] sm:$0xf]
      %v729 = vld [vmem:[%s246 + $0x10] sm:$0xf]
      %v730 = vld [vmem:[%s246 + $0x14] sm:$0x1]
      %v731 = vld [vmem:[%s246 + $0x18] sm:$0xf]
      %v732 = vld [vmem:[%s246 + $0x1c] sm:$0xf]
      %v733 = vld [vmem:[%s246 + $0x20] sm:$0x1]
      %v734 = vld [vmem:[%s246 + $0x24] sm:$0xf]
      %v735 = vld [vmem:[%s246 + $0x28] sm:$0xf]
      %v736 = vld [vmem:[%s246 + $0x2c] sm:$0x1]
      %v737 = vld [vmem:[%s246 + $0x30] sm:$0xf]
      %v738 = vld [vmem:[%s246 + $0x34] sm:$0xf]
      %v739 = vld [vmem:[%s246 + $0x38] sm:$0x1]
      %v740 = vld [vmem:[%s246 + $0x3c] sm:$0xf]
      %v741 = vld [vmem:[%s246 + $0x40] sm:$0xf]
      %v742 = vld [vmem:[%s246 + $0x44] sm:$0x1]
      %v743 = vld [vmem:[%s246 + $0x48] sm:$0xf]
      %v744 = vld [vmem:[%s246 + $0x4c] sm:$0xf]
      %v745 = vld [vmem:[%s246 + $0x50] sm:$0x1]
      %v746 = vld [vmem:[%s246 + $0x54] sm:$0xf]
      %v747 = vld [vmem:[%s246 + $0x58] sm:$0xf]
      %v748 = vld [vmem:[%s246 + $0x5c] sm:$0x1]
      %v749 = vld [vmem:[%s246 + $0x60] sm:$0xf]
      %v750 = vld [vmem:[%s246 + $0x64] sm:$0xf]
      %v751 = vld [vmem:[%s246 + $0x68] sm:$0x1]
      %v752 = vld [vmem:[%s246 + $0x6c] sm:$0xf]
      %v753 = vld [vmem:[%s246 + $0x70] sm:$0xf]
      %v754 = vld [vmem:[%s246 + $0x74] sm:$0x1]
      %v755 = vld [vmem:[%s246 + $0x78] sm:$0xf]
      %v756 = vld [vmem:[%s246 + $0x7c] sm:$0xf]
      %v757 = vld [vmem:[%s246 + $0x80] sm:$0x1]
      %v758 = vld [vmem:[%s246 + $0x84] sm:$0xf]
      %v759 = vld [vmem:[%s246 + $0x88] sm:$0xf]
      %v760 = vld [vmem:[%s246 + $0x8c] sm:$0x1]
      %v761 = vld [vmem:[%s246 + $0x90] sm:$0xf]
      %v762 = vld [vmem:[%s246 + $0x94] sm:$0xf]
      %v763 = vld [vmem:[%s246 + $0x98] sm:$0x1]
      %v764 = vld [vmem:[%s246 + $0x9c] sm:$0xf]
      %v765 = vld [vmem:[%s246 + $0xa0] sm:$0xf]
      %v766 = vld [vmem:[%s246 + $0xa4] sm:$0x1]
      %v767 = vld [vmem:[%s246 + $0xa8] sm:$0xf]
      %v768 = vld [vmem:[%s246 + $0xac] sm:$0xf]
      %v769 = vld [vmem:[%s246 + $0xb0] sm:$0x1]
      %v770 = vld [vmem:[%s246 + $0xb4] sm:$0xf]
      %v771 = vld [vmem:[%s246 + $0xb8] sm:$0xf]
      %v772 = vld [vmem:[%s246 + $0xbc] sm:$0x1]
      %s773 = sadd.s32 %s368, 1
      %s774 = smul.u32 %s773, 16
      %s775 = smul.addr %s774, 4
      %s776 = scalar_lea.vmem %s251, %s775
      %v777 = vld [vmem:[%s776] sm:$0xf]
      %v778 = vld [vmem:[%s776 + $0x4] sm:$0xf]
      %v779 = vld [vmem:[%s776 + $0x8] sm:$0xf]
      %v780 = vld [vmem:[%s776 + $0xc] sm:$0xf]
      %v781 = vld [vmem:[%s776 + $0x10] sm:$0xf]
      %v782 = vld [vmem:[%s776 + $0x14] sm:$0xf]
      %v783 = vld [vmem:[%s776 + $0x18] sm:$0xf]
      %v784 = vld [vmem:[%s776 + $0x1c] sm:$0xf]
      %v785 = vld [vmem:[%s776 + $0x20] sm:$0xf]
      %v786 = vld [vmem:[%s776 + $0x24] sm:$0xf]
      %v787 = vld [vmem:[%s776 + $0x28] sm:$0xf]
      %v788 = vld [vmem:[%s776 + $0x2c] sm:$0xf]
      %v789 = vld [vmem:[%s776 + $0x30] sm:$0xf]
      %v790 = vld [vmem:[%s776 + $0x34] sm:$0xf]
      %v791 = vld [vmem:[%s776 + $0x38] sm:$0xf]
      %v792 = vld [vmem:[%s776 + $0x3c] sm:$0xf]
      %vm793 = vsmask.f32 3328
      %vm794 = vsmask.f32 7440
      %vm795 = vmor %vm793, %vm794
      %v797 = vshrl.u32 %v725, 16
      %v799 = vrot.slane %v797, 4
      %v800 = vshll.u32 %v725, 16
      %v802 = vrot.slane %v800, 5
      %v803 = vor.u32 %v799, %v802
      %v804 = vrot.slane %v803, 4
      %v806 = vshll.u32 %v726, 16
      %v808 = vrot.slane %v806, 5
      %v809 = vsel %vm795, %v804, %v808
      %v810 = vshrl.u32 %v726, 16
      %v812 = vrot.slane %v810, 4
      %v813 = vor.u32 %v812, %v808
      %v814 = vrot.slane %v813, 4
      %v816 = vshll.u32 %v727, 16
      %v818 = vrot.slane %v816, 5
      %v819 = vsel %vm795, %v814, %v818
      %v821 = vshrl.u32 %v728, 16
      %v823 = vrot.slane %v821, 4
      %v824 = vshll.u32 %v728, 16
      %v826 = vrot.slane %v824, 5
      %v827 = vor.u32 %v823, %v826
      %v828 = vrot.slane %v827, 4
      %v830 = vshll.u32 %v729, 16
      %v832 = vrot.slane %v830, 5
      %v833 = vsel %vm795, %v828, %v832
      %v834 = vshrl.u32 %v729, 16
      %v836 = vrot.slane %v834, 4
      %v837 = vor.u32 %v836, %v832
      %v838 = vrot.slane %v837, 4
      %v840 = vshll.u32 %v730, 16
      %v842 = vrot.slane %v840, 5
      %v843 = vsel %vm795, %v838, %v842
      %v845 = vshrl.u32 %v731, 16
      %v847 = vrot.slane %v845, 4
      %v848 = vshll.u32 %v731, 16
      %v850 = vrot.slane %v848, 5
      %v851 = vor.u32 %v847, %v850
      %v852 = vrot.slane %v851, 4
      %v854 = vshll.u32 %v732, 16
      %v856 = vrot.slane %v854, 5
      %v857 = vsel %vm795, %v852, %v856
      %v858 = vshrl.u32 %v732, 16
      %v860 = vrot.slane %v858, 4
      %v861 = vor.u32 %v860, %v856
      %v862 = vrot.slane %v861, 4
      %v864 = vshll.u32 %v733, 16
      %v866 = vrot.slane %v864, 5
      %v867 = vsel %vm795, %v862, %v866
      %v869 = vshrl.u32 %v734, 16
      %v871 = vrot.slane %v869, 4
      %v872 = vshll.u32 %v734, 16
      %v874 = vrot.slane %v872, 5
      %v875 = vor.u32 %v871, %v874
      %v876 = vrot.slane %v875, 4
      %v878 = vshll.u32 %v735, 16
      %v880 = vrot.slane %v878, 5
      %v881 = vsel %vm795, %v876, %v880
      %v882 = vshrl.u32 %v735, 16
      %v884 = vrot.slane %v882, 4
      %v885 = vor.u32 %v884, %v880
      %v886 = vrot.slane %v885, 4
      %v888 = vshll.u32 %v736, 16
      %v890 = vrot.slane %v888, 5
      %v891 = vsel %vm795, %v886, %v890
      %v893 = vshrl.u32 %v737, 16
      %v895 = vrot.slane %v893, 4
      %v896 = vshll.u32 %v737, 16
      %v898 = vrot.slane %v896, 5
      %v899 = vor.u32 %v895, %v898
      %v900 = vrot.slane %v899, 4
      %v902 = vshll.u32 %v738, 16
      %v904 = vrot.slane %v902, 5
      %v905 = vsel %vm795, %v900, %v904
      %v906 = vshrl.u32 %v738, 16
      %v908 = vrot.slane %v906, 4
      %v909 = vor.u32 %v908, %v904
      %v910 = vrot.slane %v909, 4
      %v912 = vshll.u32 %v739, 16
      %v914 = vrot.slane %v912, 5
      %v915 = vsel %vm795, %v910, %v914
      %v917 = vshrl.u32 %v740, 16
      %v919 = vrot.slane %v917, 4
      %v920 = vshll.u32 %v740, 16
      %v922 = vrot.slane %v920, 5
      %v923 = vor.u32 %v919, %v922
      %v924 = vrot.slane %v923, 4
      %v926 = vshll.u32 %v741, 16
      %v928 = vrot.slane %v926, 5
      %v929 = vsel %vm795, %v924, %v928
      %v930 = vshrl.u32 %v741, 16
      %v932 = vrot.slane %v930, 4
      %v933 = vor.u32 %v932, %v928
      %v934 = vrot.slane %v933, 4
      %v936 = vshll.u32 %v742, 16
      %v938 = vrot.slane %v936, 5
      %v939 = vsel %vm795, %v934, %v938
      %v941 = vshrl.u32 %v743, 16
      %v943 = vrot.slane %v941, 4
      %v944 = vshll.u32 %v743, 16
      %v946 = vrot.slane %v944, 5
      %v947 = vor.u32 %v943, %v946
      %v948 = vrot.slane %v947, 4
      %v950 = vshll.u32 %v744, 16
      %v952 = vrot.slane %v950, 5
      %v953 = vsel %vm795, %v948, %v952
      %v954 = vshrl.u32 %v744, 16
      %v956 = vrot.slane %v954, 4
      %v957 = vor.u32 %v956, %v952
      %v958 = vrot.slane %v957, 4
      %v960 = vshll.u32 %v745, 16
      %v962 = vrot.slane %v960, 5
      %v963 = vsel %vm795, %v958, %v962
      %v965 = vshrl.u32 %v746, 16
      %v967 = vrot.slane %v965, 4
      %v968 = vshll.u32 %v746, 16
      %v970 = vrot.slane %v968, 5
      %v971 = vor.u32 %v967, %v970
      %v972 = vrot.slane %v971, 4
      %v974 = vshll.u32 %v747, 16
      %v976 = vrot.slane %v974, 5
      %v977 = vsel %vm795, %v972, %v976
      %v978 = vshrl.u32 %v747, 16
      %v980 = vrot.slane %v978, 4
      %v981 = vor.u32 %v980, %v976
      %v982 = vrot.slane %v981, 4
      %v984 = vshll.u32 %v748, 16
      %v986 = vrot.slane %v984, 5
      %v987 = vsel %vm795, %v982, %v986
      %v989 = vshrl.u32 %v749, 16
      %v991 = vrot.slane %v989, 4
      %v992 = vshll.u32 %v749, 16
      %v994 = vrot.slane %v992, 5
      %v995 = vor.u32 %v991, %v994
      %v996 = vrot.slane %v995, 4
      %v998 = vshll.u32 %v750, 16
      %v1000 = vrot.slane %v998, 5
      %v1001 = vsel %vm795, %v996, %v1000
      %v1002 = vshrl.u32 %v750, 16
      %v1004 = vrot.slane %v1002, 4
      %v1005 = vor.u32 %v1004, %v1000
      %v1006 = vrot.slane %v1005, 4
      %v1008 = vshll.u32 %v751, 16
      %v1010 = vrot.slane %v1008, 5
      %v1011 = vsel %vm795, %v1006, %v1010
      %v1013 = vshrl.u32 %v752, 16
      %v1015 = vrot.slane %v1013, 4
      %v1016 = vshll.u32 %v752, 16
      %v1018 = vrot.slane %v1016, 5
      %v1019 = vor.u32 %v1015, %v1018
      %v1020 = vrot.slane %v1019, 4
      %v1022 = vshll.u32 %v753, 16
      %v1024 = vrot.slane %v1022, 5
      %v1025 = vsel %vm795, %v1020, %v1024
      %v1026 = vshrl.u32 %v753, 16
      %v1028 = vrot.slane %v1026, 4
      %v1029 = vor.u32 %v1028, %v1024
      %v1030 = vrot.slane %v1029, 4
      %v1032 = vshll.u32 %v754, 16
      %v1034 = vrot.slane %v1032, 5
      %v1035 = vsel %vm795, %v1030, %v1034
      %v1037 = vshrl.u32 %v755, 16
      %v1039 = vrot.slane %v1037, 4
      %v1040 = vshll.u32 %v755, 16
      %v1042 = vrot.slane %v1040, 5
      %v1043 = vor.u32 %v1039, %v1042
      %v1044 = vrot.slane %v1043, 4
      %v1046 = vshll.u32 %v756, 16
      %v1048 = vrot.slane %v1046, 5
      %v1049 = vsel %vm795, %v1044, %v1048
      %v1050 = vshrl.u32 %v756, 16
      %v1052 = vrot.slane %v1050, 4
      %v1053 = vor.u32 %v1052, %v1048
      %v1054 = vrot.slane %v1053, 4
      %v1056 = vshll.u32 %v757, 16
      %v1058 = vrot.slane %v1056, 5
      %v1059 = vsel %vm795, %v1054, %v1058
      %v1061 = vshrl.u32 %v758, 16
      %v1063 = vrot.slane %v1061, 4
      %v1064 = vshll.u32 %v758, 16
      %v1066 = vrot.slane %v1064, 5
      %v1067 = vor.u32 %v1063, %v1066
      %v1068 = vrot.slane %v1067, 4
      %v1070 = vshll.u32 %v759, 16
      %v1072 = vrot.slane %v1070, 5
      %v1073 = vsel %vm795, %v1068, %v1072
      %v1074 = vshrl.u32 %v759, 16
      %v1076 = vrot.slane %v1074, 4
      %v1077 = vor.u32 %v1076, %v1072
      %v1078 = vrot.slane %v1077, 4
      %v1080 = vshll.u32 %v760, 16
      %v1082 = vrot.slane %v1080, 5
      %v1083 = vsel %vm795, %v1078, %v1082
      %v1085 = vshrl.u32 %v761, 16
      %v1087 = vrot.slane %v1085, 4
      %v1088 = vshll.u32 %v761, 16
      %v1090 = vrot.slane %v1088, 5
      %v1091 = vor.u32 %v1087, %v1090
      %v1092 = vrot.slane %v1091, 4
      %v1094 = vshll.u32 %v762, 16
      %v1096 = vrot.slane %v1094, 5
      %v1097 = vsel %vm795, %v1092, %v1096
      %v1098 = vshrl.u32 %v762, 16
      %v1100 = vrot.slane %v1098, 4
      %v1101 = vor.u32 %v1100, %v1096
      %v1102 = vrot.slane %v1101, 4
      %v1104 = vshll.u32 %v763, 16
      %v1106 = vrot.slane %v1104, 5
      %v1107 = vsel %vm795, %v1102, %v1106
      %v1109 = vshrl.u32 %v764, 16
      %v1111 = vrot.slane %v1109, 4
      %v1112 = vshll.u32 %v764, 16
      %v1114 = vrot.slane %v1112, 5
      %v1115 = vor.u32 %v1111, %v1114
      %v1116 = vrot.slane %v1115, 4
      %v1118 = vshll.u32 %v765, 16
      %v1120 = vrot.slane %v1118, 5
      %v1121 = vsel %vm795, %v1116, %v1120
      %v1122 = vshrl.u32 %v765, 16
      %v1124 = vrot.slane %v1122, 4
      %v1125 = vor.u32 %v1124, %v1120
      %v1126 = vrot.slane %v1125, 4
      %v1128 = vshll.u32 %v766, 16
      %v1130 = vrot.slane %v1128, 5
      %v1131 = vsel %vm795, %v1126, %v1130
      %v1133 = vshrl.u32 %v767, 16
      %v1135 = vrot.slane %v1133, 4
      %v1136 = vshll.u32 %v767, 16
      %v1138 = vrot.slane %v1136, 5
      %v1139 = vor.u32 %v1135, %v1138
      %v1140 = vrot.slane %v1139, 4
      %v1142 = vshll.u32 %v768, 16
      %v1144 = vrot.slane %v1142, 5
      %v1145 = vsel %vm795, %v1140, %v1144
      %v1146 = vshrl.u32 %v768, 16
      %v1148 = vrot.slane %v1146, 4
      %v1149 = vor.u32 %v1148, %v1144
      %v1150 = vrot.slane %v1149, 4
      %v1152 = vshll.u32 %v769, 16
      %v1154 = vrot.slane %v1152, 5
      %v1155 = vsel %vm795, %v1150, %v1154
      %v1157 = vshrl.u32 %v770, 16
      %v1159 = vrot.slane %v1157, 4
      %v1160 = vshll.u32 %v770, 16
      %v1162 = vrot.slane %v1160, 5
      %v1163 = vor.u32 %v1159, %v1162
      %v1164 = vrot.slane %v1163, 4
      %v1166 = vshll.u32 %v771, 16
      %v1168 = vrot.slane %v1166, 5
      %v1169 = vsel %vm795, %v1164, %v1168
      %v1170 = vshrl.u32 %v771, 16
      %v1172 = vrot.slane %v1170, 4
      %v1173 = vor.u32 %v1172, %v1168
      %v1174 = vrot.slane %v1173, 4
      %v1176 = vshll.u32 %v772, 16
      %v1178 = vrot.slane %v1176, 5
      %v1179 = vsel %vm795, %v1174, %v1178
      %v1180 = vunpack.c.l.b16 %v809
      %v1181 = vunpack.c.l.b16 %v819
      %v1182 = vunpack.c.l.b16 %v833
      %v1183 = vunpack.c.l.b16 %v843
      %v1184 = vunpack.c.l.b16 %v857
      %v1185 = vunpack.c.l.b16 %v867
      %v1186 = vunpack.c.l.b16 %v881
      %v1187 = vunpack.c.l.b16 %v891
      %v1188 = vunpack.c.l.b16 %v905
      %v1189 = vunpack.c.l.b16 %v915
      %v1190 = vunpack.c.l.b16 %v929
      %v1191 = vunpack.c.l.b16 %v939
      %v1192 = vunpack.c.l.b16 %v953
      %v1193 = vunpack.c.l.b16 %v963
      %v1194 = vunpack.c.l.b16 %v977
      %v1195 = vunpack.c.l.b16 %v987
      %v1196 = vunpack.c.l.b16 %v1001
      %v1197 = vunpack.c.l.b16 %v1011
      %v1198 = vunpack.c.l.b16 %v1025
      %v1199 = vunpack.c.l.b16 %v1035
      %v1200 = vunpack.c.l.b16 %v1049
      %v1201 = vunpack.c.l.b16 %v1059
      %v1202 = vunpack.c.l.b16 %v1073
      %v1203 = vunpack.c.l.b16 %v1083
      %v1204 = vunpack.c.l.b16 %v1097
      %v1205 = vunpack.c.l.b16 %v1107
      %v1206 = vunpack.c.l.b16 %v1121
      %v1207 = vunpack.c.l.b16 %v1131
      %v1208 = vunpack.c.l.b16 %v1145
      %v1209 = vunpack.c.l.b16 %v1155
      %v1210 = vunpack.c.l.b16 %v1169
      %v1211 = vunpack.c.l.b16 %v1179
      %v1212 = vpack.c.b16 %v1181, %v1180
      %v1213 = vpack.c.b16 %v1183, %v1182
      %v1214 = vpack.c.b16 %v1185, %v1184
      %v1215 = vpack.c.b16 %v1187, %v1186
      %v1216 = vpack.c.b16 %v1189, %v1188
      %v1217 = vpack.c.b16 %v1191, %v1190
      %v1218 = vpack.c.b16 %v1193, %v1192
      %v1219 = vpack.c.b16 %v1195, %v1194
      %v1220 = vpack.c.b16 %v1197, %v1196
      %v1221 = vpack.c.b16 %v1199, %v1198
      %v1222 = vpack.c.b16 %v1201, %v1200
      %v1223 = vpack.c.b16 %v1203, %v1202
      %v1224 = vpack.c.b16 %v1205, %v1204
      %v1225 = vpack.c.b16 %v1207, %v1206
      %v1226 = vpack.c.b16 %v1209, %v1208
      %v1227 = vpack.c.b16 %v1211, %v1210
      %v1260 = vunpack.c.l.b16 %v777
      %v1261 = vunpack.c.l.b16 %v778
      %v1262 = vunpack.c.l.b16 %v779
      %v1263 = vunpack.c.l.b16 %v780
      %v1264 = vunpack.c.l.b16 %v781
      %v1265 = vunpack.c.l.b16 %v782
      %v1266 = vunpack.c.l.b16 %v783
      %v1267 = vunpack.c.l.b16 %v784
      %v1268 = vunpack.c.l.b16 %v785
      %v1269 = vunpack.c.l.b16 %v786
      %v1270 = vunpack.c.l.b16 %v787
      %v1271 = vunpack.c.l.b16 %v788
      %v1272 = vunpack.c.l.b16 %v789
      %v1273 = vunpack.c.l.b16 %v790
      %v1274 = vunpack.c.l.b16 %v791
      %v1275 = vunpack.c.l.b16 %v792
      %v1276 = vpack.c.b16 %v1261, %v1260
      %v1277 = vpack.c.b16 %v1263, %v1262
      %v1278 = vpack.c.b16 %v1265, %v1264
      %v1279 = vpack.c.b16 %v1267, %v1266
      %v1280 = vpack.c.b16 %v1269, %v1268
      %v1281 = vpack.c.b16 %v1271, %v1270
      %v1282 = vpack.c.b16 %v1273, %v1272
      %v1283 = vpack.c.b16 %v1275, %v1274
      %1292 = vmatprep.subr.bf16.mxu0 0
      %1293 = vmatpush1.bf16.msra.mxu0 %v1283
      %1294 = vmatprep.subr.bf16.mxu0 0
      %1295 = vmatpush1.bf16.msra.mxu0 %v1282
      %1296 = vmatprep.subr.bf16.mxu0 0
      %1297 = vmatpush1.bf16.msra.mxu0 %v1281
      %1298 = vmatprep.subr.bf16.mxu0 0
      %1299 = vmatpush1.bf16.msra.mxu0 %v1280
      %1300 = vmatprep.subr.bf16.mxu0 0
      %1301 = vmatpush1.bf16.msra.mxu0 %v1279
      %1302 = vmatprep.subr.bf16.mxu0 0
      %1303 = vmatpush1.bf16.msra.mxu0 %v1278
      %1304 = vmatprep.subr.bf16.mxu0 0
      %1305 = vmatpush1.bf16.msra.mxu0 %v1277
      %1306 = vmatprep.subr.bf16.mxu0 0
      %1307 = vmatpush1.bf16.msra.mxu0 %v1276
      %1308 = vmatprep.subr.bf16.mxu0 0
      %1309 = vmatpush2.bf16.msra.mxu0 0
      %1310 = vmatprep.subr.bf16.mxu0 0
      %1311 = vmatpush2.bf16.msra.mxu0 0
      %1312 = vmatprep.subr.bf16.mxu0 0
      %1313 = vmatpush2.bf16.msra.mxu0 0
      %1314 = vmatprep.subr.bf16.mxu0 0
      %1315 = vmatpush2.bf16.msra.mxu0 0
      %1316 = vmatprep.subr.bf16.mxu0 0
      %1317 = vmatpush2.bf16.msra.mxu0 0
      %1318 = vmatprep.subr.bf16.mxu0 0
      %1319 = vmatpush2.bf16.msra.mxu0 0
      %1320 = vmatprep.subr.bf16.mxu0 0
      %1321 = vmatpush2.bf16.msra.mxu0 0
      %1322 = vmatprep.subr.bf16.mxu0 0
      %1323 = vmatpush2.bf16.msra.mxu0 0
      %1324 = vmatprep.mubr.bf16.mxu0 0
      %1325 = vmatmul.mubr.bf16.gmra.mxu0 %v1212
      %v1326 = vpop.f32.mrf.mxu0
      %v1327 = vadd.f32 0.0, %v1326
      %v1328 = vpop.f32.mrf.mxu0
      %v1329 = vpop.f32.mrf.mxu0
      %v1330 = vadd.f32 0.0, %v1329
      %v1331 = vpop.f32.mrf.mxu0
      %1332 = vmatprep.mubr.bf16.mxu0 0
      %1333 = vmatmul.mubr.bf16.gmra.mxu0 %v1213
      %v1334 = vpop.f32.mrf.mxu0
      %v1335 = vadd.f32 0.0, %v1334
      %v1336 = vpop.f32.mrf.mxu0
      %v1337 = vpop.f32.mrf.mxu0
      %v1338 = vadd.f32 0.0, %v1337
      %v1339 = vpop.f32.mrf.mxu0
      %1340 = vmatprep.mubr.bf16.mxu0 0
      %1341 = vmatmul.mubr.bf16.gmra.mxu0 %v1214
      %v1342 = vpop.f32.mrf.mxu0
      %v1343 = vadd.f32 0.0, %v1342
      %v1344 = vpop.f32.mrf.mxu0
      %v1345 = vpop.f32.mrf.mxu0
      %v1346 = vadd.f32 0.0, %v1345
      %v1347 = vpop.f32.mrf.mxu0
      %1348 = vmatprep.mubr.bf16.mxu0 0
      %1349 = vmatmul.mubr.bf16.gmra.mxu0 %v1215
      %v1350 = vpop.f32.mrf.mxu0
      %v1351 = vadd.f32 0.0, %v1350
      %v1352 = vpop.f32.mrf.mxu0
      %v1353 = vpop.f32.mrf.mxu0
      %v1354 = vadd.f32 0.0, %v1353
      %v1355 = vpop.f32.mrf.mxu0
      %1356 = vmatprep.mubr.bf16.mxu0 0
      %1357 = vmatmul.mubr.bf16.gmra.mxu0 %v1216
      %v1358 = vpop.f32.mrf.mxu0
      %v1359 = vadd.f32 0.0, %v1358
      %v1360 = vpop.f32.mrf.mxu0
      %v1361 = vpop.f32.mrf.mxu0
      %v1362 = vadd.f32 0.0, %v1361
      %v1363 = vpop.f32.mrf.mxu0
      %1364 = vmatprep.mubr.bf16.mxu0 0
      %1365 = vmatmul.mubr.bf16.gmra.mxu0 %v1217
      %v1366 = vpop.f32.mrf.mxu0
      %v1367 = vadd.f32 0.0, %v1366
      %v1368 = vpop.f32.mrf.mxu0
      %v1369 = vpop.f32.mrf.mxu0
      %v1370 = vadd.f32 0.0, %v1369
      %v1371 = vpop.f32.mrf.mxu0
      %1372 = vmatprep.mubr.bf16.mxu0 0
      %1373 = vmatmul.mubr.bf16.gmra.mxu0 %v1218
      %v1374 = vpop.f32.mrf.mxu0
      %v1375 = vadd.f32 0.0, %v1374
      %v1376 = vpop.f32.mrf.mxu0
      %v1377 = vpop.f32.mrf.mxu0
      %v1378 = vadd.f32 0.0, %v1377
      %v1379 = vpop.f32.mrf.mxu0
      %1380 = vmatprep.mubr.bf16.mxu0 0
      %1381 = vmatmul.mubr.bf16.gmra.mxu0 %v1219
      %v1382 = vpop.f32.mrf.mxu0
      %v1383 = vadd.f32 0.0, %v1382
      %v1384 = vpop.f32.mrf.mxu0
      %v1385 = vpop.f32.mrf.mxu0
      %v1386 = vadd.f32 0.0, %v1385
      %v1387 = vpop.f32.mrf.mxu0
      %1388 = vmatprep.mubr.bf16.mxu0 0
      %1389 = vmatmul.mubr.bf16.gmra.mxu0 %v1220
      %v1390 = vpop.f32.mrf.mxu0
      %v1391 = vadd.f32 0.0, %v1390
      %v1392 = vpop.f32.mrf.mxu0
      %v1393 = vpop.f32.mrf.mxu0
      %v1394 = vadd.f32 0.0, %v1393
      %v1395 = vpop.f32.mrf.mxu0
      %1396 = vmatprep.mubr.bf16.mxu0 0
      %1397 = vmatmul.mubr.bf16.gmra.mxu0 %v1221
      %v1398 = vpop.f32.mrf.mxu0
      %v1399 = vadd.f32 0.0, %v1398
      %v1400 = vpop.f32.mrf.mxu0
      %v1401 = vpop.f32.mrf.mxu0
      %v1402 = vadd.f32 0.0, %v1401
      %v1403 = vpop.f32.mrf.mxu0
      %1404 = vmatprep.mubr.bf16.mxu0 0
      %1405 = vmatmul.mubr.bf16.gmra.mxu0 %v1222
      %v1406 = vpop.f32.mrf.mxu0
      %v1407 = vadd.f32 0.0, %v1406
      %v1408 = vpop.f32.mrf.mxu0
      %v1409 = vpop.f32.mrf.mxu0
      %v1410 = vadd.f32 0.0, %v1409
      %v1411 = vpop.f32.mrf.mxu0
      %1412 = vmatprep.mubr.bf16.mxu0 0
      %1413 = vmatmul.mubr.bf16.gmra.mxu0 %v1223
      %v1414 = vpop.f32.mrf.mxu0
      %v1415 = vadd.f32 0.0, %v1414
      %v1416 = vpop.f32.mrf.mxu0
      %v1417 = vpop.f32.mrf.mxu0
      %v1418 = vadd.f32 0.0, %v1417
      %v1419 = vpop.f32.mrf.mxu0
      %1420 = vmatprep.mubr.bf16.mxu0 0
      %1421 = vmatmul.mubr.bf16.gmra.mxu0 %v1224
      %v1422 = vpop.f32.mrf.mxu0
      %v1423 = vadd.f32 0.0, %v1422
      %v1424 = vpop.f32.mrf.mxu0
      %v1425 = vpop.f32.mrf.mxu0
      %v1426 = vadd.f32 0.0, %v1425
      %v1427 = vpop.f32.mrf.mxu0
      %1428 = vmatprep.mubr.bf16.mxu0 0
      %1429 = vmatmul.mubr.bf16.gmra.mxu0 %v1225
      %v1430 = vpop.f32.mrf.mxu0
      %v1431 = vadd.f32 0.0, %v1430
      %v1432 = vpop.f32.mrf.mxu0
      %v1433 = vpop.f32.mrf.mxu0
      %v1434 = vadd.f32 0.0, %v1433
      %v1435 = vpop.f32.mrf.mxu0
      %1436 = vmatprep.mubr.bf16.mxu0 0
      %1437 = vmatmul.mubr.bf16.gmra.mxu0 %v1226
      %v1438 = vpop.f32.mrf.mxu0
      %v1439 = vadd.f32 0.0, %v1438
      %v1440 = vpop.f32.mrf.mxu0
      %v1441 = vpop.f32.mrf.mxu0
      %v1442 = vadd.f32 0.0, %v1441
      %v1443 = vpop.f32.mrf.mxu0
      %1444 = vmatprep.mubr.bf16.mxu0 0
      %1445 = vmatmul.mubr.bf16.gmra.mxu0 %v1227
      %v1446 = vpop.f32.mrf.mxu0
      %v1447 = vadd.f32 0.0, %v1446
      %v1448 = vpop.f32.mrf.mxu0
      %v1449 = vpop.f32.mrf.mxu0
      %v1450 = vadd.f32 0.0, %v1449
      %v1451 = vpop.f32.mrf.mxu0
      %1452 = vdwg.mxu0
      %v1453 = vadd.f32 %v693, %v1327
      %v1454 = vadd.f32 %v694, %v1330
      %v1455 = vadd.f32 %v695, %v1335
      %v1456 = vadd.f32 %v696, %v1338
      %v1457 = vadd.f32 %v697, %v1343
      %v1458 = vadd.f32 %v698, %v1346
      %v1459 = vadd.f32 %v699, %v1351
      %v1460 = vadd.f32 %v700, %v1354
      %v1461 = vadd.f32 %v701, %v1359
      %v1462 = vadd.f32 %v702, %v1362
      %v1463 = vadd.f32 %v703, %v1367
      %v1464 = vadd.f32 %v704, %v1370
      %v1465 = vadd.f32 %v705, %v1375
      %v1466 = vadd.f32 %v706, %v1378
      %v1467 = vadd.f32 %v707, %v1383
      %v1468 = vadd.f32 %v708, %v1386
      %v1469 = vadd.f32 %v709, %v1391
      %v1470 = vadd.f32 %v710, %v1394
      %v1471 = vadd.f32 %v711, %v1399
      %v1472 = vadd.f32 %v712, %v1402
      %v1473 = vadd.f32 %v713, %v1407
      %v1474 = vadd.f32 %v714, %v1410
      %v1475 = vadd.f32 %v715, %v1415
      %v1476 = vadd.f32 %v716, %v1418
      %v1477 = vadd.f32 %v717, %v1423
      %v1478 = vadd.f32 %v718, %v1426
      %v1479 = vadd.f32 %v719, %v1431
      %v1480 = vadd.f32 %v720, %v1434
      %v1481 = vadd.f32 %v721, %v1439
      %v1482 = vadd.f32 %v722, %v1442
      %v1483 = vadd.f32 %v723, %v1447
      %v1484 = vadd.f32 %v724, %v1450
      %v1485 = vld [vmem:[%s246] sm:$0xe]
      %v1486 = vld [vmem:[%s246 + $0xc] sm:$0xe]
      %v1487 = vld [vmem:[%s246 + $0x18] sm:$0xe]
      %v1488 = vld [vmem:[%s246 + $0x24] sm:$0xe]
      %v1489 = vld [vmem:[%s246 + $0x30] sm:$0xe]
      %v1490 = vld [vmem:[%s246 + $0x3c] sm:$0xe]
      %v1491 = vld [vmem:[%s246 + $0x48] sm:$0xe]
      %v1492 = vld [vmem:[%s246 + $0x54] sm:$0xe]
      %v1493 = vld [vmem:[%s246 + $0x60] sm:$0xe]
      %v1494 = vld [vmem:[%s246 + $0x6c] sm:$0xe]
      %v1495 = vld [vmem:[%s246 + $0x78] sm:$0xe]
      %v1496 = vld [vmem:[%s246 + $0x84] sm:$0xe]
      %v1497 = vld [vmem:[%s246 + $0x90] sm:$0xe]
      %v1498 = vld [vmem:[%s246 + $0x9c] sm:$0xe]
      %v1499 = vld [vmem:[%s246 + $0xa8] sm:$0xe]
      %v1500 = vld [vmem:[%s246 + $0xb4] sm:$0xe]
      %s1501 = sadd.s32 %s368, 2
      %s1502 = smul.u32 %s1501, 16
      %s1503 = smul.addr %s1502, 4
      %s1504 = scalar_lea.vmem %s251, %s1503
      %v1505 = vld [vmem:[%s1504] sm:$0xf]
      %v1506 = vld [vmem:[%s1504 + $0x4] sm:$0xf]
      %v1507 = vld [vmem:[%s1504 + $0x8] sm:$0xf]
      %v1508 = vld [vmem:[%s1504 + $0xc] sm:$0xf]
      %v1509 = vld [vmem:[%s1504 + $0x10] sm:$0xf]
      %v1510 = vld [vmem:[%s1504 + $0x14] sm:$0xf]
      %v1511 = vld [vmem:[%s1504 + $0x18] sm:$0xf]
      %v1512 = vld [vmem:[%s1504 + $0x1c] sm:$0xf]
      %v1513 = vld [vmem:[%s1504 + $0x20] sm:$0xf]
      %v1514 = vld [vmem:[%s1504 + $0x24] sm:$0xf]
      %v1515 = vld [vmem:[%s1504 + $0x28] sm:$0xf]
      %v1516 = vld [vmem:[%s1504 + $0x2c] sm:$0xf]
      %v1517 = vld [vmem:[%s1504 + $0x30] sm:$0xf]
      %v1518 = vld [vmem:[%s1504 + $0x34] sm:$0xf]
      %v1519 = vld [vmem:[%s1504 + $0x38] sm:$0xf]
      %v1520 = vld [vmem:[%s1504 + $0x3c] sm:$0xf]
      %vm1569 = vcmask 1042432
      %vm1570 = vcmask 1046532
      %vm1571 = vmor %vm1569, %vm1570
      %v1572 = vrot.slane %v1485, 5
      %v1573 = vrot.slane %v1572, 4
      %v1574 = vrot.slane %v726, 5
      %v1575 = vsel %vm1571, %v1573, %v1574
      %v1576 = vrot.slane %v1574, 4
      %v1577 = vrot.slane %v727, 5
      %v1578 = vsel %vm1571, %v1576, %v1577
      %v1579 = vrot.slane %v1486, 5
      %v1580 = vrot.slane %v1579, 4
      %v1581 = vrot.slane %v729, 5
      %v1582 = vsel %vm1571, %v1580, %v1581
      %v1583 = vrot.slane %v1581, 4
      %v1584 = vrot.slane %v730, 5
      %v1585 = vsel %vm1571, %v1583, %v1584
      %v1586 = vrot.slane %v1487, 5
      %v1587 = vrot.slane %v1586, 4
      %v1588 = vrot.slane %v732, 5
      %v1589 = vsel %vm1571, %v1587, %v1588
      %v1590 = vrot.slane %v1588, 4
      %v1591 = vrot.slane %v733, 5
      %v1592 = vsel %vm1571, %v1590, %v1591
      %v1593 = vrot.slane %v1488, 5
      %v1594 = vrot.slane %v1593, 4
      %v1595 = vrot.slane %v735, 5
      %v1596 = vsel %vm1571, %v1594, %v1595
      %v1597 = vrot.slane %v1595, 4
      %v1598 = vrot.slane %v736, 5
      %v1599 = vsel %vm1571, %v1597, %v1598
      %v1600 = vrot.slane %v1489, 5
      %v1601 = vrot.slane %v1600, 4
      %v1602 = vrot.slane %v738, 5
      %v1603 = vsel %vm1571, %v1601, %v1602
      %v1604 = vrot.slane %v1602, 4
      %v1605 = vrot.slane %v739, 5
      %v1606 = vsel %vm1571, %v1604, %v1605
      %v1607 = vrot.slane %v1490, 5
      %v1608 = vrot.slane %v1607, 4
      %v1609 = vrot.slane %v741, 5
      %v1610 = vsel %vm1571, %v1608, %v1609
      %v1611 = vrot.slane %v1609, 4
      %v1612 = vrot.slane %v742, 5
      %v1613 = vsel %vm1571, %v1611, %v1612
      %v1614 = vrot.slane %v1491, 5
      %v1615 = vrot.slane %v1614, 4
      %v1616 = vrot.slane %v744, 5
      %v1617 = vsel %vm1571, %v1615, %v1616
      %v1618 = vrot.slane %v1616, 4
      %v1619 = vrot.slane %v745, 5
      %v1620 = vsel %vm1571, %v1618, %v1619
      %v1621 = vrot.slane %v1492, 5
      %v1622 = vrot.slane %v1621, 4
      %v1623 = vrot.slane %v747, 5
      %v1624 = vsel %vm1571, %v1622, %v1623
      %v1625 = vrot.slane %v1623, 4
      %v1626 = vrot.slane %v748, 5
      %v1627 = vsel %vm1571, %v1625, %v1626
      %v1628 = vrot.slane %v1493, 5
      %v1629 = vrot.slane %v1628, 4
      %v1630 = vrot.slane %v750, 5
      %v1631 = vsel %vm1571, %v1629, %v1630
      %v1632 = vrot.slane %v1630, 4
      %v1633 = vrot.slane %v751, 5
      %v1634 = vsel %vm1571, %v1632, %v1633
      %v1635 = vrot.slane %v1494, 5
      %v1636 = vrot.slane %v1635, 4
      %v1637 = vrot.slane %v753, 5
      %v1638 = vsel %vm1571, %v1636, %v1637
      %v1639 = vrot.slane %v1637, 4
      %v1640 = vrot.slane %v754, 5
      %v1641 = vsel %vm1571, %v1639, %v1640
      %v1642 = vrot.slane %v1495, 5
      %v1643 = vrot.slane %v1642, 4
      %v1644 = vrot.slane %v756, 5
      %v1645 = vsel %vm1571, %v1643, %v1644
      %v1646 = vrot.slane %v1644, 4
      %v1647 = vrot.slane %v757, 5
      %v1648 = vsel %vm1571, %v1646, %v1647
      %v1649 = vrot.slane %v1496, 5
      %v1650 = vrot.slane %v1649, 4
      %v1651 = vrot.slane %v759, 5
      %v1652 = vsel %vm1571, %v1650, %v1651
      %v1653 = vrot.slane %v1651, 4
      %v1654 = vrot.slane %v760, 5
      %v1655 = vsel %vm1571, %v1653, %v1654
      %v1656 = vrot.slane %v1497, 5
      %v1657 = vrot.slane %v1656, 4
      %v1658 = vrot.slane %v762, 5
      %v1659 = vsel %vm1571, %v1657, %v1658
      %v1660 = vrot.slane %v1658, 4
      %v1661 = vrot.slane %v763, 5
      %v1662 = vsel %vm1571, %v1660, %v1661
      %v1663 = vrot.slane %v1498, 5
      %v1664 = vrot.slane %v1663, 4
      %v1665 = vrot.slane %v765, 5
      %v1666 = vsel %vm1571, %v1664, %v1665
      %v1667 = vrot.slane %v1665, 4
      %v1668 = vrot.slane %v766, 5
      %v1669 = vsel %vm1571, %v1667, %v1668
      %v1670 = vrot.slane %v1499, 5
      %v1671 = vrot.slane %v1670, 4
      %v1672 = vrot.slane %v768, 5
      %v1673 = vsel %vm1571, %v1671, %v1672
      %v1674 = vrot.slane %v1672, 4
      %v1675 = vrot.slane %v769, 5
      %v1676 = vsel %vm1571, %v1674, %v1675
      %v1677 = vrot.slane %v1500, 5
      %v1678 = vrot.slane %v1677, 4
      %v1679 = vrot.slane %v771, 5
      %v1680 = vsel %vm1571, %v1678, %v1679
      %v1681 = vrot.slane %v1679, 4
      %v1682 = vrot.slane %v772, 5
      %v1683 = vsel %vm1571, %v1681, %v1682
      %v1684 = vunpack.c.l.b16 %v1575
      %v1685 = vunpack.c.l.b16 %v1578
      %v1686 = vunpack.c.l.b16 %v1582
      %v1687 = vunpack.c.l.b16 %v1585
      %v1688 = vunpack.c.l.b16 %v1589
      %v1689 = vunpack.c.l.b16 %v1592
      %v1690 = vunpack.c.l.b16 %v1596
      %v1691 = vunpack.c.l.b16 %v1599
      %v1692 = vunpack.c.l.b16 %v1603
      %v1693 = vunpack.c.l.b16 %v1606
      %v1694 = vunpack.c.l.b16 %v1610
      %v1695 = vunpack.c.l.b16 %v1613
      %v1696 = vunpack.c.l.b16 %v1617
      %v1697 = vunpack.c.l.b16 %v1620
      %v1698 = vunpack.c.l.b16 %v1624
      %v1699 = vunpack.c.l.b16 %v1627
      %v1700 = vunpack.c.l.b16 %v1631
      %v1701 = vunpack.c.l.b16 %v1634
      %v1702 = vunpack.c.l.b16 %v1638
      %v1703 = vunpack.c.l.b16 %v1641
      %v1704 = vunpack.c.l.b16 %v1645
      %v1705 = vunpack.c.l.b16 %v1648
      %v1706 = vunpack.c.l.b16 %v1652
      %v1707 = vunpack.c.l.b16 %v1655
      %v1708 = vunpack.c.l.b16 %v1659
      %v1709 = vunpack.c.l.b16 %v1662
      %v1710 = vunpack.c.l.b16 %v1666
      %v1711 = vunpack.c.l.b16 %v1669
      %v1712 = vunpack.c.l.b16 %v1673
      %v1713 = vunpack.c.l.b16 %v1676
      %v1714 = vunpack.c.l.b16 %v1680
      %v1715 = vunpack.c.l.b16 %v1683
      %v1716 = vpack.c.b16 %v1685, %v1684
      %v1717 = vpack.c.b16 %v1687, %v1686
      %v1718 = vpack.c.b16 %v1689, %v1688
      %v1719 = vpack.c.b16 %v1691, %v1690
      %v1720 = vpack.c.b16 %v1693, %v1692
      %v1721 = vpack.c.b16 %v1695, %v1694
      %v1722 = vpack.c.b16 %v1697, %v1696
      %v1723 = vpack.c.b16 %v1699, %v1698
      %v1724 = vpack.c.b16 %v1701, %v1700
      %v1725 = vpack.c.b16 %v1703, %v1702
      %v1726 = vpack.c.b16 %v1705, %v1704
      %v1727 = vpack.c.b16 %v1707, %v1706
      %v1728 = vpack.c.b16 %v1709, %v1708
      %v1729 = vpack.c.b16 %v1711, %v1710
      %v1730 = vpack.c.b16 %v1713, %v1712
      %v1731 = vpack.c.b16 %v1715, %v1714
      %v1764 = vunpack.c.l.b16 %v1505
      %v1765 = vunpack.c.l.b16 %v1506
      %v1766 = vunpack.c.l.b16 %v1507
      %v1767 = vunpack.c.l.b16 %v1508
      %v1768 = vunpack.c.l.b16 %v1509
      %v1769 = vunpack.c.l.b16 %v1510
      %v1770 = vunpack.c.l.b16 %v1511
      %v1771 = vunpack.c.l.b16 %v1512
      %v1772 = vunpack.c.l.b16 %v1513
      %v1773 = vunpack.c.l.b16 %v1514
      %v1774 = vunpack.c.l.b16 %v1515
      %v1775 = vunpack.c.l.b16 %v1516
      %v1776 = vunpack.c.l.b16 %v1517
      %v1777 = vunpack.c.l.b16 %v1518
      %v1778 = vunpack.c.l.b16 %v1519
      %v1779 = vunpack.c.l.b16 %v1520
      %v1780 = vpack.c.b16 %v1765, %v1764
      %v1781 = vpack.c.b16 %v1767, %v1766
      %v1782 = vpack.c.b16 %v1769, %v1768
      %v1783 = vpack.c.b16 %v1771, %v1770
      %v1784 = vpack.c.b16 %v1773, %v1772
      %v1785 = vpack.c.b16 %v1775, %v1774
      %v1786 = vpack.c.b16 %v1777, %v1776
      %v1787 = vpack.c.b16 %v1779, %v1778
      %1796 = vmatprep.subr.bf16.mxu0 0
      %1797 = vmatpush1.bf16.msra.mxu0 %v1787
      %1798 = vmatprep.subr.bf16.mxu0 0
      %1799 = vmatpush1.bf16.msra.mxu0 %v1786
      %1800 = vmatprep.subr.bf16.mxu0 0
      %1801 = vmatpush1.bf16.msra.mxu0 %v1785
      %1802 = vmatprep.subr.bf16.mxu0 0
      %1803 = vmatpush1.bf16.msra.mxu0 %v1784
      %1804 = vmatprep.subr.bf16.mxu0 0
      %1805 = vmatpush1.bf16.msra.mxu0 %v1783
      %1806 = vmatprep.subr.bf16.mxu0 0
      %1807 = vmatpush1.bf16.msra.mxu0 %v1782
      %1808 = vmatprep.subr.bf16.mxu0 0
      %1809 = vmatpush1.bf16.msra.mxu0 %v1781
      %1810 = vmatprep.subr.bf16.mxu0 0
      %1811 = vmatpush1.bf16.msra.mxu0 %v1780
      %1812 = vmatprep.subr.bf16.mxu0 0
      %1813 = vmatpush2.bf16.msra.mxu0 0
      %1814 = vmatprep.subr.bf16.mxu0 0
      %1815 = vmatpush2.bf16.msra.mxu0 0
      %1816 = vmatprep.subr.bf16.mxu0 0
      %1817 = vmatpush2.bf16.msra.mxu0 0
      %1818 = vmatprep.subr.bf16.mxu0 0
      %1819 = vmatpush2.bf16.msra.mxu0 0
      %1820 = vmatprep.subr.bf16.mxu0 0
      %1821 = vmatpush2.bf16.msra.mxu0 0
      %1822 = vmatprep.subr.bf16.mxu0 0
      %1823 = vmatpush2.bf16.msra.mxu0 0
      %1824 = vmatprep.subr.bf16.mxu0 0
      %1825 = vmatpush2.bf16.msra.mxu0 0
      %1826 = vmatprep.subr.bf16.mxu0 0
      %1827 = vmatpush2.bf16.msra.mxu0 0
      %1828 = vmatprep.mubr.bf16.mxu0 0
      %1829 = vmatmul.mubr.bf16.gmra.mxu0 %v1716
      %v1830 = vpop.f32.mrf.mxu0
      %v1831 = vadd.f32 0.0, %v1830
      %v1832 = vpop.f32.mrf.mxu0
      %v1833 = vpop.f32.mrf.mxu0
      %v1834 = vadd.f32 0.0, %v1833
      %v1835 = vpop.f32.mrf.mxu0
      %1836 = vmatprep.mubr.bf16.mxu0 0
      %1837 = vmatmul.mubr.bf16.gmra.mxu0 %v1717
      %v1838 = vpop.f32.mrf.mxu0
      %v1839 = vadd.f32 0.0, %v1838
      %v1840 = vpop.f32.mrf.mxu0
      %v1841 = vpop.f32.mrf.mxu0
      %v1842 = vadd.f32 0.0, %v1841
      %v1843 = vpop.f32.mrf.mxu0
      %1844 = vmatprep.mubr.bf16.mxu0 0
      %1845 = vmatmul.mubr.bf16.gmra.mxu0 %v1718
      %v1846 = vpop.f32.mrf.mxu0
      %v1847 = vadd.f32 0.0, %v1846
      %v1848 = vpop.f32.mrf.mxu0
      %v1849 = vpop.f32.mrf.mxu0
      %v1850 = vadd.f32 0.0, %v1849
      %v1851 = vpop.f32.mrf.mxu0
      %1852 = vmatprep.mubr.bf16.mxu0 0
      %1853 = vmatmul.mubr.bf16.gmra.mxu0 %v1719
      %v1854 = vpop.f32.mrf.mxu0
      %v1855 = vadd.f32 0.0, %v1854
      %v1856 = vpop.f32.mrf.mxu0
      %v1857 = vpop.f32.mrf.mxu0
      %v1858 = vadd.f32 0.0, %v1857
      %v1859 = vpop.f32.mrf.mxu0
      %1860 = vmatprep.mubr.bf16.mxu0 0
      %1861 = vmatmul.mubr.bf16.gmra.mxu0 %v1720
      %v1862 = vpop.f32.mrf.mxu0
      %v1863 = vadd.f32 0.0, %v1862
      %v1864 = vpop.f32.mrf.mxu0
      %v1865 = vpop.f32.mrf.mxu0
      %v1866 = vadd.f32 0.0, %v1865
      %v1867 = vpop.f32.mrf.mxu0
      %1868 = vmatprep.mubr.bf16.mxu0 0
      %1869 = vmatmul.mubr.bf16.gmra.mxu0 %v1721
      %v1870 = vpop.f32.mrf.mxu0
      %v1871 = vadd.f32 0.0, %v1870
      %v1872 = vpop.f32.mrf.mxu0
      %v1873 = vpop.f32.mrf.mxu0
      %v1874 = vadd.f32 0.0, %v1873
      %v1875 = vpop.f32.mrf.mxu0
      %1876 = vmatprep.mubr.bf16.mxu0 0
      %1877 = vmatmul.mubr.bf16.gmra.mxu0 %v1722
      %v1878 = vpop.f32.mrf.mxu0
      %v1879 = vadd.f32 0.0, %v1878
      %v1880 = vpop.f32.mrf.mxu0
      %v1881 = vpop.f32.mrf.mxu0
      %v1882 = vadd.f32 0.0, %v1881
      %v1883 = vpop.f32.mrf.mxu0
      %1884 = vmatprep.mubr.bf16.mxu0 0
      %1885 = vmatmul.mubr.bf16.gmra.mxu0 %v1723
      %v1886 = vpop.f32.mrf.mxu0
      %v1887 = vadd.f32 0.0, %v1886
      %v1888 = vpop.f32.mrf.mxu0
      %v1889 = vpop.f32.mrf.mxu0
      %v1890 = vadd.f32 0.0, %v1889
      %v1891 = vpop.f32.mrf.mxu0
      %1892 = vmatprep.mubr.bf16.mxu0 0
      %1893 = vmatmul.mubr.bf16.gmra.mxu0 %v1724
      %v1894 = vpop.f32.mrf.mxu0
      %v1895 = vadd.f32 0.0, %v1894
      %v1896 = vpop.f32.mrf.mxu0
      %v1897 = vpop.f32.mrf.mxu0
      %v1898 = vadd.f32 0.0, %v1897
      %v1899 = vpop.f32.mrf.mxu0
      %1900 = vmatprep.mubr.bf16.mxu0 0
      %1901 = vmatmul.mubr.bf16.gmra.mxu0 %v1725
      %v1902 = vpop.f32.mrf.mxu0
      %v1903 = vadd.f32 0.0, %v1902
      %v1904 = vpop.f32.mrf.mxu0
      %v1905 = vpop.f32.mrf.mxu0
      %v1906 = vadd.f32 0.0, %v1905
      %v1907 = vpop.f32.mrf.mxu0
      %1908 = vmatprep.mubr.bf16.mxu0 0
      %1909 = vmatmul.mubr.bf16.gmra.mxu0 %v1726
      %v1910 = vpop.f32.mrf.mxu0
      %v1911 = vadd.f32 0.0, %v1910
      %v1912 = vpop.f32.mrf.mxu0
      %v1913 = vpop.f32.mrf.mxu0
      %v1914 = vadd.f32 0.0, %v1913
      %v1915 = vpop.f32.mrf.mxu0
      %1916 = vmatprep.mubr.bf16.mxu0 0
      %1917 = vmatmul.mubr.bf16.gmra.mxu0 %v1727
      %v1918 = vpop.f32.mrf.mxu0
      %v1919 = vadd.f32 0.0, %v1918
      %v1920 = vpop.f32.mrf.mxu0
      %v1921 = vpop.f32.mrf.mxu0
      %v1922 = vadd.f32 0.0, %v1921
      %v1923 = vpop.f32.mrf.mxu0
      %1924 = vmatprep.mubr.bf16.mxu0 0
      %1925 = vmatmul.mubr.bf16.gmra.mxu0 %v1728
      %v1926 = vpop.f32.mrf.mxu0
      %v1927 = vadd.f32 0.0, %v1926
      %v1928 = vpop.f32.mrf.mxu0
      %v1929 = vpop.f32.mrf.mxu0
      %v1930 = vadd.f32 0.0, %v1929
      %v1931 = vpop.f32.mrf.mxu0
      %1932 = vmatprep.mubr.bf16.mxu0 0
      %1933 = vmatmul.mubr.bf16.gmra.mxu0 %v1729
      %v1934 = vpop.f32.mrf.mxu0
      %v1935 = vadd.f32 0.0, %v1934
      %v1936 = vpop.f32.mrf.mxu0
      %v1937 = vpop.f32.mrf.mxu0
      %v1938 = vadd.f32 0.0, %v1937
      %v1939 = vpop.f32.mrf.mxu0
      %1940 = vmatprep.mubr.bf16.mxu0 0
      %1941 = vmatmul.mubr.bf16.gmra.mxu0 %v1730
      %v1942 = vpop.f32.mrf.mxu0
      %v1943 = vadd.f32 0.0, %v1942
      %v1944 = vpop.f32.mrf.mxu0
      %v1945 = vpop.f32.mrf.mxu0
      %v1946 = vadd.f32 0.0, %v1945
      %v1947 = vpop.f32.mrf.mxu0
      %1948 = vmatprep.mubr.bf16.mxu0 0
      %1949 = vmatmul.mubr.bf16.gmra.mxu0 %v1731
      %v1950 = vpop.f32.mrf.mxu0
      %v1951 = vadd.f32 0.0, %v1950
      %v1952 = vpop.f32.mrf.mxu0
      %v1953 = vpop.f32.mrf.mxu0
      %v1954 = vadd.f32 0.0, %v1953
      %v1955 = vpop.f32.mrf.mxu0
      %1956 = vdwg.mxu0
      %v1957 = vadd.f32 %v1453, %v1831
      %v1958 = vadd.f32 %v1454, %v1834
      %v1959 = vadd.f32 %v1455, %v1839
      %v1960 = vadd.f32 %v1456, %v1842
      %v1961 = vadd.f32 %v1457, %v1847
      %v1962 = vadd.f32 %v1458, %v1850
      %v1963 = vadd.f32 %v1459, %v1855
      %v1964 = vadd.f32 %v1460, %v1858
      %v1965 = vadd.f32 %v1461, %v1863
      %v1966 = vadd.f32 %v1462, %v1866
      %v1967 = vadd.f32 %v1463, %v1871
      %v1968 = vadd.f32 %v1464, %v1874
      %v1969 = vadd.f32 %v1465, %v1879
      %v1970 = vadd.f32 %v1466, %v1882
      %v1971 = vadd.f32 %v1467, %v1887
      %v1972 = vadd.f32 %v1468, %v1890
      %v1973 = vadd.f32 %v1469, %v1895
      %v1974 = vadd.f32 %v1470, %v1898
      %v1975 = vadd.f32 %v1471, %v1903
      %v1976 = vadd.f32 %v1472, %v1906
      %v1977 = vadd.f32 %v1473, %v1911
      %v1978 = vadd.f32 %v1474, %v1914
      %v1979 = vadd.f32 %v1475, %v1919
      %v1980 = vadd.f32 %v1476, %v1922
      %v1981 = vadd.f32 %v1477, %v1927
      %v1982 = vadd.f32 %v1478, %v1930
      %v1983 = vadd.f32 %v1479, %v1935
      %v1984 = vadd.f32 %v1480, %v1938
      %v1985 = vadd.f32 %v1481, %v1943
      %v1986 = vadd.f32 %v1482, %v1946
      %v1987 = vadd.f32 %v1483, %v1951
      %v1988 = vadd.f32 %v1484, %v1954
      %s1989 = scalar_lea.vmem %s246, 12
      %v1990 = vld [vmem:[%s1989] sm:$0xf]
      %v1991 = vld [vmem:[%s1989 + $0x4] sm:$0xf]
      %v1992 = vld [vmem:[%s1989 + $0xc] sm:$0xf]
      %v1993 = vld [vmem:[%s1989 + $0x10] sm:$0xf]
      %v1994 = vld [vmem:[%s1989 + $0x18] sm:$0xf]
      %v1995 = vld [vmem:[%s1989 + $0x1c] sm:$0xf]
      %v1996 = vld [vmem:[%s1989 + $0x24] sm:$0xf]
      %v1997 = vld [vmem:[%s1989 + $0x28] sm:$0xf]
      %v1998 = vld [vmem:[%s1989 + $0x30] sm:$0xf]
      %v1999 = vld [vmem:[%s1989 + $0x34] sm:$0xf]
      %v2000 = vld [vmem:[%s1989 + $0x3c] sm:$0xf]
      %v2001 = vld [vmem:[%s1989 + $0x40] sm:$0xf]
      %v2002 = vld [vmem:[%s1989 + $0x48] sm:$0xf]
      %v2003 = vld [vmem:[%s1989 + $0x4c] sm:$0xf]
      %v2004 = vld [vmem:[%s1989 + $0x54] sm:$0xf]
      %v2005 = vld [vmem:[%s1989 + $0x58] sm:$0xf]
      %v2006 = vld [vmem:[%s1989 + $0x60] sm:$0xf]
      %v2007 = vld [vmem:[%s1989 + $0x64] sm:$0xf]
      %v2008 = vld [vmem:[%s1989 + $0x6c] sm:$0xf]
      %v2009 = vld [vmem:[%s1989 + $0x70] sm:$0xf]
      %v2010 = vld [vmem:[%s1989 + $0x78] sm:$0xf]
      %v2011 = vld [vmem:[%s1989 + $0x7c] sm:$0xf]
      %v2012 = vld [vmem:[%s1989 + $0x84] sm:$0xf]
      %v2013 = vld [vmem:[%s1989 + $0x88] sm:$0xf]
      %v2014 = vld [vmem:[%s1989 + $0x90] sm:$0xf]
      %v2015 = vld [vmem:[%s1989 + $0x94] sm:$0xf]
      %v2016 = vld [vmem:[%s1989 + $0x9c] sm:$0xf]
      %v2017 = vld [vmem:[%s1989 + $0xa0] sm:$0xf]
      %v2018 = vld [vmem:[%s1989 + $0xa8] sm:$0xf]
      %v2019 = vld [vmem:[%s1989 + $0xac] sm:$0xf]
      %v2020 = vld [vmem:[%s1989 + $0xb4] sm:$0xf]
      %v2021 = vld [vmem:[%s1989 + $0xb8] sm:$0xf]
      %s2022 = sadd.s32 %s368, 3
      %s2023 = smul.u32 %s2022, 16
      %s2024 = smul.addr %s2023, 4
      %s2025 = scalar_lea.vmem %s251, %s2024
      %v2026 = vld [vmem:[%s2025] sm:$0xf]
      %v2027 = vld [vmem:[%s2025 + $0x4] sm:$0xf]
      %v2028 = vld [vmem:[%s2025 + $0x8] sm:$0xf]
      %v2029 = vld [vmem:[%s2025 + $0xc] sm:$0xf]
      %v2030 = vld [vmem:[%s2025 + $0x10] sm:$0xf]
      %v2031 = vld [vmem:[%s2025 + $0x14] sm:$0xf]
      %v2032 = vld [vmem:[%s2025 + $0x18] sm:$0xf]
      %v2033 = vld [vmem:[%s2025 + $0x1c] sm:$0xf]
      %v2034 = vld [vmem:[%s2025 + $0x20] sm:$0xf]
      %v2035 = vld [vmem:[%s2025 + $0x24] sm:$0xf]
      %v2036 = vld [vmem:[%s2025 + $0x28] sm:$0xf]
      %v2037 = vld [vmem:[%s2025 + $0x2c] sm:$0xf]
      %v2038 = vld [vmem:[%s2025 + $0x30] sm:$0xf]
      %v2039 = vld [vmem:[%s2025 + $0x34] sm:$0xf]
      %v2040 = vld [vmem:[%s2025 + $0x38] sm:$0xf]
      %v2041 = vld [vmem:[%s2025 + $0x3c] sm:$0xf]
      %v2074 = vunpack.c.l.b16 %v1990
      %v2075 = vunpack.c.l.b16 %v1991
      %v2076 = vunpack.c.l.b16 %v1992
      %v2077 = vunpack.c.l.b16 %v1993
      %v2078 = vunpack.c.l.b16 %v1994
      %v2079 = vunpack.c.l.b16 %v1995
      %v2080 = vunpack.c.l.b16 %v1996
      %v2081 = vunpack.c.l.b16 %v1997
      %v2082 = vunpack.c.l.b16 %v1998
      %v2083 = vunpack.c.l.b16 %v1999
      %v2084 = vunpack.c.l.b16 %v2000
      %v2085 = vunpack.c.l.b16 %v2001
      %v2086 = vunpack.c.l.b16 %v2002
      %v2087 = vunpack.c.l.b16 %v2003
      %v2088 = vunpack.c.l.b16 %v2004
      %v2089 = vunpack.c.l.b16 %v2005
      %v2090 = vunpack.c.l.b16 %v2006
      %v2091 = vunpack.c.l.b16 %v2007
      %v2092 = vunpack.c.l.b16 %v2008
      %v2093 = vunpack.c.l.b16 %v2009
      %v2094 = vunpack.c.l.b16 %v2010
      %v2095 = vunpack.c.l.b16 %v2011
      %v2096 = vunpack.c.l.b16 %v2012
      %v2097 = vunpack.c.l.b16 %v2013
      %v2098 = vunpack.c.l.b16 %v2014
      %v2099 = vunpack.c.l.b16 %v2015
      %v2100 = vunpack.c.l.b16 %v2016
      %v2101 = vunpack.c.l.b16 %v2017
      %v2102 = vunpack.c.l.b16 %v2018
      %v2103 = vunpack.c.l.b16 %v2019
      %v2104 = vunpack.c.l.b16 %v2020
      %v2105 = vunpack.c.l.b16 %v2021
      %v2106 = vpack.c.b16 %v2075, %v2074
      %v2107 = vpack.c.b16 %v2077, %v2076
      %v2108 = vpack.c.b16 %v2079, %v2078
      %v2109 = vpack.c.b16 %v2081, %v2080
      %v2110 = vpack.c.b16 %v2083, %v2082
      %v2111 = vpack.c.b16 %v2085, %v2084
      %v2112 = vpack.c.b16 %v2087, %v2086
      %v2113 = vpack.c.b16 %v2089, %v2088
      %v2114 = vpack.c.b16 %v2091, %v2090
      %v2115 = vpack.c.b16 %v2093, %v2092
      %v2116 = vpack.c.b16 %v2095, %v2094
      %v2117 = vpack.c.b16 %v2097, %v2096
      %v2118 = vpack.c.b16 %v2099, %v2098
      %v2119 = vpack.c.b16 %v2101, %v2100
      %v2120 = vpack.c.b16 %v2103, %v2102
      %v2121 = vpack.c.b16 %v2105, %v2104
      %v2154 = vunpack.c.l.b16 %v2026
      %v2155 = vunpack.c.l.b16 %v2027
      %v2156 = vunpack.c.l.b16 %v2028
      %v2157 = vunpack.c.l.b16 %v2029
      %v2158 = vunpack.c.l.b16 %v2030
      %v2159 = vunpack.c.l.b16 %v2031
      %v2160 = vunpack.c.l.b16 %v2032
      %v2161 = vunpack.c.l.b16 %v2033
      %v2162 = vunpack.c.l.b16 %v2034
      %v2163 = vunpack.c.l.b16 %v2035
      %v2164 = vunpack.c.l.b16 %v2036
      %v2165 = vunpack.c.l.b16 %v2037
      %v2166 = vunpack.c.l.b16 %v2038
      %v2167 = vunpack.c.l.b16 %v2039
      %v2168 = vunpack.c.l.b16 %v2040
      %v2169 = vunpack.c.l.b16 %v2041
      %v2170 = vpack.c.b16 %v2155, %v2154
      %v2171 = vpack.c.b16 %v2157, %v2156
      %v2172 = vpack.c.b16 %v2159, %v2158
      %v2173 = vpack.c.b16 %v2161, %v2160
      %v2174 = vpack.c.b16 %v2163, %v2162
      %v2175 = vpack.c.b16 %v2165, %v2164
      %v2176 = vpack.c.b16 %v2167, %v2166
      %v2177 = vpack.c.b16 %v2169, %v2168
      %2186 = vmatprep.subr.bf16.mxu0 0
      %2187 = vmatpush1.bf16.msra.mxu0 %v2177
      %2188 = vmatprep.subr.bf16.mxu0 0
      %2189 = vmatpush1.bf16.msra.mxu0 %v2176
      %2190 = vmatprep.subr.bf16.mxu0 0
      %2191 = vmatpush1.bf16.msra.mxu0 %v2175
      %2192 = vmatprep.subr.bf16.mxu0 0
      %2193 = vmatpush1.bf16.msra.mxu0 %v2174
      %2194 = vmatprep.subr.bf16.mxu0 0
      %2195 = vmatpush1.bf16.msra.mxu0 %v2173
      %2196 = vmatprep.subr.bf16.mxu0 0
      %2197 = vmatpush1.bf16.msra.mxu0 %v2172
      %2198 = vmatprep.subr.bf16.mxu0 0
      %2199 = vmatpush1.bf16.msra.mxu0 %v2171
      %2200 = vmatprep.subr.bf16.mxu0 0
      %2201 = vmatpush1.bf16.msra.mxu0 %v2170
      %2202 = vmatprep.subr.bf16.mxu0 0
      %2203 = vmatpush2.bf16.msra.mxu0 0
      %2204 = vmatprep.subr.bf16.mxu0 0
      %2205 = vmatpush2.bf16.msra.mxu0 0
      %2206 = vmatprep.subr.bf16.mxu0 0
      %2207 = vmatpush2.bf16.msra.mxu0 0
      %2208 = vmatprep.subr.bf16.mxu0 0
      %2209 = vmatpush2.bf16.msra.mxu0 0
      %2210 = vmatprep.subr.bf16.mxu0 0
      %2211 = vmatpush2.bf16.msra.mxu0 0
      %2212 = vmatprep.subr.bf16.mxu0 0
      %2213 = vmatpush2.bf16.msra.mxu0 0
      %2214 = vmatprep.subr.bf16.mxu0 0
      %2215 = vmatpush2.bf16.msra.mxu0 0
      %2216 = vmatprep.subr.bf16.mxu0 0
      %2217 = vmatpush2.bf16.msra.mxu0 0
      %2218 = vmatprep.mubr.bf16.mxu0 0
      %2219 = vmatmul.mubr.bf16.gmra.mxu0 %v2106
      %v2220 = vpop.f32.mrf.mxu0
      %v2221 = vadd.f32 0.0, %v2220
      %v2222 = vpop.f32.mrf.mxu0
      %v2223 = vpop.f32.mrf.mxu0
      %v2224 = vadd.f32 0.0, %v2223
      %v2225 = vpop.f32.mrf.mxu0
      %2226 = vmatprep.mubr.bf16.mxu0 0
      %2227 = vmatmul.mubr.bf16.gmra.mxu0 %v2107
      %v2228 = vpop.f32.mrf.mxu0
      %v2229 = vadd.f32 0.0, %v2228
      %v2230 = vpop.f32.mrf.mxu0
      %v2231 = vpop.f32.mrf.mxu0
      %v2232 = vadd.f32 0.0, %v2231
      %v2233 = vpop.f32.mrf.mxu0
      %2234 = vmatprep.mubr.bf16.mxu0 0
      %2235 = vmatmul.mubr.bf16.gmra.mxu0 %v2108
      %v2236 = vpop.f32.mrf.mxu0
      %v2237 = vadd.f32 0.0, %v2236
      %v2238 = vpop.f32.mrf.mxu0
      %v2239 = vpop.f32.mrf.mxu0
      %v2240 = vadd.f32 0.0, %v2239
      %v2241 = vpop.f32.mrf.mxu0
      %2242 = vmatprep.mubr.bf16.mxu0 0
      %2243 = vmatmul.mubr.bf16.gmra.mxu0 %v2109
      %v2244 = vpop.f32.mrf.mxu0
      %v2245 = vadd.f32 0.0, %v2244
      %v2246 = vpop.f32.mrf.mxu0
      %v2247 = vpop.f32.mrf.mxu0
      %v2248 = vadd.f32 0.0, %v2247
      %v2249 = vpop.f32.mrf.mxu0
      %2250 = vmatprep.mubr.bf16.mxu0 0
      %2251 = vmatmul.mubr.bf16.gmra.mxu0 %v2110
      %v2252 = vpop.f32.mrf.mxu0
      %v2253 = vadd.f32 0.0, %v2252
      %v2254 = vpop.f32.mrf.mxu0
      %v2255 = vpop.f32.mrf.mxu0
      %v2256 = vadd.f32 0.0, %v2255
      %v2257 = vpop.f32.mrf.mxu0
      %2258 = vmatprep.mubr.bf16.mxu0 0
      %2259 = vmatmul.mubr.bf16.gmra.mxu0 %v2111
      %v2260 = vpop.f32.mrf.mxu0
      %v2261 = vadd.f32 0.0, %v2260
      %v2262 = vpop.f32.mrf.mxu0
      %v2263 = vpop.f32.mrf.mxu0
      %v2264 = vadd.f32 0.0, %v2263
      %v2265 = vpop.f32.mrf.mxu0
      %2266 = vmatprep.mubr.bf16.mxu0 0
      %2267 = vmatmul.mubr.bf16.gmra.mxu0 %v2112
      %v2268 = vpop.f32.mrf.mxu0
      %v2269 = vadd.f32 0.0, %v2268
      %v2270 = vpop.f32.mrf.mxu0
      %v2271 = vpop.f32.mrf.mxu0
      %v2272 = vadd.f32 0.0, %v2271
      %v2273 = vpop.f32.mrf.mxu0
      %2274 = vmatprep.mubr.bf16.mxu0 0
      %2275 = vmatmul.mubr.bf16.gmra.mxu0 %v2113
      %v2276 = vpop.f32.mrf.mxu0
      %v2277 = vadd.f32 0.0, %v2276
      %v2278 = vpop.f32.mrf.mxu0
      %v2279 = vpop.f32.mrf.mxu0
      %v2280 = vadd.f32 0.0, %v2279
      %v2281 = vpop.f32.mrf.mxu0
      %2282 = vmatprep.mubr.bf16.mxu0 0
      %2283 = vmatmul.mubr.bf16.gmra.mxu0 %v2114
      %v2284 = vpop.f32.mrf.mxu0
      %v2285 = vadd.f32 0.0, %v2284
      %v2286 = vpop.f32.mrf.mxu0
      %v2287 = vpop.f32.mrf.mxu0
      %v2288 = vadd.f32 0.0, %v2287
      %v2289 = vpop.f32.mrf.mxu0
      %2290 = vmatprep.mubr.bf16.mxu0 0
      %2291 = vmatmul.mubr.bf16.gmra.mxu0 %v2115
      %v2292 = vpop.f32.mrf.mxu0
      %v2293 = vadd.f32 0.0, %v2292
      %v2294 = vpop.f32.mrf.mxu0
      %v2295 = vpop.f32.mrf.mxu0
      %v2296 = vadd.f32 0.0, %v2295
      %v2297 = vpop.f32.mrf.mxu0
      %2298 = vmatprep.mubr.bf16.mxu0 0
      %2299 = vmatmul.mubr.bf16.gmra.mxu0 %v2116
      %v2300 = vpop.f32.mrf.mxu0
      %v2301 = vadd.f32 0.0, %v2300
      %v2302 = vpop.f32.mrf.mxu0
      %v2303 = vpop.f32.mrf.mxu0
      %v2304 = vadd.f32 0.0, %v2303
      %v2305 = vpop.f32.mrf.mxu0
      %2306 = vmatprep.mubr.bf16.mxu0 0
      %2307 = vmatmul.mubr.bf16.gmra.mxu0 %v2117
      %v2308 = vpop.f32.mrf.mxu0
      %v2309 = vadd.f32 0.0, %v2308
      %v2310 = vpop.f32.mrf.mxu0
      %v2311 = vpop.f32.mrf.mxu0
      %v2312 = vadd.f32 0.0, %v2311
      %v2313 = vpop.f32.mrf.mxu0
      %2314 = vmatprep.mubr.bf16.mxu0 0
      %2315 = vmatmul.mubr.bf16.gmra.mxu0 %v2118
      %v2316 = vpop.f32.mrf.mxu0
      %v2317 = vadd.f32 0.0, %v2316
      %v2318 = vpop.f32.mrf.mxu0
      %v2319 = vpop.f32.mrf.mxu0
      %v2320 = vadd.f32 0.0, %v2319
      %v2321 = vpop.f32.mrf.mxu0
      %2322 = vmatprep.mubr.bf16.mxu0 0
      %2323 = vmatmul.mubr.bf16.gmra.mxu0 %v2119
      %v2324 = vpop.f32.mrf.mxu0
      %v2325 = vadd.f32 0.0, %v2324
      %v2326 = vpop.f32.mrf.mxu0
      %v2327 = vpop.f32.mrf.mxu0
      %v2328 = vadd.f32 0.0, %v2327
      %v2329 = vpop.f32.mrf.mxu0
      %2330 = vmatprep.mubr.bf16.mxu0 0
      %2331 = vmatmul.mubr.bf16.gmra.mxu0 %v2120
      %v2332 = vpop.f32.mrf.mxu0
      %v2333 = vadd.f32 0.0, %v2332
      %v2334 = vpop.f32.mrf.mxu0
      %v2335 = vpop.f32.mrf.mxu0
      %v2336 = vadd.f32 0.0, %v2335
      %v2337 = vpop.f32.mrf.mxu0
      %2338 = vmatprep.mubr.bf16.mxu0 0
      %2339 = vmatmul.mubr.bf16.gmra.mxu0 %v2121
      %v2340 = vpop.f32.mrf.mxu0
      %v2341 = vadd.f32 0.0, %v2340
      %v2342 = vpop.f32.mrf.mxu0
      %v2343 = vpop.f32.mrf.mxu0
      %v2344 = vadd.f32 0.0, %v2343
      %v2345 = vpop.f32.mrf.mxu0
      %2346 = vdwg.mxu0
      %v2347 = vadd.f32 %v1957, %v2221
      %v2348 = vadd.f32 %v1958, %v2224
      %v2349 = vadd.f32 %v1959, %v2229
      %v2350 = vadd.f32 %v1960, %v2232
      %v2351 = vadd.f32 %v1961, %v2237
      %v2352 = vadd.f32 %v1962, %v2240
      %v2353 = vadd.f32 %v1963, %v2245
      %v2354 = vadd.f32 %v1964, %v2248
      %v2355 = vadd.f32 %v1965, %v2253
      %v2356 = vadd.f32 %v1966, %v2256
      %v2357 = vadd.f32 %v1967, %v2261
      %v2358 = vadd.f32 %v1968, %v2264
      %v2359 = vadd.f32 %v1969, %v2269
      %v2360 = vadd.f32 %v1970, %v2272
      %v2361 = vadd.f32 %v1971, %v2277
      %v2362 = vadd.f32 %v1972, %v2280
      %v2363 = vadd.f32 %v1973, %v2285
      %v2364 = vadd.f32 %v1974, %v2288
      %v2365 = vadd.f32 %v1975, %v2293
      %v2366 = vadd.f32 %v1976, %v2296
      %v2367 = vadd.f32 %v1977, %v2301
      %v2368 = vadd.f32 %v1978, %v2304
      %v2369 = vadd.f32 %v1979, %v2309
      %v2370 = vadd.f32 %v1980, %v2312
      %v2371 = vadd.f32 %v1981, %v2317
      %v2372 = vadd.f32 %v1982, %v2320
      %v2373 = vadd.f32 %v1983, %v2325
      %v2374 = vadd.f32 %v1984, %v2328
      %v2375 = vadd.f32 %v1985, %v2333
      %v2376 = vadd.f32 %v1986, %v2336
      %v2377 = vadd.f32 %v1987, %v2341
      %v2378 = vadd.f32 %v1988, %v2344
      %v2379 = vld [vmem:[%s1989] sm:$0xf]
      %v2380 = vld [vmem:[%s1989 + $0x4] sm:$0xf]
      %v2381 = vld [vmem:[%s1989 + $0x8] sm:$0x1]
      %v2382 = vld [vmem:[%s1989 + $0xc] sm:$0xf]
      %v2383 = vld [vmem:[%s1989 + $0x10] sm:$0xf]
      %v2384 = vld [vmem:[%s1989 + $0x14] sm:$0x1]
      %v2385 = vld [vmem:[%s1989 + $0x18] sm:$0xf]
      %v2386 = vld [vmem:[%s1989 + $0x1c] sm:$0xf]
      %v2387 = vld [vmem:[%s1989 + $0x20] sm:$0x1]
      %v2388 = vld [vmem:[%s1989 + $0x24] sm:$0xf]
      %v2389 = vld [vmem:[%s1989 + $0x28] sm:$0xf]
      %v2390 = vld [vmem:[%s1989 + $0x2c] sm:$0x1]
      %v2391 = vld [vmem:[%s1989 + $0x30] sm:$0xf]
      %v2392 = vld [vmem:[%s1989 + $0x34] sm:$0xf]
      %v2393 = vld [vmem:[%s1989 + $0x38] sm:$0x1]
      %v2394 = vld [vmem:[%s1989 + $0x3c] sm:$0xf]
      %v2395 = vld [vmem:[%s1989 + $0x40] sm:$0xf]
      %v2396 = vld [vmem:[%s1989 + $0x44] sm:$0x1]
      %v2397 = vld [vmem:[%s1989 + $0x48] sm:$0xf]
      %v2398 = vld [vmem:[%s1989 + $0x4c] sm:$0xf]
      %v2399 = vld [vmem:[%s1989 + $0x50] sm:$0x1]
      %v2400 = vld [vmem:[%s1989 + $0x54] sm:$0xf]
      %v2401 = vld [vmem:[%s1989 + $0x58] sm:$0xf]
      %v2402 = vld [vmem:[%s1989 + $0x5c] sm:$0x1]
      %v2403 = vld [vmem:[%s1989 + $0x60] sm:$0xf]
      %v2404 = vld [vmem:[%s1989 + $0x64] sm:$0xf]
      %v2405 = vld [vmem:[%s1989 + $0x68] sm:$0x1]
      %v2406 = vld [vmem:[%s1989 + $0x6c] sm:$0xf]
      %v2407 = vld [vmem:[%s1989 + $0x70] sm:$0xf]
      %v2408 = vld [vmem:[%s1989 + $0x74] sm:$0x1]
      %v2409 = vld [vmem:[%s1989 + $0x78] sm:$0xf]
      %v2410 = vld [vmem:[%s1989 + $0x7c] sm:$0xf]
      %v2411 = vld [vmem:[%s1989 + $0x80] sm:$0x1]
      %v2412 = vld [vmem:[%s1989 + $0x84] sm:$0xf]
      %v2413 = vld [vmem:[%s1989 + $0x88] sm:$0xf]
      %v2414 = vld [vmem:[%s1989 + $0x8c] sm:$0x1]
      %v2415 = vld [vmem:[%s1989 + $0x90] sm:$0xf]
      %v2416 = vld [vmem:[%s1989 + $0x94] sm:$0xf]
      %v2417 = vld [vmem:[%s1989 + $0x98] sm:$0x1]
      %v2418 = vld [vmem:[%s1989 + $0x9c] sm:$0xf]
      %v2419 = vld [vmem:[%s1989 + $0xa0] sm:$0xf]
      %v2420 = vld [vmem:[%s1989 + $0xa4] sm:$0x1]
      %v2421 = vld [vmem:[%s1989 + $0xa8] sm:$0xf]
      %v2422 = vld [vmem:[%s1989 + $0xac] sm:$0xf]
      %v2423 = vld [vmem:[%s1989 + $0xb0] sm:$0x1]
      %v2424 = vld [vmem:[%s1989 + $0xb4] sm:$0xf]
      %v2425 = vld [vmem:[%s1989 + $0xb8] sm:$0xf]
      %v2426 = vld [vmem:[%s1989 + $0xbc] sm:$0x1]
      %s2427 = sadd.s32 %s368, 4
      %s2428 = smul.u32 %s2427, 16
      %s2429 = smul.addr %s2428, 4
      %s2430 = scalar_lea.vmem %s251, %s2429
      %v2431 = vld [vmem:[%s2430] sm:$0xf]
      %v2432 = vld [vmem:[%s2430 + $0x4] sm:$0xf]
      %v2433 = vld [vmem:[%s2430 + $0x8] sm:$0xf]
      %v2434 = vld [vmem:[%s2430 + $0xc] sm:$0xf]
      %v2435 = vld [vmem:[%s2430 + $0x10] sm:$0xf]
      %v2436 = vld [vmem:[%s2430 + $0x14] sm:$0xf]
      %v2437 = vld [vmem:[%s2430 + $0x18] sm:$0xf]
      %v2438 = vld [vmem:[%s2430 + $0x1c] sm:$0xf]
      %v2439 = vld [vmem:[%s2430 + $0x20] sm:$0xf]
      %v2440 = vld [vmem:[%s2430 + $0x24] sm:$0xf]
      %v2441 = vld [vmem:[%s2430 + $0x28] sm:$0xf]
      %v2442 = vld [vmem:[%s2430 + $0x2c] sm:$0xf]
      %v2443 = vld [vmem:[%s2430 + $0x30] sm:$0xf]
      %v2444 = vld [vmem:[%s2430 + $0x34] sm:$0xf]
      %v2445 = vld [vmem:[%s2430 + $0x38] sm:$0xf]
      %v2446 = vld [vmem:[%s2430 + $0x3c] sm:$0xf]
      %v2448 = vshrl.u32 %v2379, 16
      %v2450 = vrot.slane %v2448, 4
      %v2451 = vshll.u32 %v2379, 16
      %v2453 = vrot.slane %v2451, 5
      %v2454 = vor.u32 %v2450, %v2453
      %v2455 = vrot.slane %v2454, 4
      %v2457 = vshll.u32 %v2380, 16
      %v2459 = vrot.slane %v2457, 5
      %v2460 = vsel %vm795, %v2455, %v2459
      %v2461 = vshrl.u32 %v2380, 16
      %v2463 = vrot.slane %v2461, 4
      %v2464 = vor.u32 %v2463, %v2459
      %v2465 = vrot.slane %v2464, 4
      %v2467 = vshll.u32 %v2381, 16
      %v2469 = vrot.slane %v2467, 5
      %v2470 = vsel %vm795, %v2465, %v2469
      %v2472 = vshrl.u32 %v2382, 16
      %v2474 = vrot.slane %v2472, 4
      %v2475 = vshll.u32 %v2382, 16
      %v2477 = vrot.slane %v2475, 5
      %v2478 = vor.u32 %v2474, %v2477
      %v2479 = vrot.slane %v2478, 4
      %v2481 = vshll.u32 %v2383, 16
      %v2483 = vrot.slane %v2481, 5
      %v2484 = vsel %vm795, %v2479, %v2483
      %v2485 = vshrl.u32 %v2383, 16
      %v2487 = vrot.slane %v2485, 4
      %v2488 = vor.u32 %v2487, %v2483
      %v2489 = vrot.slane %v2488, 4
      %v2491 = vshll.u32 %v2384, 16
      %v2493 = vrot.slane %v2491, 5
      %v2494 = vsel %vm795, %v2489, %v2493
      %v2496 = vshrl.u32 %v2385, 16
      %v2498 = vrot.slane %v2496, 4
      %v2499 = vshll.u32 %v2385, 16
      %v2501 = vrot.slane %v2499, 5
      %v2502 = vor.u32 %v2498, %v2501
      %v2503 = vrot.slane %v2502, 4
      %v2505 = vshll.u32 %v2386, 16
      %v2507 = vrot.slane %v2505, 5
      %v2508 = vsel %vm795, %v2503, %v2507
      %v2509 = vshrl.u32 %v2386, 16
      %v2511 = vrot.slane %v2509, 4
      %v2512 = vor.u32 %v2511, %v2507
      %v2513 = vrot.slane %v2512, 4
      %v2515 = vshll.u32 %v2387, 16
      %v2517 = vrot.slane %v2515, 5
      %v2518 = vsel %vm795, %v2513, %v2517
      %v2520 = vshrl.u32 %v2388, 16
      %v2522 = vrot.slane %v2520, 4
      %v2523 = vshll.u32 %v2388, 16
      %v2525 = vrot.slane %v2523, 5
      %v2526 = vor.u32 %v2522, %v2525
      %v2527 = vrot.slane %v2526, 4
      %v2529 = vshll.u32 %v2389, 16
      %v2531 = vrot.slane %v2529, 5
      %v2532 = vsel %vm795, %v2527, %v2531
      %v2533 = vshrl.u32 %v2389, 16
      %v2535 = vrot.slane %v2533, 4
      %v2536 = vor.u32 %v2535, %v2531
      %v2537 = vrot.slane %v2536, 4
      %v2539 = vshll.u32 %v2390, 16
      %v2541 = vrot.slane %v2539, 5
      %v2542 = vsel %vm795, %v2537, %v2541
      %v2544 = vshrl.u32 %v2391, 16
      %v2546 = vrot.slane %v2544, 4
      %v2547 = vshll.u32 %v2391, 16
      %v2549 = vrot.slane %v2547, 5
      %v2550 = vor.u32 %v2546, %v2549
      %v2551 = vrot.slane %v2550, 4
      %v2553 = vshll.u32 %v2392, 16
      %v2555 = vrot.slane %v2553, 5
      %v2556 = vsel %vm795, %v2551, %v2555
      %v2557 = vshrl.u32 %v2392, 16
      %v2559 = vrot.slane %v2557, 4
      %v2560 = vor.u32 %v2559, %v2555
      %v2561 = vrot.slane %v2560, 4
      %v2563 = vshll.u32 %v2393, 16
      %v2565 = vrot.slane %v2563, 5
      %v2566 = vsel %vm795, %v2561, %v2565
      %v2568 = vshrl.u32 %v2394, 16
      %v2570 = vrot.slane %v2568, 4
      %v2571 = vshll.u32 %v2394, 16
      %v2573 = vrot.slane %v2571, 5
      %v2574 = vor.u32 %v2570, %v2573
      %v2575 = vrot.slane %v2574, 4
      %v2577 = vshll.u32 %v2395, 16
      %v2579 = vrot.slane %v2577, 5
      %v2580 = vsel %vm795, %v2575, %v2579
      %v2581 = vshrl.u32 %v2395, 16
      %v2583 = vrot.slane %v2581, 4
      %v2584 = vor.u32 %v2583, %v2579
      %v2585 = vrot.slane %v2584, 4
      %v2587 = vshll.u32 %v2396, 16
      %v2589 = vrot.slane %v2587, 5
      %v2590 = vsel %vm795, %v2585, %v2589
      %v2592 = vshrl.u32 %v2397, 16
      %v2594 = vrot.slane %v2592, 4
      %v2595 = vshll.u32 %v2397, 16
      %v2597 = vrot.slane %v2595, 5
      %v2598 = vor.u32 %v2594, %v2597
      %v2599 = vrot.slane %v2598, 4
      %v2601 = vshll.u32 %v2398, 16
      %v2603 = vrot.slane %v2601, 5
      %v2604 = vsel %vm795, %v2599, %v2603
      %v2605 = vshrl.u32 %v2398, 16
      %v2607 = vrot.slane %v2605, 4
      %v2608 = vor.u32 %v2607, %v2603
      %v2609 = vrot.slane %v2608, 4
      %v2611 = vshll.u32 %v2399, 16
      %v2613 = vrot.slane %v2611, 5
      %v2614 = vsel %vm795, %v2609, %v2613
      %v2616 = vshrl.u32 %v2400, 16
      %v2618 = vrot.slane %v2616, 4
      %v2619 = vshll.u32 %v2400, 16
      %v2621 = vrot.slane %v2619, 5
      %v2622 = vor.u32 %v2618, %v2621
      %v2623 = vrot.slane %v2622, 4
      %v2625 = vshll.u32 %v2401, 16
      %v2627 = vrot.slane %v2625, 5
      %v2628 = vsel %vm795, %v2623, %v2627
      %v2629 = vshrl.u32 %v2401, 16
      %v2631 = vrot.slane %v2629, 4
      %v2632 = vor.u32 %v2631, %v2627
      %v2633 = vrot.slane %v2632, 4
      %v2635 = vshll.u32 %v2402, 16
      %v2637 = vrot.slane %v2635, 5
      %v2638 = vsel %vm795, %v2633, %v2637
      %v2640 = vshrl.u32 %v2403, 16
      %v2642 = vrot.slane %v2640, 4
      %v2643 = vshll.u32 %v2403, 16
      %v2645 = vrot.slane %v2643, 5
      %v2646 = vor.u32 %v2642, %v2645
      %v2647 = vrot.slane %v2646, 4
      %v2649 = vshll.u32 %v2404, 16
      %v2651 = vrot.slane %v2649, 5
      %v2652 = vsel %vm795, %v2647, %v2651
      %v2653 = vshrl.u32 %v2404, 16
      %v2655 = vrot.slane %v2653, 4
      %v2656 = vor.u32 %v2655, %v2651
      %v2657 = vrot.slane %v2656, 4
      %v2659 = vshll.u32 %v2405, 16
      %v2661 = vrot.slane %v2659, 5
      %v2662 = vsel %vm795, %v2657, %v2661
      %v2664 = vshrl.u32 %v2406, 16
      %v2666 = vrot.slane %v2664, 4
      %v2667 = vshll.u32 %v2406, 16
      %v2669 = vrot.slane %v2667, 5
      %v2670 = vor.u32 %v2666, %v2669
      %v2671 = vrot.slane %v2670, 4
      %v2673 = vshll.u32 %v2407, 16
      %v2675 = vrot.slane %v2673, 5
      %v2676 = vsel %vm795, %v2671, %v2675
      %v2677 = vshrl.u32 %v2407, 16
      %v2679 = vrot.slane %v2677, 4
      %v2680 = vor.u32 %v2679, %v2675
      %v2681 = vrot.slane %v2680, 4
      %v2683 = vshll.u32 %v2408, 16
      %v2685 = vrot.slane %v2683, 5
      %v2686 = vsel %vm795, %v2681, %v2685
      %v2688 = vshrl.u32 %v2409, 16
      %v2690 = vrot.slane %v2688, 4
      %v2691 = vshll.u32 %v2409, 16
      %v2693 = vrot.slane %v2691, 5
      %v2694 = vor.u32 %v2690, %v2693
      %v2695 = vrot.slane %v2694, 4
      %v2697 = vshll.u32 %v2410, 16
      %v2699 = vrot.slane %v2697, 5
      %v2700 = vsel %vm795, %v2695, %v2699
      %v2701 = vshrl.u32 %v2410, 16
      %v2703 = vrot.slane %v2701, 4
      %v2704 = vor.u32 %v2703, %v2699
      %v2705 = vrot.slane %v2704, 4
      %v2707 = vshll.u32 %v2411, 16
      %v2709 = vrot.slane %v2707, 5
      %v2710 = vsel %vm795, %v2705, %v2709
      %v2712 = vshrl.u32 %v2412, 16
      %v2714 = vrot.slane %v2712, 4
      %v2715 = vshll.u32 %v2412, 16
      %v2717 = vrot.slane %v2715, 5
      %v2718 = vor.u32 %v2714, %v2717
      %v2719 = vrot.slane %v2718, 4
      %v2721 = vshll.u32 %v2413, 16
      %v2723 = vrot.slane %v2721, 5
      %v2724 = vsel %vm795, %v2719, %v2723
      %v2725 = vshrl.u32 %v2413, 16
      %v2727 = vrot.slane %v2725, 4
      %v2728 = vor.u32 %v2727, %v2723
      %v2729 = vrot.slane %v2728, 4
      %v2731 = vshll.u32 %v2414, 16
      %v2733 = vrot.slane %v2731, 5
      %v2734 = vsel %vm795, %v2729, %v2733
      %v2736 = vshrl.u32 %v2415, 16
      %v2738 = vrot.slane %v2736, 4
      %v2739 = vshll.u32 %v2415, 16
      %v2741 = vrot.slane %v2739, 5
      %v2742 = vor.u32 %v2738, %v2741
      %v2743 = vrot.slane %v2742, 4
      %v2745 = vshll.u32 %v2416, 16
      %v2747 = vrot.slane %v2745, 5
      %v2748 = vsel %vm795, %v2743, %v2747
      %v2749 = vshrl.u32 %v2416, 16
      %v2751 = vrot.slane %v2749, 4
      %v2752 = vor.u32 %v2751, %v2747
      %v2753 = vrot.slane %v2752, 4
      %v2755 = vshll.u32 %v2417, 16
      %v2757 = vrot.slane %v2755, 5
      %v2758 = vsel %vm795, %v2753, %v2757
      %v2760 = vshrl.u32 %v2418, 16
      %v2762 = vrot.slane %v2760, 4
      %v2763 = vshll.u32 %v2418, 16
      %v2765 = vrot.slane %v2763, 5
      %v2766 = vor.u32 %v2762, %v2765
      %v2767 = vrot.slane %v2766, 4
      %v2769 = vshll.u32 %v2419, 16
      %v2771 = vrot.slane %v2769, 5
      %v2772 = vsel %vm795, %v2767, %v2771
      %v2773 = vshrl.u32 %v2419, 16
      %v2775 = vrot.slane %v2773, 4
      %v2776 = vor.u32 %v2775, %v2771
      %v2777 = vrot.slane %v2776, 4
      %v2779 = vshll.u32 %v2420, 16
      %v2781 = vrot.slane %v2779, 5
      %v2782 = vsel %vm795, %v2777, %v2781
      %v2784 = vshrl.u32 %v2421, 16
      %v2786 = vrot.slane %v2784, 4
      %v2787 = vshll.u32 %v2421, 16
      %v2789 = vrot.slane %v2787, 5
      %v2790 = vor.u32 %v2786, %v2789
      %v2791 = vrot.slane %v2790, 4
      %v2793 = vshll.u32 %v2422, 16
      %v2795 = vrot.slane %v2793, 5
      %v2796 = vsel %vm795, %v2791, %v2795
      %v2797 = vshrl.u32 %v2422, 16
      %v2799 = vrot.slane %v2797, 4
      %v2800 = vor.u32 %v2799, %v2795
      %v2801 = vrot.slane %v2800, 4
      %v2803 = vshll.u32 %v2423, 16
      %v2805 = vrot.slane %v2803, 5
      %v2806 = vsel %vm795, %v2801, %v2805
      %v2808 = vshrl.u32 %v2424, 16
      %v2810 = vrot.slane %v2808, 4
      %v2811 = vshll.u32 %v2424, 16
      %v2813 = vrot.slane %v2811, 5
      %v2814 = vor.u32 %v2810, %v2813
      %v2815 = vrot.slane %v2814, 4
      %v2817 = vshll.u32 %v2425, 16
      %v2819 = vrot.slane %v2817, 5
      %v2820 = vsel %vm795, %v2815, %v2819
      %v2821 = vshrl.u32 %v2425, 16
      %v2823 = vrot.slane %v2821, 4
      %v2824 = vor.u32 %v2823, %v2819
      %v2825 = vrot.slane %v2824, 4
      %v2827 = vshll.u32 %v2426, 16
      %v2829 = vrot.slane %v2827, 5
      %v2830 = vsel %vm795, %v2825, %v2829
      %v2831 = vunpack.c.l.b16 %v2460
      %v2832 = vunpack.c.l.b16 %v2470
      %v2833 = vunpack.c.l.b16 %v2484
      %v2834 = vunpack.c.l.b16 %v2494
      %v2835 = vunpack.c.l.b16 %v2508
      %v2836 = vunpack.c.l.b16 %v2518
      %v2837 = vunpack.c.l.b16 %v2532
      %v2838 = vunpack.c.l.b16 %v2542
      %v2839 = vunpack.c.l.b16 %v2556
      %v2840 = vunpack.c.l.b16 %v2566
      %v2841 = vunpack.c.l.b16 %v2580
      %v2842 = vunpack.c.l.b16 %v2590
      %v2843 = vunpack.c.l.b16 %v2604
      %v2844 = vunpack.c.l.b16 %v2614
      %v2845 = vunpack.c.l.b16 %v2628
      %v2846 = vunpack.c.l.b16 %v2638
      %v2847 = vunpack.c.l.b16 %v2652
      %v2848 = vunpack.c.l.b16 %v2662
      %v2849 = vunpack.c.l.b16 %v2676
      %v2850 = vunpack.c.l.b16 %v2686
      %v2851 = vunpack.c.l.b16 %v2700
      %v2852 = vunpack.c.l.b16 %v2710
      %v2853 = vunpack.c.l.b16 %v2724
      %v2854 = vunpack.c.l.b16 %v2734
      %v2855 = vunpack.c.l.b16 %v2748
      %v2856 = vunpack.c.l.b16 %v2758
      %v2857 = vunpack.c.l.b16 %v2772
      %v2858 = vunpack.c.l.b16 %v2782
      %v2859 = vunpack.c.l.b16 %v2796
      %v2860 = vunpack.c.l.b16 %v2806
      %v2861 = vunpack.c.l.b16 %v2820
      %v2862 = vunpack.c.l.b16 %v2830
      %v2863 = vpack.c.b16 %v2832, %v2831
      %v2864 = vpack.c.b16 %v2834, %v2833
      %v2865 = vpack.c.b16 %v2836, %v2835
      %v2866 = vpack.c.b16 %v2838, %v2837
      %v2867 = vpack.c.b16 %v2840, %v2839
      %v2868 = vpack.c.b16 %v2842, %v2841
      %v2869 = vpack.c.b16 %v2844, %v2843
      %v2870 = vpack.c.b16 %v2846, %v2845
      %v2871 = vpack.c.b16 %v2848, %v2847
      %v2872 = vpack.c.b16 %v2850, %v2849
      %v2873 = vpack.c.b16 %v2852, %v2851
      %v2874 = vpack.c.b16 %v2854, %v2853
      %v2875 = vpack.c.b16 %v2856, %v2855
      %v2876 = vpack.c.b16 %v2858, %v2857
      %v2877 = vpack.c.b16 %v2860, %v2859
      %v2878 = vpack.c.b16 %v2862, %v2861
      %v2911 = vunpack.c.l.b16 %v2431
      %v2912 = vunpack.c.l.b16 %v2432
      %v2913 = vunpack.c.l.b16 %v2433
      %v2914 = vunpack.c.l.b16 %v2434
      %v2915 = vunpack.c.l.b16 %v2435
      %v2916 = vunpack.c.l.b16 %v2436
      %v2917 = vunpack.c.l.b16 %v2437
      %v2918 = vunpack.c.l.b16 %v2438
      %v2919 = vunpack.c.l.b16 %v2439
      %v2920 = vunpack.c.l.b16 %v2440
      %v2921 = vunpack.c.l.b16 %v2441
      %v2922 = vunpack.c.l.b16 %v2442
      %v2923 = vunpack.c.l.b16 %v2443
      %v2924 = vunpack.c.l.b16 %v2444
      %v2925 = vunpack.c.l.b16 %v2445
      %v2926 = vunpack.c.l.b16 %v2446
      %v2927 = vpack.c.b16 %v2912, %v2911
      %v2928 = vpack.c.b16 %v2914, %v2913
      %v2929 = vpack.c.b16 %v2916, %v2915
      %v2930 = vpack.c.b16 %v2918, %v2917
      %v2931 = vpack.c.b16 %v2920, %v2919
      %v2932 = vpack.c.b16 %v2922, %v2921
      %v2933 = vpack.c.b16 %v2924, %v2923
      %v2934 = vpack.c.b16 %v2926, %v2925
      %2943 = vmatprep.subr.bf16.mxu0 0
      %2944 = vmatpush1.bf16.msra.mxu0 %v2934
      %2945 = vmatprep.subr.bf16.mxu0 0
      %2946 = vmatpush1.bf16.msra.mxu0 %v2933
      %2947 = vmatprep.subr.bf16.mxu0 0
      %2948 = vmatpush1.bf16.msra.mxu0 %v2932
      %2949 = vmatprep.subr.bf16.mxu0 0
      %2950 = vmatpush1.bf16.msra.mxu0 %v2931
      %2951 = vmatprep.subr.bf16.mxu0 0
      %2952 = vmatpush1.bf16.msra.mxu0 %v2930
      %2953 = vmatprep.subr.bf16.mxu0 0
      %2954 = vmatpush1.bf16.msra.mxu0 %v2929
      %2955 = vmatprep.subr.bf16.mxu0 0
      %2956 = vmatpush1.bf16.msra.mxu0 %v2928
      %2957 = vmatprep.subr.bf16.mxu0 0
      %2958 = vmatpush1.bf16.msra.mxu0 %v2927
      %2959 = vmatprep.subr.bf16.mxu0 0
      %2960 = vmatpush2.bf16.msra.mxu0 0
      %2961 = vmatprep.subr.bf16.mxu0 0
      %2962 = vmatpush2.bf16.msra.mxu0 0
      %2963 = vmatprep.subr.bf16.mxu0 0
      %2964 = vmatpush2.bf16.msra.mxu0 0
      %2965 = vmatprep.subr.bf16.mxu0 0
      %2966 = vmatpush2.bf16.msra.mxu0 0
      %2967 = vmatprep.subr.bf16.mxu0 0
      %2968 = vmatpush2.bf16.msra.mxu0 0
      %2969 = vmatprep.subr.bf16.mxu0 0
      %2970 = vmatpush2.bf16.msra.mxu0 0
      %2971 = vmatprep.subr.bf16.mxu0 0
      %2972 = vmatpush2.bf16.msra.mxu0 0
      %2973 = vmatprep.subr.bf16.mxu0 0
      %2974 = vmatpush2.bf16.msra.mxu0 0
      %2975 = vmatprep.mubr.bf16.mxu0 0
      %2976 = vmatmul.mubr.bf16.gmra.mxu0 %v2863
      %v2977 = vpop.f32.mrf.mxu0
      %v2978 = vadd.f32 0.0, %v2977
      %v2979 = vpop.f32.mrf.mxu0
      %v2980 = vpop.f32.mrf.mxu0
      %v2981 = vadd.f32 0.0, %v2980
      %v2982 = vpop.f32.mrf.mxu0
      %2983 = vmatprep.mubr.bf16.mxu0 0
      %2984 = vmatmul.mubr.bf16.gmra.mxu0 %v2864
      %v2985 = vpop.f32.mrf.mxu0
      %v2986 = vadd.f32 0.0, %v2985
      %v2987 = vpop.f32.mrf.mxu0
      %v2988 = vpop.f32.mrf.mxu0
      %v2989 = vadd.f32 0.0, %v2988
      %v2990 = vpop.f32.mrf.mxu0
      %2991 = vmatprep.mubr.bf16.mxu0 0
      %2992 = vmatmul.mubr.bf16.gmra.mxu0 %v2865
      %v2993 = vpop.f32.mrf.mxu0
      %v2994 = vadd.f32 0.0, %v2993
      %v2995 = vpop.f32.mrf.mxu0
      %v2996 = vpop.f32.mrf.mxu0
      %v2997 = vadd.f32 0.0, %v2996
      %v2998 = vpop.f32.mrf.mxu0
      %2999 = vmatprep.mubr.bf16.mxu0 0
      %3000 = vmatmul.mubr.bf16.gmra.mxu0 %v2866
      %v3001 = vpop.f32.mrf.mxu0
      %v3002 = vadd.f32 0.0, %v3001
      %v3003 = vpop.f32.mrf.mxu0
      %v3004 = vpop.f32.mrf.mxu0
      %v3005 = vadd.f32 0.0, %v3004
      %v3006 = vpop.f32.mrf.mxu0
      %3007 = vmatprep.mubr.bf16.mxu0 0
      %3008 = vmatmul.mubr.bf16.gmra.mxu0 %v2867
      %v3009 = vpop.f32.mrf.mxu0
      %v3010 = vadd.f32 0.0, %v3009
      %v3011 = vpop.f32.mrf.mxu0
      %v3012 = vpop.f32.mrf.mxu0
      %v3013 = vadd.f32 0.0, %v3012
      %v3014 = vpop.f32.mrf.mxu0
      %3015 = vmatprep.mubr.bf16.mxu0 0
      %3016 = vmatmul.mubr.bf16.gmra.mxu0 %v2868
      %v3017 = vpop.f32.mrf.mxu0
      %v3018 = vadd.f32 0.0, %v3017
      %v3019 = vpop.f32.mrf.mxu0
      %v3020 = vpop.f32.mrf.mxu0
      %v3021 = vadd.f32 0.0, %v3020
      %v3022 = vpop.f32.mrf.mxu0
      %3023 = vmatprep.mubr.bf16.mxu0 0
      %3024 = vmatmul.mubr.bf16.gmra.mxu0 %v2869
      %v3025 = vpop.f32.mrf.mxu0
      %v3026 = vadd.f32 0.0, %v3025
      %v3027 = vpop.f32.mrf.mxu0
      %v3028 = vpop.f32.mrf.mxu0
      %v3029 = vadd.f32 0.0, %v3028
      %v3030 = vpop.f32.mrf.mxu0
      %3031 = vmatprep.mubr.bf16.mxu0 0
      %3032 = vmatmul.mubr.bf16.gmra.mxu0 %v2870
      %v3033 = vpop.f32.mrf.mxu0
      %v3034 = vadd.f32 0.0, %v3033
      %v3035 = vpop.f32.mrf.mxu0
      %v3036 = vpop.f32.mrf.mxu0
      %v3037 = vadd.f32 0.0, %v3036
      %v3038 = vpop.f32.mrf.mxu0
      %3039 = vmatprep.mubr.bf16.mxu0 0
      %3040 = vmatmul.mubr.bf16.gmra.mxu0 %v2871
      %v3041 = vpop.f32.mrf.mxu0
      %v3042 = vadd.f32 0.0, %v3041
      %v3043 = vpop.f32.mrf.mxu0
      %v3044 = vpop.f32.mrf.mxu0
      %v3045 = vadd.f32 0.0, %v3044
      %v3046 = vpop.f32.mrf.mxu0
      %3047 = vmatprep.mubr.bf16.mxu0 0
      %3048 = vmatmul.mubr.bf16.gmra.mxu0 %v2872
      %v3049 = vpop.f32.mrf.mxu0
      %v3050 = vadd.f32 0.0, %v3049
      %v3051 = vpop.f32.mrf.mxu0
      %v3052 = vpop.f32.mrf.mxu0
      %v3053 = vadd.f32 0.0, %v3052
      %v3054 = vpop.f32.mrf.mxu0
      %3055 = vmatprep.mubr.bf16.mxu0 0
      %3056 = vmatmul.mubr.bf16.gmra.mxu0 %v2873
      %v3057 = vpop.f32.mrf.mxu0
      %v3058 = vadd.f32 0.0, %v3057
      %v3059 = vpop.f32.mrf.mxu0
      %v3060 = vpop.f32.mrf.mxu0
      %v3061 = vadd.f32 0.0, %v3060
      %v3062 = vpop.f32.mrf.mxu0
      %3063 = vmatprep.mubr.bf16.mxu0 0
      %3064 = vmatmul.mubr.bf16.gmra.mxu0 %v2874
      %v3065 = vpop.f32.mrf.mxu0
      %v3066 = vadd.f32 0.0, %v3065
      %v3067 = vpop.f32.mrf.mxu0
      %v3068 = vpop.f32.mrf.mxu0
      %v3069 = vadd.f32 0.0, %v3068
      %v3070 = vpop.f32.mrf.mxu0
      %3071 = vmatprep.mubr.bf16.mxu0 0
      %3072 = vmatmul.mubr.bf16.gmra.mxu0 %v2875
      %v3073 = vpop.f32.mrf.mxu0
      %v3074 = vadd.f32 0.0, %v3073
      %v3075 = vpop.f32.mrf.mxu0
      %v3076 = vpop.f32.mrf.mxu0
      %v3077 = vadd.f32 0.0, %v3076
      %v3078 = vpop.f32.mrf.mxu0
      %3079 = vmatprep.mubr.bf16.mxu0 0
      %3080 = vmatmul.mubr.bf16.gmra.mxu0 %v2876
      %v3081 = vpop.f32.mrf.mxu0
      %v3082 = vadd.f32 0.0, %v3081
      %v3083 = vpop.f32.mrf.mxu0
      %v3084 = vpop.f32.mrf.mxu0
      %v3085 = vadd.f32 0.0, %v3084
      %v3086 = vpop.f32.mrf.mxu0
      %3087 = vmatprep.mubr.bf16.mxu0 0
      %3088 = vmatmul.mubr.bf16.gmra.mxu0 %v2877
      %v3089 = vpop.f32.mrf.mxu0
      %v3090 = vadd.f32 0.0, %v3089
      %v3091 = vpop.f32.mrf.mxu0
      %v3092 = vpop.f32.mrf.mxu0
      %v3093 = vadd.f32 0.0, %v3092
      %v3094 = vpop.f32.mrf.mxu0
      %3095 = vmatprep.mubr.bf16.mxu0 0
      %3096 = vmatmul.mubr.bf16.gmra.mxu0 %v2878
      %v3097 = vpop.f32.mrf.mxu0
      %v3098 = vadd.f32 0.0, %v3097
      %v3099 = vpop.f32.mrf.mxu0
      %v3100 = vpop.f32.mrf.mxu0
      %v3101 = vadd.f32 0.0, %v3100
      %v3102 = vpop.f32.mrf.mxu0
      %3103 = vdwg.mxu0
      %v3104 = vadd.f32 %v2347, %v2978
      %v3105 = vadd.f32 %v2348, %v2981
      %v3106 = vadd.f32 %v2349, %v2986
      %v3107 = vadd.f32 %v2350, %v2989
      %v3108 = vadd.f32 %v2351, %v2994
      %v3109 = vadd.f32 %v2352, %v2997
      %v3110 = vadd.f32 %v2353, %v3002
      %v3111 = vadd.f32 %v2354, %v3005
      %v3112 = vadd.f32 %v2355, %v3010
      %v3113 = vadd.f32 %v2356, %v3013
      %v3114 = vadd.f32 %v2357, %v3018
      %v3115 = vadd.f32 %v2358, %v3021
      %v3116 = vadd.f32 %v2359, %v3026
      %v3117 = vadd.f32 %v2360, %v3029
      %v3118 = vadd.f32 %v2361, %v3034
      %v3119 = vadd.f32 %v2362, %v3037
      %v3120 = vadd.f32 %v2363, %v3042
      %v3121 = vadd.f32 %v2364, %v3045
      %v3122 = vadd.f32 %v2365, %v3050
      %v3123 = vadd.f32 %v2366, %v3053
      %v3124 = vadd.f32 %v2367, %v3058
      %v3125 = vadd.f32 %v2368, %v3061
      %v3126 = vadd.f32 %v2369, %v3066
      %v3127 = vadd.f32 %v2370, %v3069
      %v3128 = vadd.f32 %v2371, %v3074
      %v3129 = vadd.f32 %v2372, %v3077
      %v3130 = vadd.f32 %v2373, %v3082
      %v3131 = vadd.f32 %v2374, %v3085
      %v3132 = vadd.f32 %v2375, %v3090
      %v3133 = vadd.f32 %v2376, %v3093
      %v3134 = vadd.f32 %v2377, %v3098
      %v3135 = vadd.f32 %v2378, %v3101
      %v3136 = vld [vmem:[%s1989] sm:$0xe]
      %v3137 = vld [vmem:[%s1989 + $0xc] sm:$0xe]
      %v3138 = vld [vmem:[%s1989 + $0x18] sm:$0xe]
      %v3139 = vld [vmem:[%s1989 + $0x24] sm:$0xe]
      %v3140 = vld [vmem:[%s1989 + $0x30] sm:$0xe]
      %v3141 = vld [vmem:[%s1989 + $0x3c] sm:$0xe]
      %v3142 = vld [vmem:[%s1989 + $0x48] sm:$0xe]
      %v3143 = vld [vmem:[%s1989 + $0x54] sm:$0xe]
      %v3144 = vld [vmem:[%s1989 + $0x60] sm:$0xe]
      %v3145 = vld [vmem:[%s1989 + $0x6c] sm:$0xe]
      %v3146 = vld [vmem:[%s1989 + $0x78] sm:$0xe]
      %v3147 = vld [vmem:[%s1989 + $0x84] sm:$0xe]
      %v3148 = vld [vmem:[%s1989 + $0x90] sm:$0xe]
      %v3149 = vld [vmem:[%s1989 + $0x9c] sm:$0xe]
      %v3150 = vld [vmem:[%s1989 + $0xa8] sm:$0xe]
      %v3151 = vld [vmem:[%s1989 + $0xb4] sm:$0xe]
      %s3152 = sadd.s32 %s368, 5
      %s3153 = smul.u32 %s3152, 16
      %s3154 = smul.addr %s3153, 4
      %s3155 = scalar_lea.vmem %s251, %s3154
      %v3156 = vld [vmem:[%s3155] sm:$0xf]
      %v3157 = vld [vmem:[%s3155 + $0x4] sm:$0xf]
      %v3158 = vld [vmem:[%s3155 + $0x8] sm:$0xf]
      %v3159 = vld [vmem:[%s3155 + $0xc] sm:$0xf]
      %v3160 = vld [vmem:[%s3155 + $0x10] sm:$0xf]
      %v3161 = vld [vmem:[%s3155 + $0x14] sm:$0xf]
      %v3162 = vld [vmem:[%s3155 + $0x18] sm:$0xf]
      %v3163 = vld [vmem:[%s3155 + $0x1c] sm:$0xf]
      %v3164 = vld [vmem:[%s3155 + $0x20] sm:$0xf]
      %v3165 = vld [vmem:[%s3155 + $0x24] sm:$0xf]
      %v3166 = vld [vmem:[%s3155 + $0x28] sm:$0xf]
      %v3167 = vld [vmem:[%s3155 + $0x2c] sm:$0xf]
      %v3168 = vld [vmem:[%s3155 + $0x30] sm:$0xf]
      %v3169 = vld [vmem:[%s3155 + $0x34] sm:$0xf]
      %v3170 = vld [vmem:[%s3155 + $0x38] sm:$0xf]
      %v3171 = vld [vmem:[%s3155 + $0x3c] sm:$0xf]
      %v3220 = vrot.slane %v3136, 5
      %v3221 = vrot.slane %v3220, 4
      %v3222 = vrot.slane %v2380, 5
      %v3223 = vsel %vm1571, %v3221, %v3222
      %v3224 = vrot.slane %v3222, 4
      %v3225 = vrot.slane %v2381, 5
      %v3226 = vsel %vm1571, %v3224, %v3225
      %v3227 = vrot.slane %v3137, 5
      %v3228 = vrot.slane %v3227, 4
      %v3229 = vrot.slane %v2383, 5
      %v3230 = vsel %vm1571, %v3228, %v3229
      %v3231 = vrot.slane %v3229, 4
      %v3232 = vrot.slane %v2384, 5
      %v3233 = vsel %vm1571, %v3231, %v3232
      %v3234 = vrot.slane %v3138, 5
      %v3235 = vrot.slane %v3234, 4
      %v3236 = vrot.slane %v2386, 5
      %v3237 = vsel %vm1571, %v3235, %v3236
      %v3238 = vrot.slane %v3236, 4
      %v3239 = vrot.slane %v2387, 5
      %v3240 = vsel %vm1571, %v3238, %v3239
      %v3241 = vrot.slane %v3139, 5
      %v3242 = vrot.slane %v3241, 4
      %v3243 = vrot.slane %v2389, 5
      %v3244 = vsel %vm1571, %v3242, %v3243
      %v3245 = vrot.slane %v3243, 4
      %v3246 = vrot.slane %v2390, 5
      %v3247 = vsel %vm1571, %v3245, %v3246
      %v3248 = vrot.slane %v3140, 5
      %v3249 = vrot.slane %v3248, 4
      %v3250 = vrot.slane %v2392, 5
      %v3251 = vsel %vm1571, %v3249, %v3250
      %v3252 = vrot.slane %v3250, 4
      %v3253 = vrot.slane %v2393, 5
      %v3254 = vsel %vm1571, %v3252, %v3253
      %v3255 = vrot.slane %v3141, 5
      %v3256 = vrot.slane %v3255, 4
      %v3257 = vrot.slane %v2395, 5
      %v3258 = vsel %vm1571, %v3256, %v3257
      %v3259 = vrot.slane %v3257, 4
      %v3260 = vrot.slane %v2396, 5
      %v3261 = vsel %vm1571, %v3259, %v3260
      %v3262 = vrot.slane %v3142, 5
      %v3263 = vrot.slane %v3262, 4
      %v3264 = vrot.slane %v2398, 5
      %v3265 = vsel %vm1571, %v3263, %v3264
      %v3266 = vrot.slane %v3264, 4
      %v3267 = vrot.slane %v2399, 5
      %v3268 = vsel %vm1571, %v3266, %v3267
      %v3269 = vrot.slane %v3143, 5
      %v3270 = vrot.slane %v3269, 4
      %v3271 = vrot.slane %v2401, 5
      %v3272 = vsel %vm1571, %v3270, %v3271
      %v3273 = vrot.slane %v3271, 4
      %v3274 = vrot.slane %v2402, 5
      %v3275 = vsel %vm1571, %v3273, %v3274
      %v3276 = vrot.slane %v3144, 5
      %v3277 = vrot.slane %v3276, 4
      %v3278 = vrot.slane %v2404, 5
      %v3279 = vsel %vm1571, %v3277, %v3278
      %v3280 = vrot.slane %v3278, 4
      %v3281 = vrot.slane %v2405, 5
      %v3282 = vsel %vm1571, %v3280, %v3281
      %v3283 = vrot.slane %v3145, 5
      %v3284 = vrot.slane %v3283, 4
      %v3285 = vrot.slane %v2407, 5
      %v3286 = vsel %vm1571, %v3284, %v3285
      %v3287 = vrot.slane %v3285, 4
      %v3288 = vrot.slane %v2408, 5
      %v3289 = vsel %vm1571, %v3287, %v3288
      %v3290 = vrot.slane %v3146, 5
      %v3291 = vrot.slane %v3290, 4
      %v3292 = vrot.slane %v2410, 5
      %v3293 = vsel %vm1571, %v3291, %v3292
      %v3294 = vrot.slane %v3292, 4
      %v3295 = vrot.slane %v2411, 5
      %v3296 = vsel %vm1571, %v3294, %v3295
      %v3297 = vrot.slane %v3147, 5
      %v3298 = vrot.slane %v3297, 4
      %v3299 = vrot.slane %v2413, 5
      %v3300 = vsel %vm1571, %v3298, %v3299
      %v3301 = vrot.slane %v3299, 4
      %v3302 = vrot.slane %v2414, 5
      %v3303 = vsel %vm1571, %v3301, %v3302
      %v3304 = vrot.slane %v3148, 5
      %v3305 = vrot.slane %v3304, 4
      %v3306 = vrot.slane %v2416, 5
      %v3307 = vsel %vm1571, %v3305, %v3306
      %v3308 = vrot.slane %v3306, 4
      %v3309 = vrot.slane %v2417, 5
      %v3310 = vsel %vm1571, %v3308, %v3309
      %v3311 = vrot.slane %v3149, 5
      %v3312 = vrot.slane %v3311, 4
      %v3313 = vrot.slane %v2419, 5
      %v3314 = vsel %vm1571, %v3312, %v3313
      %v3315 = vrot.slane %v3313, 4
      %v3316 = vrot.slane %v2420, 5
      %v3317 = vsel %vm1571, %v3315, %v3316
      %v3318 = vrot.slane %v3150, 5
      %v3319 = vrot.slane %v3318, 4
      %v3320 = vrot.slane %v2422, 5
      %v3321 = vsel %vm1571, %v3319, %v3320
      %v3322 = vrot.slane %v3320, 4
      %v3323 = vrot.slane %v2423, 5
      %v3324 = vsel %vm1571, %v3322, %v3323
      %v3325 = vrot.slane %v3151, 5
      %v3326 = vrot.slane %v3325, 4
      %v3327 = vrot.slane %v2425, 5
      %v3328 = vsel %vm1571, %v3326, %v3327
      %v3329 = vrot.slane %v3327, 4
      %v3330 = vrot.slane %v2426, 5
      %v3331 = vsel %vm1571, %v3329, %v3330
      %v3332 = vunpack.c.l.b16 %v3223
      %v3333 = vunpack.c.l.b16 %v3226
      %v3334 = vunpack.c.l.b16 %v3230
      %v3335 = vunpack.c.l.b16 %v3233
      %v3336 = vunpack.c.l.b16 %v3237
      %v3337 = vunpack.c.l.b16 %v3240
      %v3338 = vunpack.c.l.b16 %v3244
      %v3339 = vunpack.c.l.b16 %v3247
      %v3340 = vunpack.c.l.b16 %v3251
      %v3341 = vunpack.c.l.b16 %v3254
      %v3342 = vunpack.c.l.b16 %v3258
      %v3343 = vunpack.c.l.b16 %v3261
      %v3344 = vunpack.c.l.b16 %v3265
      %v3345 = vunpack.c.l.b16 %v3268
      %v3346 = vunpack.c.l.b16 %v3272
      %v3347 = vunpack.c.l.b16 %v3275
      %v3348 = vunpack.c.l.b16 %v3279
      %v3349 = vunpack.c.l.b16 %v3282
      %v3350 = vunpack.c.l.b16 %v3286
      %v3351 = vunpack.c.l.b16 %v3289
      %v3352 = vunpack.c.l.b16 %v3293
      %v3353 = vunpack.c.l.b16 %v3296
      %v3354 = vunpack.c.l.b16 %v3300
      %v3355 = vunpack.c.l.b16 %v3303
      %v3356 = vunpack.c.l.b16 %v3307
      %v3357 = vunpack.c.l.b16 %v3310
      %v3358 = vunpack.c.l.b16 %v3314
      %v3359 = vunpack.c.l.b16 %v3317
      %v3360 = vunpack.c.l.b16 %v3321
      %v3361 = vunpack.c.l.b16 %v3324
      %v3362 = vunpack.c.l.b16 %v3328
      %v3363 = vunpack.c.l.b16 %v3331
      %v3364 = vpack.c.b16 %v3333, %v3332
      %v3365 = vpack.c.b16 %v3335, %v3334
      %v3366 = vpack.c.b16 %v3337, %v3336
      %v3367 = vpack.c.b16 %v3339, %v3338
      %v3368 = vpack.c.b16 %v3341, %v3340
      %v3369 = vpack.c.b16 %v3343, %v3342
      %v3370 = vpack.c.b16 %v3345, %v3344
      %v3371 = vpack.c.b16 %v3347, %v3346
      %v3372 = vpack.c.b16 %v3349, %v3348
      %v3373 = vpack.c.b16 %v3351, %v3350
      %v3374 = vpack.c.b16 %v3353, %v3352
      %v3375 = vpack.c.b16 %v3355, %v3354
      %v3376 = vpack.c.b16 %v3357, %v3356
      %v3377 = vpack.c.b16 %v3359, %v3358
      %v3378 = vpack.c.b16 %v3361, %v3360
      %v3379 = vpack.c.b16 %v3363, %v3362
      %v3412 = vunpack.c.l.b16 %v3156
      %v3413 = vunpack.c.l.b16 %v3157
      %v3414 = vunpack.c.l.b16 %v3158
      %v3415 = vunpack.c.l.b16 %v3159
      %v3416 = vunpack.c.l.b16 %v3160
      %v3417 = vunpack.c.l.b16 %v3161
      %v3418 = vunpack.c.l.b16 %v3162
      %v3419 = vunpack.c.l.b16 %v3163
      %v3420 = vunpack.c.l.b16 %v3164
      %v3421 = vunpack.c.l.b16 %v3165
      %v3422 = vunpack.c.l.b16 %v3166
      %v3423 = vunpack.c.l.b16 %v3167
      %v3424 = vunpack.c.l.b16 %v3168
      %v3425 = vunpack.c.l.b16 %v3169
      %v3426 = vunpack.c.l.b16 %v3170
      %v3427 = vunpack.c.l.b16 %v3171
      %v3428 = vpack.c.b16 %v3413, %v3412
      %v3429 = vpack.c.b16 %v3415, %v3414
      %v3430 = vpack.c.b16 %v3417, %v3416
      %v3431 = vpack.c.b16 %v3419, %v3418
      %v3432 = vpack.c.b16 %v3421, %v3420
      %v3433 = vpack.c.b16 %v3423, %v3422
      %v3434 = vpack.c.b16 %v3425, %v3424
      %v3435 = vpack.c.b16 %v3427, %v3426
      %3444 = vmatprep.subr.bf16.mxu0 0
      %3445 = vmatpush1.bf16.msra.mxu0 %v3435
      %3446 = vmatprep.subr.bf16.mxu0 0
      %3447 = vmatpush1.bf16.msra.mxu0 %v3434
      %3448 = vmatprep.subr.bf16.mxu0 0
      %3449 = vmatpush1.bf16.msra.mxu0 %v3433
      %3450 = vmatprep.subr.bf16.mxu0 0
      %3451 = vmatpush1.bf16.msra.mxu0 %v3432
      %3452 = vmatprep.subr.bf16.mxu0 0
      %3453 = vmatpush1.bf16.msra.mxu0 %v3431
      %3454 = vmatprep.subr.bf16.mxu0 0
      %3455 = vmatpush1.bf16.msra.mxu0 %v3430
      %3456 = vmatprep.subr.bf16.mxu0 0
      %3457 = vmatpush1.bf16.msra.mxu0 %v3429
      %3458 = vmatprep.subr.bf16.mxu0 0
      %3459 = vmatpush1.bf16.msra.mxu0 %v3428
      %3460 = vmatprep.subr.bf16.mxu0 0
      %3461 = vmatpush2.bf16.msra.mxu0 0
      %3462 = vmatprep.subr.bf16.mxu0 0
      %3463 = vmatpush2.bf16.msra.mxu0 0
      %3464 = vmatprep.subr.bf16.mxu0 0
      %3465 = vmatpush2.bf16.msra.mxu0 0
      %3466 = vmatprep.subr.bf16.mxu0 0
      %3467 = vmatpush2.bf16.msra.mxu0 0
      %3468 = vmatprep.subr.bf16.mxu0 0
      %3469 = vmatpush2.bf16.msra.mxu0 0
      %3470 = vmatprep.subr.bf16.mxu0 0
      %3471 = vmatpush2.bf16.msra.mxu0 0
      %3472 = vmatprep.subr.bf16.mxu0 0
      %3473 = vmatpush2.bf16.msra.mxu0 0
      %3474 = vmatprep.subr.bf16.mxu0 0
      %3475 = vmatpush2.bf16.msra.mxu0 0
      %3476 = vmatprep.mubr.bf16.mxu0 0
      %3477 = vmatmul.mubr.bf16.gmra.mxu0 %v3364
      %v3478 = vpop.f32.mrf.mxu0
      %v3479 = vadd.f32 0.0, %v3478
      %v3480 = vpop.f32.mrf.mxu0
      %v3481 = vpop.f32.mrf.mxu0
      %v3482 = vadd.f32 0.0, %v3481
      %v3483 = vpop.f32.mrf.mxu0
      %3484 = vmatprep.mubr.bf16.mxu0 0
      %3485 = vmatmul.mubr.bf16.gmra.mxu0 %v3365
      %v3486 = vpop.f32.mrf.mxu0
      %v3487 = vadd.f32 0.0, %v3486
      %v3488 = vpop.f32.mrf.mxu0
      %v3489 = vpop.f32.mrf.mxu0
      %v3490 = vadd.f32 0.0, %v3489
      %v3491 = vpop.f32.mrf.mxu0
      %3492 = vmatprep.mubr.bf16.mxu0 0
      %3493 = vmatmul.mubr.bf16.gmra.mxu0 %v3366
      %v3494 = vpop.f32.mrf.mxu0
      %v3495 = vadd.f32 0.0, %v3494
      %v3496 = vpop.f32.mrf.mxu0
      %v3497 = vpop.f32.mrf.mxu0
      %v3498 = vadd.f32 0.0, %v3497
      %v3499 = vpop.f32.mrf.mxu0
      %3500 = vmatprep.mubr.bf16.mxu0 0
      %3501 = vmatmul.mubr.bf16.gmra.mxu0 %v3367
      %v3502 = vpop.f32.mrf.mxu0
      %v3503 = vadd.f32 0.0, %v3502
      %v3504 = vpop.f32.mrf.mxu0
      %v3505 = vpop.f32.mrf.mxu0
      %v3506 = vadd.f32 0.0, %v3505
      %v3507 = vpop.f32.mrf.mxu0
      %3508 = vmatprep.mubr.bf16.mxu0 0
      %3509 = vmatmul.mubr.bf16.gmra.mxu0 %v3368
      %v3510 = vpop.f32.mrf.mxu0
      %v3511 = vadd.f32 0.0, %v3510
      %v3512 = vpop.f32.mrf.mxu0
      %v3513 = vpop.f32.mrf.mxu0
      %v3514 = vadd.f32 0.0, %v3513
      %v3515 = vpop.f32.mrf.mxu0
      %3516 = vmatprep.mubr.bf16.mxu0 0
      %3517 = vmatmul.mubr.bf16.gmra.mxu0 %v3369
      %v3518 = vpop.f32.mrf.mxu0
      %v3519 = vadd.f32 0.0, %v3518
      %v3520 = vpop.f32.mrf.mxu0
      %v3521 = vpop.f32.mrf.mxu0
      %v3522 = vadd.f32 0.0, %v3521
      %v3523 = vpop.f32.mrf.mxu0
      %3524 = vmatprep.mubr.bf16.mxu0 0
      %3525 = vmatmul.mubr.bf16.gmra.mxu0 %v3370
      %v3526 = vpop.f32.mrf.mxu0
      %v3527 = vadd.f32 0.0, %v3526
      %v3528 = vpop.f32.mrf.mxu0
      %v3529 = vpop.f32.mrf.mxu0
      %v3530 = vadd.f32 0.0, %v3529
      %v3531 = vpop.f32.mrf.mxu0
      %3532 = vmatprep.mubr.bf16.mxu0 0
      %3533 = vmatmul.mubr.bf16.gmra.mxu0 %v3371
      %v3534 = vpop.f32.mrf.mxu0
      %v3535 = vadd.f32 0.0, %v3534
      %v3536 = vpop.f32.mrf.mxu0
      %v3537 = vpop.f32.mrf.mxu0
      %v3538 = vadd.f32 0.0, %v3537
      %v3539 = vpop.f32.mrf.mxu0
      %3540 = vmatprep.mubr.bf16.mxu0 0
      %3541 = vmatmul.mubr.bf16.gmra.mxu0 %v3372
      %v3542 = vpop.f32.mrf.mxu0
      %v3543 = vadd.f32 0.0, %v3542
      %v3544 = vpop.f32.mrf.mxu0
      %v3545 = vpop.f32.mrf.mxu0
      %v3546 = vadd.f32 0.0, %v3545
      %v3547 = vpop.f32.mrf.mxu0
      %3548 = vmatprep.mubr.bf16.mxu0 0
      %3549 = vmatmul.mubr.bf16.gmra.mxu0 %v3373
      %v3550 = vpop.f32.mrf.mxu0
      %v3551 = vadd.f32 0.0, %v3550
      %v3552 = vpop.f32.mrf.mxu0
      %v3553 = vpop.f32.mrf.mxu0
      %v3554 = vadd.f32 0.0, %v3553
      %v3555 = vpop.f32.mrf.mxu0
      %3556 = vmatprep.mubr.bf16.mxu0 0
      %3557 = vmatmul.mubr.bf16.gmra.mxu0 %v3374
      %v3558 = vpop.f32.mrf.mxu0
      %v3559 = vadd.f32 0.0, %v3558
      %v3560 = vpop.f32.mrf.mxu0
      %v3561 = vpop.f32.mrf.mxu0
      %v3562 = vadd.f32 0.0, %v3561
      %v3563 = vpop.f32.mrf.mxu0
      %3564 = vmatprep.mubr.bf16.mxu0 0
      %3565 = vmatmul.mubr.bf16.gmra.mxu0 %v3375
      %v3566 = vpop.f32.mrf.mxu0
      %v3567 = vadd.f32 0.0, %v3566
      %v3568 = vpop.f32.mrf.mxu0
      %v3569 = vpop.f32.mrf.mxu0
      %v3570 = vadd.f32 0.0, %v3569
      %v3571 = vpop.f32.mrf.mxu0
      %3572 = vmatprep.mubr.bf16.mxu0 0
      %3573 = vmatmul.mubr.bf16.gmra.mxu0 %v3376
      %v3574 = vpop.f32.mrf.mxu0
      %v3575 = vadd.f32 0.0, %v3574
      %v3576 = vpop.f32.mrf.mxu0
      %v3577 = vpop.f32.mrf.mxu0
      %v3578 = vadd.f32 0.0, %v3577
      %v3579 = vpop.f32.mrf.mxu0
      %3580 = vmatprep.mubr.bf16.mxu0 0
      %3581 = vmatmul.mubr.bf16.gmra.mxu0 %v3377
      %v3582 = vpop.f32.mrf.mxu0
      %v3583 = vadd.f32 0.0, %v3582
      %v3584 = vpop.f32.mrf.mxu0
      %v3585 = vpop.f32.mrf.mxu0
      %v3586 = vadd.f32 0.0, %v3585
      %v3587 = vpop.f32.mrf.mxu0
      %3588 = vmatprep.mubr.bf16.mxu0 0
      %3589 = vmatmul.mubr.bf16.gmra.mxu0 %v3378
      %v3590 = vpop.f32.mrf.mxu0
      %v3591 = vadd.f32 0.0, %v3590
      %v3592 = vpop.f32.mrf.mxu0
      %v3593 = vpop.f32.mrf.mxu0
      %v3594 = vadd.f32 0.0, %v3593
      %v3595 = vpop.f32.mrf.mxu0
      %3596 = vmatprep.mubr.bf16.mxu0 0
      %3597 = vmatmul.mubr.bf16.gmra.mxu0 %v3379
      %v3598 = vpop.f32.mrf.mxu0
      %v3599 = vadd.f32 0.0, %v3598
      %v3600 = vpop.f32.mrf.mxu0
      %v3601 = vpop.f32.mrf.mxu0
      %v3602 = vadd.f32 0.0, %v3601
      %v3603 = vpop.f32.mrf.mxu0
      %3604 = vdwg.mxu0
      %v3605 = vadd.f32 %v3104, %v3479
      %v3606 = vadd.f32 %v3105, %v3482
      %v3607 = vadd.f32 %v3106, %v3487
      %v3608 = vadd.f32 %v3107, %v3490
      %v3609 = vadd.f32 %v3108, %v3495
      %v3610 = vadd.f32 %v3109, %v3498
      %v3611 = vadd.f32 %v3110, %v3503
      %v3612 = vadd.f32 %v3111, %v3506
      %v3613 = vadd.f32 %v3112, %v3511
      %v3614 = vadd.f32 %v3113, %v3514
      %v3615 = vadd.f32 %v3114, %v3519
      %v3616 = vadd.f32 %v3115, %v3522
      %v3617 = vadd.f32 %v3116, %v3527
      %v3618 = vadd.f32 %v3117, %v3530
      %v3619 = vadd.f32 %v3118, %v3535
      %v3620 = vadd.f32 %v3119, %v3538
      %v3621 = vadd.f32 %v3120, %v3543
      %v3622 = vadd.f32 %v3121, %v3546
      %v3623 = vadd.f32 %v3122, %v3551
      %v3624 = vadd.f32 %v3123, %v3554
      %v3625 = vadd.f32 %v3124, %v3559
      %v3626 = vadd.f32 %v3125, %v3562
      %v3627 = vadd.f32 %v3126, %v3567
      %v3628 = vadd.f32 %v3127, %v3570
      %v3629 = vadd.f32 %v3128, %v3575
      %v3630 = vadd.f32 %v3129, %v3578
      %v3631 = vadd.f32 %v3130, %v3583
      %v3632 = vadd.f32 %v3131, %v3586
      %v3633 = vadd.f32 %v3132, %v3591
      %v3634 = vadd.f32 %v3133, %v3594
      %v3635 = vadd.f32 %v3134, %v3599
      %v3636 = vadd.f32 %v3135, %v3602
      %s3637 = scalar_lea.vmem %s246, 24
      %v3638 = vld [vmem:[%s3637] sm:$0xf]
      %v3639 = vld [vmem:[%s3637 + $0x4] sm:$0xf]
      %v3640 = vld [vmem:[%s3637 + $0xc] sm:$0xf]
      %v3641 = vld [vmem:[%s3637 + $0x10] sm:$0xf]
      %v3642 = vld [vmem:[%s3637 + $0x18] sm:$0xf]
      %v3643 = vld [vmem:[%s3637 + $0x1c] sm:$0xf]
      %v3644 = vld [vmem:[%s3637 + $0x24] sm:$0xf]
      %v3645 = vld [vmem:[%s3637 + $0x28] sm:$0xf]
      %v3646 = vld [vmem:[%s3637 + $0x30] sm:$0xf]
      %v3647 = vld [vmem:[%s3637 + $0x34] sm:$0xf]
      %v3648 = vld [vmem:[%s3637 + $0x3c] sm:$0xf]
      %v3649 = vld [vmem:[%s3637 + $0x40] sm:$0xf]
      %v3650 = vld [vmem:[%s3637 + $0x48] sm:$0xf]
      %v3651 = vld [vmem:[%s3637 + $0x4c] sm:$0xf]
      %v3652 = vld [vmem:[%s3637 + $0x54] sm:$0xf]
      %v3653 = vld [vmem:[%s3637 + $0x58] sm:$0xf]
      %v3654 = vld [vmem:[%s3637 + $0x60] sm:$0xf]
      %v3655 = vld [vmem:[%s3637 + $0x64] sm:$0xf]
      %v3656 = vld [vmem:[%s3637 + $0x6c] sm:$0xf]
      %v3657 = vld [vmem:[%s3637 + $0x70] sm:$0xf]
      %v3658 = vld [vmem:[%s3637 + $0x78] sm:$0xf]
      %v3659 = vld [vmem:[%s3637 + $0x7c] sm:$0xf]
      %v3660 = vld [vmem:[%s3637 + $0x84] sm:$0xf]
      %v3661 = vld [vmem:[%s3637 + $0x88] sm:$0xf]
      %v3662 = vld [vmem:[%s3637 + $0x90] sm:$0xf]
      %v3663 = vld [vmem:[%s3637 + $0x94] sm:$0xf]
      %v3664 = vld [vmem:[%s3637 + $0x9c] sm:$0xf]
      %v3665 = vld [vmem:[%s3637 + $0xa0] sm:$0xf]
      %v3666 = vld [vmem:[%s3637 + $0xa8] sm:$0xf]
      %v3667 = vld [vmem:[%s3637 + $0xac] sm:$0xf]
      %v3668 = vld [vmem:[%s3637 + $0xb4] sm:$0xf]
      %v3669 = vld [vmem:[%s3637 + $0xb8] sm:$0xf]
      %s3670 = sadd.s32 %s368, 6
      %s3671 = smul.u32 %s3670, 16
      %s3672 = smul.addr %s3671, 4
      %s3673 = scalar_lea.vmem %s251, %s3672
      %v3674 = vld [vmem:[%s3673] sm:$0xf]
      %v3675 = vld [vmem:[%s3673 + $0x4] sm:$0xf]
      %v3676 = vld [vmem:[%s3673 + $0x8] sm:$0xf]
      %v3677 = vld [vmem:[%s3673 + $0xc] sm:$0xf]
      %v3678 = vld [vmem:[%s3673 + $0x10] sm:$0xf]
      %v3679 = vld [vmem:[%s3673 + $0x14] sm:$0xf]
      %v3680 = vld [vmem:[%s3673 + $0x18] sm:$0xf]
      %v3681 = vld [vmem:[%s3673 + $0x1c] sm:$0xf]
      %v3682 = vld [vmem:[%s3673 + $0x20] sm:$0xf]
      %v3683 = vld [vmem:[%s3673 + $0x24] sm:$0xf]
      %v3684 = vld [vmem:[%s3673 + $0x28] sm:$0xf]
      %v3685 = vld [vmem:[%s3673 + $0x2c] sm:$0xf]
      %v3686 = vld [vmem:[%s3673 + $0x30] sm:$0xf]
      %v3687 = vld [vmem:[%s3673 + $0x34] sm:$0xf]
      %v3688 = vld [vmem:[%s3673 + $0x38] sm:$0xf]
      %v3689 = vld [vmem:[%s3673 + $0x3c] sm:$0xf]
      %v3722 = vunpack.c.l.b16 %v3638
      %v3723 = vunpack.c.l.b16 %v3639
      %v3724 = vunpack.c.l.b16 %v3640
      %v3725 = vunpack.c.l.b16 %v3641
      %v3726 = vunpack.c.l.b16 %v3642
      %v3727 = vunpack.c.l.b16 %v3643
      %v3728 = vunpack.c.l.b16 %v3644
      %v3729 = vunpack.c.l.b16 %v3645
      %v3730 = vunpack.c.l.b16 %v3646
      %v3731 = vunpack.c.l.b16 %v3647
      %v3732 = vunpack.c.l.b16 %v3648
      %v3733 = vunpack.c.l.b16 %v3649
      %v3734 = vunpack.c.l.b16 %v3650
      %v3735 = vunpack.c.l.b16 %v3651
      %v3736 = vunpack.c.l.b16 %v3652
      %v3737 = vunpack.c.l.b16 %v3653
      %v3738 = vunpack.c.l.b16 %v3654
      %v3739 = vunpack.c.l.b16 %v3655
      %v3740 = vunpack.c.l.b16 %v3656
      %v3741 = vunpack.c.l.b16 %v3657
      %v3742 = vunpack.c.l.b16 %v3658
      %v3743 = vunpack.c.l.b16 %v3659
      %v3744 = vunpack.c.l.b16 %v3660
      %v3745 = vunpack.c.l.b16 %v3661
      %v3746 = vunpack.c.l.b16 %v3662
      %v3747 = vunpack.c.l.b16 %v3663
      %v3748 = vunpack.c.l.b16 %v3664
      %v3749 = vunpack.c.l.b16 %v3665
      %v3750 = vunpack.c.l.b16 %v3666
      %v3751 = vunpack.c.l.b16 %v3667
      %v3752 = vunpack.c.l.b16 %v3668
      %v3753 = vunpack.c.l.b16 %v3669
      %v3754 = vpack.c.b16 %v3723, %v3722
      %v3755 = vpack.c.b16 %v3725, %v3724
      %v3756 = vpack.c.b16 %v3727, %v3726
      %v3757 = vpack.c.b16 %v3729, %v3728
      %v3758 = vpack.c.b16 %v3731, %v3730
      %v3759 = vpack.c.b16 %v3733, %v3732
      %v3760 = vpack.c.b16 %v3735, %v3734
      %v3761 = vpack.c.b16 %v3737, %v3736
      %v3762 = vpack.c.b16 %v3739, %v3738
      %v3763 = vpack.c.b16 %v3741, %v3740
      %v3764 = vpack.c.b16 %v3743, %v3742
      %v3765 = vpack.c.b16 %v3745, %v3744
      %v3766 = vpack.c.b16 %v3747, %v3746
      %v3767 = vpack.c.b16 %v3749, %v3748
      %v3768 = vpack.c.b16 %v3751, %v3750
      %v3769 = vpack.c.b16 %v3753, %v3752
      %v3802 = vunpack.c.l.b16 %v3674
      %v3803 = vunpack.c.l.b16 %v3675
      %v3804 = vunpack.c.l.b16 %v3676
      %v3805 = vunpack.c.l.b16 %v3677
      %v3806 = vunpack.c.l.b16 %v3678
      %v3807 = vunpack.c.l.b16 %v3679
      %v3808 = vunpack.c.l.b16 %v3680
      %v3809 = vunpack.c.l.b16 %v3681
      %v3810 = vunpack.c.l.b16 %v3682
      %v3811 = vunpack.c.l.b16 %v3683
      %v3812 = vunpack.c.l.b16 %v3684
      %v3813 = vunpack.c.l.b16 %v3685
      %v3814 = vunpack.c.l.b16 %v3686
      %v3815 = vunpack.c.l.b16 %v3687
      %v3816 = vunpack.c.l.b16 %v3688
      %v3817 = vunpack.c.l.b16 %v3689
      %v3818 = vpack.c.b16 %v3803, %v3802
      %v3819 = vpack.c.b16 %v3805, %v3804
      %v3820 = vpack.c.b16 %v3807, %v3806
      %v3821 = vpack.c.b16 %v3809, %v3808
      %v3822 = vpack.c.b16 %v3811, %v3810
      %v3823 = vpack.c.b16 %v3813, %v3812
      %v3824 = vpack.c.b16 %v3815, %v3814
      %v3825 = vpack.c.b16 %v3817, %v3816
      %3834 = vmatprep.subr.bf16.mxu0 0
      %3835 = vmatpush1.bf16.msra.mxu0 %v3825
      %3836 = vmatprep.subr.bf16.mxu0 0
      %3837 = vmatpush1.bf16.msra.mxu0 %v3824
      %3838 = vmatprep.subr.bf16.mxu0 0
      %3839 = vmatpush1.bf16.msra.mxu0 %v3823
      %3840 = vmatprep.subr.bf16.mxu0 0
      %3841 = vmatpush1.bf16.msra.mxu0 %v3822
      %3842 = vmatprep.subr.bf16.mxu0 0
      %3843 = vmatpush1.bf16.msra.mxu0 %v3821
      %3844 = vmatprep.subr.bf16.mxu0 0
      %3845 = vmatpush1.bf16.msra.mxu0 %v3820
      %3846 = vmatprep.subr.bf16.mxu0 0
      %3847 = vmatpush1.bf16.msra.mxu0 %v3819
      %3848 = vmatprep.subr.bf16.mxu0 0
      %3849 = vmatpush1.bf16.msra.mxu0 %v3818
      %3850 = vmatprep.subr.bf16.mxu0 0
      %3851 = vmatpush2.bf16.msra.mxu0 0
      %3852 = vmatprep.subr.bf16.mxu0 0
      %3853 = vmatpush2.bf16.msra.mxu0 0
      %3854 = vmatprep.subr.bf16.mxu0 0
      %3855 = vmatpush2.bf16.msra.mxu0 0
      %3856 = vmatprep.subr.bf16.mxu0 0
      %3857 = vmatpush2.bf16.msra.mxu0 0
      %3858 = vmatprep.subr.bf16.mxu0 0
      %3859 = vmatpush2.bf16.msra.mxu0 0
      %3860 = vmatprep.subr.bf16.mxu0 0
      %3861 = vmatpush2.bf16.msra.mxu0 0
      %3862 = vmatprep.subr.bf16.mxu0 0
      %3863 = vmatpush2.bf16.msra.mxu0 0
      %3864 = vmatprep.subr.bf16.mxu0 0
      %3865 = vmatpush2.bf16.msra.mxu0 0
      %3866 = vmatprep.mubr.bf16.mxu0 0
      %3867 = vmatmul.mubr.bf16.gmra.mxu0 %v3754
      %v3868 = vpop.f32.mrf.mxu0
      %v3869 = vadd.f32 0.0, %v3868
      %v3870 = vpop.f32.mrf.mxu0
      %v3871 = vpop.f32.mrf.mxu0
      %v3872 = vadd.f32 0.0, %v3871
      %v3873 = vpop.f32.mrf.mxu0
      %3874 = vmatprep.mubr.bf16.mxu0 0
      %3875 = vmatmul.mubr.bf16.gmra.mxu0 %v3755
      %v3876 = vpop.f32.mrf.mxu0
      %v3877 = vadd.f32 0.0, %v3876
      %v3878 = vpop.f32.mrf.mxu0
      %v3879 = vpop.f32.mrf.mxu0
      %v3880 = vadd.f32 0.0, %v3879
      %v3881 = vpop.f32.mrf.mxu0
      %3882 = vmatprep.mubr.bf16.mxu0 0
      %3883 = vmatmul.mubr.bf16.gmra.mxu0 %v3756
      %v3884 = vpop.f32.mrf.mxu0
      %v3885 = vadd.f32 0.0, %v3884
      %v3886 = vpop.f32.mrf.mxu0
      %v3887 = vpop.f32.mrf.mxu0
      %v3888 = vadd.f32 0.0, %v3887
      %v3889 = vpop.f32.mrf.mxu0
      %3890 = vmatprep.mubr.bf16.mxu0 0
      %3891 = vmatmul.mubr.bf16.gmra.mxu0 %v3757
      %v3892 = vpop.f32.mrf.mxu0
      %v3893 = vadd.f32 0.0, %v3892
      %v3894 = vpop.f32.mrf.mxu0
      %v3895 = vpop.f32.mrf.mxu0
      %v3896 = vadd.f32 0.0, %v3895
      %v3897 = vpop.f32.mrf.mxu0
      %3898 = vmatprep.mubr.bf16.mxu0 0
      %3899 = vmatmul.mubr.bf16.gmra.mxu0 %v3758
      %v3900 = vpop.f32.mrf.mxu0
      %v3901 = vadd.f32 0.0, %v3900
      %v3902 = vpop.f32.mrf.mxu0
      %v3903 = vpop.f32.mrf.mxu0
      %v3904 = vadd.f32 0.0, %v3903
      %v3905 = vpop.f32.mrf.mxu0
      %3906 = vmatprep.mubr.bf16.mxu0 0
      %3907 = vmatmul.mubr.bf16.gmra.mxu0 %v3759
      %v3908 = vpop.f32.mrf.mxu0
      %v3909 = vadd.f32 0.0, %v3908
      %v3910 = vpop.f32.mrf.mxu0
      %v3911 = vpop.f32.mrf.mxu0
      %v3912 = vadd.f32 0.0, %v3911
      %v3913 = vpop.f32.mrf.mxu0
      %3914 = vmatprep.mubr.bf16.mxu0 0
      %3915 = vmatmul.mubr.bf16.gmra.mxu0 %v3760
      %v3916 = vpop.f32.mrf.mxu0
      %v3917 = vadd.f32 0.0, %v3916
      %v3918 = vpop.f32.mrf.mxu0
      %v3919 = vpop.f32.mrf.mxu0
      %v3920 = vadd.f32 0.0, %v3919
      %v3921 = vpop.f32.mrf.mxu0
      %3922 = vmatprep.mubr.bf16.mxu0 0
      %3923 = vmatmul.mubr.bf16.gmra.mxu0 %v3761
      %v3924 = vpop.f32.mrf.mxu0
      %v3925 = vadd.f32 0.0, %v3924
      %v3926 = vpop.f32.mrf.mxu0
      %v3927 = vpop.f32.mrf.mxu0
      %v3928 = vadd.f32 0.0, %v3927
      %v3929 = vpop.f32.mrf.mxu0
      %3930 = vmatprep.mubr.bf16.mxu0 0
      %3931 = vmatmul.mubr.bf16.gmra.mxu0 %v3762
      %v3932 = vpop.f32.mrf.mxu0
      %v3933 = vadd.f32 0.0, %v3932
      %v3934 = vpop.f32.mrf.mxu0
      %v3935 = vpop.f32.mrf.mxu0
      %v3936 = vadd.f32 0.0, %v3935
      %v3937 = vpop.f32.mrf.mxu0
      %3938 = vmatprep.mubr.bf16.mxu0 0
      %3939 = vmatmul.mubr.bf16.gmra.mxu0 %v3763
      %v3940 = vpop.f32.mrf.mxu0
      %v3941 = vadd.f32 0.0, %v3940
      %v3942 = vpop.f32.mrf.mxu0
      %v3943 = vpop.f32.mrf.mxu0
      %v3944 = vadd.f32 0.0, %v3943
      %v3945 = vpop.f32.mrf.mxu0
      %3946 = vmatprep.mubr.bf16.mxu0 0
      %3947 = vmatmul.mubr.bf16.gmra.mxu0 %v3764
      %v3948 = vpop.f32.mrf.mxu0
      %v3949 = vadd.f32 0.0, %v3948
      %v3950 = vpop.f32.mrf.mxu0
      %v3951 = vpop.f32.mrf.mxu0
      %v3952 = vadd.f32 0.0, %v3951
      %v3953 = vpop.f32.mrf.mxu0
      %3954 = vmatprep.mubr.bf16.mxu0 0
      %3955 = vmatmul.mubr.bf16.gmra.mxu0 %v3765
      %v3956 = vpop.f32.mrf.mxu0
      %v3957 = vadd.f32 0.0, %v3956
      %v3958 = vpop.f32.mrf.mxu0
      %v3959 = vpop.f32.mrf.mxu0
      %v3960 = vadd.f32 0.0, %v3959
      %v3961 = vpop.f32.mrf.mxu0
      %3962 = vmatprep.mubr.bf16.mxu0 0
      %3963 = vmatmul.mubr.bf16.gmra.mxu0 %v3766
      %v3964 = vpop.f32.mrf.mxu0
      %v3965 = vadd.f32 0.0, %v3964
      %v3966 = vpop.f32.mrf.mxu0
      %v3967 = vpop.f32.mrf.mxu0
      %v3968 = vadd.f32 0.0, %v3967
      %v3969 = vpop.f32.mrf.mxu0
      %3970 = vmatprep.mubr.bf16.mxu0 0
      %3971 = vmatmul.mubr.bf16.gmra.mxu0 %v3767
      %v3972 = vpop.f32.mrf.mxu0
      %v3973 = vadd.f32 0.0, %v3972
      %v3974 = vpop.f32.mrf.mxu0
      %v3975 = vpop.f32.mrf.mxu0
      %v3976 = vadd.f32 0.0, %v3975
      %v3977 = vpop.f32.mrf.mxu0
      %3978 = vmatprep.mubr.bf16.mxu0 0
      %3979 = vmatmul.mubr.bf16.gmra.mxu0 %v3768
      %v3980 = vpop.f32.mrf.mxu0
      %v3981 = vadd.f32 0.0, %v3980
      %v3982 = vpop.f32.mrf.mxu0
      %v3983 = vpop.f32.mrf.mxu0
      %v3984 = vadd.f32 0.0, %v3983
      %v3985 = vpop.f32.mrf.mxu0
      %3986 = vmatprep.mubr.bf16.mxu0 0
      %3987 = vmatmul.mubr.bf16.gmra.mxu0 %v3769
      %v3988 = vpop.f32.mrf.mxu0
      %v3989 = vadd.f32 0.0, %v3988
      %v3990 = vpop.f32.mrf.mxu0
      %v3991 = vpop.f32.mrf.mxu0
      %v3992 = vadd.f32 0.0, %v3991
      %v3993 = vpop.f32.mrf.mxu0
      %3994 = vdwg.mxu0
      %v3995 = vadd.f32 %v3605, %v3869
      %v3996 = vadd.f32 %v3606, %v3872
      %v3997 = vadd.f32 %v3607, %v3877
      %v3998 = vadd.f32 %v3608, %v3880
      %v3999 = vadd.f32 %v3609, %v3885
      %v4000 = vadd.f32 %v3610, %v3888
      %v4001 = vadd.f32 %v3611, %v3893
      %v4002 = vadd.f32 %v3612, %v3896
      %v4003 = vadd.f32 %v3613, %v3901
      %v4004 = vadd.f32 %v3614, %v3904
      %v4005 = vadd.f32 %v3615, %v3909
      %v4006 = vadd.f32 %v3616, %v3912
      %v4007 = vadd.f32 %v3617, %v3917
      %v4008 = vadd.f32 %v3618, %v3920
      %v4009 = vadd.f32 %v3619, %v3925
      %v4010 = vadd.f32 %v3620, %v3928
      %v4011 = vadd.f32 %v3621, %v3933
      %v4012 = vadd.f32 %v3622, %v3936
      %v4013 = vadd.f32 %v3623, %v3941
      %v4014 = vadd.f32 %v3624, %v3944
      %v4015 = vadd.f32 %v3625, %v3949
      %v4016 = vadd.f32 %v3626, %v3952
      %v4017 = vadd.f32 %v3627, %v3957
      %v4018 = vadd.f32 %v3628, %v3960
      %v4019 = vadd.f32 %v3629, %v3965
      %v4020 = vadd.f32 %v3630, %v3968
      %v4021 = vadd.f32 %v3631, %v3973
      %v4022 = vadd.f32 %v3632, %v3976
      %v4023 = vadd.f32 %v3633, %v3981
      %v4024 = vadd.f32 %v3634, %v3984
      %v4025 = vadd.f32 %v3635, %v3989
      %v4026 = vadd.f32 %v3636, %v3992
      %v4027 = vld [vmem:[%s3637] sm:$0xf]
      %v4028 = vld [vmem:[%s3637 + $0x4] sm:$0xf]
      %v4029 = vld [vmem:[%s3637 + $0x8] sm:$0x1]
      %v4030 = vld [vmem:[%s3637 + $0xc] sm:$0xf]
      %v4031 = vld [vmem:[%s3637 + $0x10] sm:$0xf]
      %v4032 = vld [vmem:[%s3637 + $0x14] sm:$0x1]
      %v4033 = vld [vmem:[%s3637 + $0x18] sm:$0xf]
      %v4034 = vld [vmem:[%s3637 + $0x1c] sm:$0xf]
      %v4035 = vld [vmem:[%s3637 + $0x20] sm:$0x1]
      %v4036 = vld [vmem:[%s3637 + $0x24] sm:$0xf]
      %v4037 = vld [vmem:[%s3637 + $0x28] sm:$0xf]
      %v4038 = vld [vmem:[%s3637 + $0x2c] sm:$0x1]
      %v4039 = vld [vmem:[%s3637 + $0x30] sm:$0xf]
      %v4040 = vld [vmem:[%s3637 + $0x34] sm:$0xf]
      %v4041 = vld [vmem:[%s3637 + $0x38] sm:$0x1]
      %v4042 = vld [vmem:[%s3637 + $0x3c] sm:$0xf]
      %v4043 = vld [vmem:[%s3637 + $0x40] sm:$0xf]
      %v4044 = vld [vmem:[%s3637 + $0x44] sm:$0x1]
      %v4045 = vld [vmem:[%s3637 + $0x48] sm:$0xf]
      %v4046 = vld [vmem:[%s3637 + $0x4c] sm:$0xf]
      %v4047 = vld [vmem:[%s3637 + $0x50] sm:$0x1]
      %v4048 = vld [vmem:[%s3637 + $0x54] sm:$0xf]
      %v4049 = vld [vmem:[%s3637 + $0x58] sm:$0xf]
      %v4050 = vld [vmem:[%s3637 + $0x5c] sm:$0x1]
      %v4051 = vld [vmem:[%s3637 + $0x60] sm:$0xf]
      %v4052 = vld [vmem:[%s3637 + $0x64] sm:$0xf]
      %v4053 = vld [vmem:[%s3637 + $0x68] sm:$0x1]
      %v4054 = vld [vmem:[%s3637 + $0x6c] sm:$0xf]
      %v4055 = vld [vmem:[%s3637 + $0x70] sm:$0xf]
      %v4056 = vld [vmem:[%s3637 + $0x74] sm:$0x1]
      %v4057 = vld [vmem:[%s3637 + $0x78] sm:$0xf]
      %v4058 = vld [vmem:[%s3637 + $0x7c] sm:$0xf]
      %v4059 = vld [vmem:[%s3637 + $0x80] sm:$0x1]
      %v4060 = vld [vmem:[%s3637 + $0x84] sm:$0xf]
      %v4061 = vld [vmem:[%s3637 + $0x88] sm:$0xf]
      %v4062 = vld [vmem:[%s3637 + $0x8c] sm:$0x1]
      %v4063 = vld [vmem:[%s3637 + $0x90] sm:$0xf]
      %v4064 = vld [vmem:[%s3637 + $0x94] sm:$0xf]
      %v4065 = vld [vmem:[%s3637 + $0x98] sm:$0x1]
      %v4066 = vld [vmem:[%s3637 + $0x9c] sm:$0xf]
      %v4067 = vld [vmem:[%s3637 + $0xa0] sm:$0xf]
      %v4068 = vld [vmem:[%s3637 + $0xa4] sm:$0x1]
      %v4069 = vld [vmem:[%s3637 + $0xa8] sm:$0xf]
      %v4070 = vld [vmem:[%s3637 + $0xac] sm:$0xf]
      %v4071 = vld [vmem:[%s3637 + $0xb0] sm:$0x1]
      %v4072 = vld [vmem:[%s3637 + $0xb4] sm:$0xf]
      %v4073 = vld [vmem:[%s3637 + $0xb8] sm:$0xf]
      %v4074 = vld [vmem:[%s3637 + $0xbc] sm:$0x1]
      %s4075 = sadd.s32 %s368, 7
      %s4076 = smul.u32 %s4075, 16
      %s4077 = smul.addr %s4076, 4
      %s4078 = scalar_lea.vmem %s251, %s4077
      %v4079 = vld [vmem:[%s4078] sm:$0xf]
      %v4080 = vld [vmem:[%s4078 + $0x4] sm:$0xf]
      %v4081 = vld [vmem:[%s4078 + $0x8] sm:$0xf]
      %v4082 = vld [vmem:[%s4078 + $0xc] sm:$0xf]
      %v4083 = vld [vmem:[%s4078 + $0x10] sm:$0xf]
      %v4084 = vld [vmem:[%s4078 + $0x14] sm:$0xf]
      %v4085 = vld [vmem:[%s4078 + $0x18] sm:$0xf]
      %v4086 = vld [vmem:[%s4078 + $0x1c] sm:$0xf]
      %v4087 = vld [vmem:[%s4078 + $0x20] sm:$0xf]
      %v4088 = vld [vmem:[%s4078 + $0x24] sm:$0xf]
      %v4089 = vld [vmem:[%s4078 + $0x28] sm:$0xf]
      %v4090 = vld [vmem:[%s4078 + $0x2c] sm:$0xf]
      %v4091 = vld [vmem:[%s4078 + $0x30] sm:$0xf]
      %v4092 = vld [vmem:[%s4078 + $0x34] sm:$0xf]
      %v4093 = vld [vmem:[%s4078 + $0x38] sm:$0xf]
      %v4094 = vld [vmem:[%s4078 + $0x3c] sm:$0xf]
      %v4096 = vshrl.u32 %v4027, 16
      %v4098 = vrot.slane %v4096, 4
      %v4099 = vshll.u32 %v4027, 16
      %v4101 = vrot.slane %v4099, 5
      %v4102 = vor.u32 %v4098, %v4101
      %v4103 = vrot.slane %v4102, 4
      %v4105 = vshll.u32 %v4028, 16
      %v4107 = vrot.slane %v4105, 5
      %v4108 = vsel %vm795, %v4103, %v4107
      %v4109 = vshrl.u32 %v4028, 16
      %v4111 = vrot.slane %v4109, 4
      %v4112 = vor.u32 %v4111, %v4107
      %v4113 = vrot.slane %v4112, 4
      %v4115 = vshll.u32 %v4029, 16
      %v4117 = vrot.slane %v4115, 5
      %v4118 = vsel %vm795, %v4113, %v4117
      %v4120 = vshrl.u32 %v4030, 16
      %v4122 = vrot.slane %v4120, 4
      %v4123 = vshll.u32 %v4030, 16
      %v4125 = vrot.slane %v4123, 5
      %v4126 = vor.u32 %v4122, %v4125
      %v4127 = vrot.slane %v4126, 4
      %v4129 = vshll.u32 %v4031, 16
      %v4131 = vrot.slane %v4129, 5
      %v4132 = vsel %vm795, %v4127, %v4131
      %v4133 = vshrl.u32 %v4031, 16
      %v4135 = vrot.slane %v4133, 4
      %v4136 = vor.u32 %v4135, %v4131
      %v4137 = vrot.slane %v4136, 4
      %v4139 = vshll.u32 %v4032, 16
      %v4141 = vrot.slane %v4139, 5
      %v4142 = vsel %vm795, %v4137, %v4141
      %v4144 = vshrl.u32 %v4033, 16
      %v4146 = vrot.slane %v4144, 4
      %v4147 = vshll.u32 %v4033, 16
      %v4149 = vrot.slane %v4147, 5
      %v4150 = vor.u32 %v4146, %v4149
      %v4151 = vrot.slane %v4150, 4
      %v4153 = vshll.u32 %v4034, 16
      %v4155 = vrot.slane %v4153, 5
      %v4156 = vsel %vm795, %v4151, %v4155
      %v4157 = vshrl.u32 %v4034, 16
      %v4159 = vrot.slane %v4157, 4
      %v4160 = vor.u32 %v4159, %v4155
      %v4161 = vrot.slane %v4160, 4
      %v4163 = vshll.u32 %v4035, 16
      %v4165 = vrot.slane %v4163, 5
      %v4166 = vsel %vm795, %v4161, %v4165
      %v4168 = vshrl.u32 %v4036, 16
      %v4170 = vrot.slane %v4168, 4
      %v4171 = vshll.u32 %v4036, 16
      %v4173 = vrot.slane %v4171, 5
      %v4174 = vor.u32 %v4170, %v4173
      %v4175 = vrot.slane %v4174, 4
      %v4177 = vshll.u32 %v4037, 16
      %v4179 = vrot.slane %v4177, 5
      %v4180 = vsel %vm795, %v4175, %v4179
      %v4181 = vshrl.u32 %v4037, 16
      %v4183 = vrot.slane %v4181, 4
      %v4184 = vor.u32 %v4183, %v4179
      %v4185 = vrot.slane %v4184, 4
      %v4187 = vshll.u32 %v4038, 16
      %v4189 = vrot.slane %v4187, 5
      %v4190 = vsel %vm795, %v4185, %v4189
      %v4192 = vshrl.u32 %v4039, 16
      %v4194 = vrot.slane %v4192, 4
      %v4195 = vshll.u32 %v4039, 16
      %v4197 = vrot.slane %v4195, 5
      %v4198 = vor.u32 %v4194, %v4197
      %v4199 = vrot.slane %v4198, 4
      %v4201 = vshll.u32 %v4040, 16
      %v4203 = vrot.slane %v4201, 5
      %v4204 = vsel %vm795, %v4199, %v4203
      %v4205 = vshrl.u32 %v4040, 16
      %v4207 = vrot.slane %v4205, 4
      %v4208 = vor.u32 %v4207, %v4203
      %v4209 = vrot.slane %v4208, 4
      %v4211 = vshll.u32 %v4041, 16
      %v4213 = vrot.slane %v4211, 5
      %v4214 = vsel %vm795, %v4209, %v4213
      %v4216 = vshrl.u32 %v4042, 16
      %v4218 = vrot.slane %v4216, 4
      %v4219 = vshll.u32 %v4042, 16
      %v4221 = vrot.slane %v4219, 5
      %v4222 = vor.u32 %v4218, %v4221
      %v4223 = vrot.slane %v4222, 4
      %v4225 = vshll.u32 %v4043, 16
      %v4227 = vrot.slane %v4225, 5
      %v4228 = vsel %vm795, %v4223, %v4227
      %v4229 = vshrl.u32 %v4043, 16
      %v4231 = vrot.slane %v4229, 4
      %v4232 = vor.u32 %v4231, %v4227
      %v4233 = vrot.slane %v4232, 4
      %v4235 = vshll.u32 %v4044, 16
      %v4237 = vrot.slane %v4235, 5
      %v4238 = vsel %vm795, %v4233, %v4237
      %v4240 = vshrl.u32 %v4045, 16
      %v4242 = vrot.slane %v4240, 4
      %v4243 = vshll.u32 %v4045, 16
      %v4245 = vrot.slane %v4243, 5
      %v4246 = vor.u32 %v4242, %v4245
      %v4247 = vrot.slane %v4246, 4
      %v4249 = vshll.u32 %v4046, 16
      %v4251 = vrot.slane %v4249, 5
      %v4252 = vsel %vm795, %v4247, %v4251
      %v4253 = vshrl.u32 %v4046, 16
      %v4255 = vrot.slane %v4253, 4
      %v4256 = vor.u32 %v4255, %v4251
      %v4257 = vrot.slane %v4256, 4
      %v4259 = vshll.u32 %v4047, 16
      %v4261 = vrot.slane %v4259, 5
      %v4262 = vsel %vm795, %v4257, %v4261
      %v4264 = vshrl.u32 %v4048, 16
      %v4266 = vrot.slane %v4264, 4
      %v4267 = vshll.u32 %v4048, 16
      %v4269 = vrot.slane %v4267, 5
      %v4270 = vor.u32 %v4266, %v4269
      %v4271 = vrot.slane %v4270, 4
      %v4273 = vshll.u32 %v4049, 16
      %v4275 = vrot.slane %v4273, 5
      %v4276 = vsel %vm795, %v4271, %v4275
      %v4277 = vshrl.u32 %v4049, 16
      %v4279 = vrot.slane %v4277, 4
      %v4280 = vor.u32 %v4279, %v4275
      %v4281 = vrot.slane %v4280, 4
      %v4283 = vshll.u32 %v4050, 16
      %v4285 = vrot.slane %v4283, 5
      %v4286 = vsel %vm795, %v4281, %v4285
      %v4288 = vshrl.u32 %v4051, 16
      %v4290 = vrot.slane %v4288, 4
      %v4291 = vshll.u32 %v4051, 16
      %v4293 = vrot.slane %v4291, 5
      %v4294 = vor.u32 %v4290, %v4293
      %v4295 = vrot.slane %v4294, 4
      %v4297 = vshll.u32 %v4052, 16
      %v4299 = vrot.slane %v4297, 5
      %v4300 = vsel %vm795, %v4295, %v4299
      %v4301 = vshrl.u32 %v4052, 16
      %v4303 = vrot.slane %v4301, 4
      %v4304 = vor.u32 %v4303, %v4299
      %v4305 = vrot.slane %v4304, 4
      %v4307 = vshll.u32 %v4053, 16
      %v4309 = vrot.slane %v4307, 5
      %v4310 = vsel %vm795, %v4305, %v4309
      %v4312 = vshrl.u32 %v4054, 16
      %v4314 = vrot.slane %v4312, 4
      %v4315 = vshll.u32 %v4054, 16
      %v4317 = vrot.slane %v4315, 5
      %v4318 = vor.u32 %v4314, %v4317
      %v4319 = vrot.slane %v4318, 4
      %v4321 = vshll.u32 %v4055, 16
      %v4323 = vrot.slane %v4321, 5
      %v4324 = vsel %vm795, %v4319, %v4323
      %v4325 = vshrl.u32 %v4055, 16
      %v4327 = vrot.slane %v4325, 4
      %v4328 = vor.u32 %v4327, %v4323
      %v4329 = vrot.slane %v4328, 4
      %v4331 = vshll.u32 %v4056, 16
      %v4333 = vrot.slane %v4331, 5
      %v4334 = vsel %vm795, %v4329, %v4333
      %v4336 = vshrl.u32 %v4057, 16
      %v4338 = vrot.slane %v4336, 4
      %v4339 = vshll.u32 %v4057, 16
      %v4341 = vrot.slane %v4339, 5
      %v4342 = vor.u32 %v4338, %v4341
      %v4343 = vrot.slane %v4342, 4
      %v4345 = vshll.u32 %v4058, 16
      %v4347 = vrot.slane %v4345, 5
      %v4348 = vsel %vm795, %v4343, %v4347
      %v4349 = vshrl.u32 %v4058, 16
      %v4351 = vrot.slane %v4349, 4
      %v4352 = vor.u32 %v4351, %v4347
      %v4353 = vrot.slane %v4352, 4
      %v4355 = vshll.u32 %v4059, 16
      %v4357 = vrot.slane %v4355, 5
      %v4358 = vsel %vm795, %v4353, %v4357
      %v4360 = vshrl.u32 %v4060, 16
      %v4362 = vrot.slane %v4360, 4
      %v4363 = vshll.u32 %v4060, 16
      %v4365 = vrot.slane %v4363, 5
      %v4366 = vor.u32 %v4362, %v4365
      %v4367 = vrot.slane %v4366, 4
      %v4369 = vshll.u32 %v4061, 16
      %v4371 = vrot.slane %v4369, 5
      %v4372 = vsel %vm795, %v4367, %v4371
      %v4373 = vshrl.u32 %v4061, 16
      %v4375 = vrot.slane %v4373, 4
      %v4376 = vor.u32 %v4375, %v4371
      %v4377 = vrot.slane %v4376, 4
      %v4379 = vshll.u32 %v4062, 16
      %v4381 = vrot.slane %v4379, 5
      %v4382 = vsel %vm795, %v4377, %v4381
      %v4384 = vshrl.u32 %v4063, 16
      %v4386 = vrot.slane %v4384, 4
      %v4387 = vshll.u32 %v4063, 16
      %v4389 = vrot.slane %v4387, 5
      %v4390 = vor.u32 %v4386, %v4389
      %v4391 = vrot.slane %v4390, 4
      %v4393 = vshll.u32 %v4064, 16
      %v4395 = vrot.slane %v4393, 5
      %v4396 = vsel %vm795, %v4391, %v4395
      %v4397 = vshrl.u32 %v4064, 16
      %v4399 = vrot.slane %v4397, 4
      %v4400 = vor.u32 %v4399, %v4395
      %v4401 = vrot.slane %v4400, 4
      %v4403 = vshll.u32 %v4065, 16
      %v4405 = vrot.slane %v4403, 5
      %v4406 = vsel %vm795, %v4401, %v4405
      %v4408 = vshrl.u32 %v4066, 16
      %v4410 = vrot.slane %v4408, 4
      %v4411 = vshll.u32 %v4066, 16
      %v4413 = vrot.slane %v4411, 5
      %v4414 = vor.u32 %v4410, %v4413
      %v4415 = vrot.slane %v4414, 4
      %v4417 = vshll.u32 %v4067, 16
      %v4419 = vrot.slane %v4417, 5
      %v4420 = vsel %vm795, %v4415, %v4419
      %v4421 = vshrl.u32 %v4067, 16
      %v4423 = vrot.slane %v4421, 4
      %v4424 = vor.u32 %v4423, %v4419
      %v4425 = vrot.slane %v4424, 4
      %v4427 = vshll.u32 %v4068, 16
      %v4429 = vrot.slane %v4427, 5
      %v4430 = vsel %vm795, %v4425, %v4429
      %v4432 = vshrl.u32 %v4069, 16
      %v4434 = vrot.slane %v4432, 4
      %v4435 = vshll.u32 %v4069, 16
      %v4437 = vrot.slane %v4435, 5
      %v4438 = vor.u32 %v4434, %v4437
      %v4439 = vrot.slane %v4438, 4
      %v4441 = vshll.u32 %v4070, 16
      %v4443 = vrot.slane %v4441, 5
      %v4444 = vsel %vm795, %v4439, %v4443
      %v4445 = vshrl.u32 %v4070, 16
      %v4447 = vrot.slane %v4445, 4
      %v4448 = vor.u32 %v4447, %v4443
      %v4449 = vrot.slane %v4448, 4
      %v4451 = vshll.u32 %v4071, 16
      %v4453 = vrot.slane %v4451, 5
      %v4454 = vsel %vm795, %v4449, %v4453
      %v4456 = vshrl.u32 %v4072, 16
      %v4458 = vrot.slane %v4456, 4
      %v4459 = vshll.u32 %v4072, 16
      %v4461 = vrot.slane %v4459, 5
      %v4462 = vor.u32 %v4458, %v4461
      %v4463 = vrot.slane %v4462, 4
      %v4465 = vshll.u32 %v4073, 16
      %v4467 = vrot.slane %v4465, 5
      %v4468 = vsel %vm795, %v4463, %v4467
      %v4469 = vshrl.u32 %v4073, 16
      %v4471 = vrot.slane %v4469, 4
      %v4472 = vor.u32 %v4471, %v4467
      %v4473 = vrot.slane %v4472, 4
      %v4475 = vshll.u32 %v4074, 16
      %v4477 = vrot.slane %v4475, 5
      %v4478 = vsel %vm795, %v4473, %v4477
      %v4479 = vunpack.c.l.b16 %v4108
      %v4480 = vunpack.c.l.b16 %v4118
      %v4481 = vunpack.c.l.b16 %v4132
      %v4482 = vunpack.c.l.b16 %v4142
      %v4483 = vunpack.c.l.b16 %v4156
      %v4484 = vunpack.c.l.b16 %v4166
      %v4485 = vunpack.c.l.b16 %v4180
      %v4486 = vunpack.c.l.b16 %v4190
      %v4487 = vunpack.c.l.b16 %v4204
      %v4488 = vunpack.c.l.b16 %v4214
      %v4489 = vunpack.c.l.b16 %v4228
      %v4490 = vunpack.c.l.b16 %v4238
      %v4491 = vunpack.c.l.b16 %v4252
      %v4492 = vunpack.c.l.b16 %v4262
      %v4493 = vunpack.c.l.b16 %v4276
      %v4494 = vunpack.c.l.b16 %v4286
      %v4495 = vunpack.c.l.b16 %v4300
      %v4496 = vunpack.c.l.b16 %v4310
      %v4497 = vunpack.c.l.b16 %v4324
      %v4498 = vunpack.c.l.b16 %v4334
      %v4499 = vunpack.c.l.b16 %v4348
      %v4500 = vunpack.c.l.b16 %v4358
      %v4501 = vunpack.c.l.b16 %v4372
      %v4502 = vunpack.c.l.b16 %v4382
      %v4503 = vunpack.c.l.b16 %v4396
      %v4504 = vunpack.c.l.b16 %v4406
      %v4505 = vunpack.c.l.b16 %v4420
      %v4506 = vunpack.c.l.b16 %v4430
      %v4507 = vunpack.c.l.b16 %v4444
      %v4508 = vunpack.c.l.b16 %v4454
      %v4509 = vunpack.c.l.b16 %v4468
      %v4510 = vunpack.c.l.b16 %v4478
      %v4511 = vpack.c.b16 %v4480, %v4479
      %v4512 = vpack.c.b16 %v4482, %v4481
      %v4513 = vpack.c.b16 %v4484, %v4483
      %v4514 = vpack.c.b16 %v4486, %v4485
      %v4515 = vpack.c.b16 %v4488, %v4487
      %v4516 = vpack.c.b16 %v4490, %v4489
      %v4517 = vpack.c.b16 %v4492, %v4491
      %v4518 = vpack.c.b16 %v4494, %v4493
      %v4519 = vpack.c.b16 %v4496, %v4495
      %v4520 = vpack.c.b16 %v4498, %v4497
      %v4521 = vpack.c.b16 %v4500, %v4499
      %v4522 = vpack.c.b16 %v4502, %v4501
      %v4523 = vpack.c.b16 %v4504, %v4503
      %v4524 = vpack.c.b16 %v4506, %v4505
      %v4525 = vpack.c.b16 %v4508, %v4507
      %v4526 = vpack.c.b16 %v4510, %v4509
      %v4559 = vunpack.c.l.b16 %v4079
      %v4560 = vunpack.c.l.b16 %v4080
      %v4561 = vunpack.c.l.b16 %v4081
      %v4562 = vunpack.c.l.b16 %v4082
      %v4563 = vunpack.c.l.b16 %v4083
      %v4564 = vunpack.c.l.b16 %v4084
      %v4565 = vunpack.c.l.b16 %v4085
      %v4566 = vunpack.c.l.b16 %v4086
      %v4567 = vunpack.c.l.b16 %v4087
      %v4568 = vunpack.c.l.b16 %v4088
      %v4569 = vunpack.c.l.b16 %v4089
      %v4570 = vunpack.c.l.b16 %v4090
      %v4571 = vunpack.c.l.b16 %v4091
      %v4572 = vunpack.c.l.b16 %v4092
      %v4573 = vunpack.c.l.b16 %v4093
      %v4574 = vunpack.c.l.b16 %v4094
      %v4575 = vpack.c.b16 %v4560, %v4559
      %v4576 = vpack.c.b16 %v4562, %v4561
      %v4577 = vpack.c.b16 %v4564, %v4563
      %v4578 = vpack.c.b16 %v4566, %v4565
      %v4579 = vpack.c.b16 %v4568, %v4567
      %v4580 = vpack.c.b16 %v4570, %v4569
      %v4581 = vpack.c.b16 %v4572, %v4571
      %v4582 = vpack.c.b16 %v4574, %v4573
      %4591 = vmatprep.subr.bf16.mxu0 0
      %4592 = vmatpush1.bf16.msra.mxu0 %v4582
      %4593 = vmatprep.subr.bf16.mxu0 0
      %4594 = vmatpush1.bf16.msra.mxu0 %v4581
      %4595 = vmatprep.subr.bf16.mxu0 0
      %4596 = vmatpush1.bf16.msra.mxu0 %v4580
      %4597 = vmatprep.subr.bf16.mxu0 0
      %4598 = vmatpush1.bf16.msra.mxu0 %v4579
      %4599 = vmatprep.subr.bf16.mxu0 0
      %4600 = vmatpush1.bf16.msra.mxu0 %v4578
      %4601 = vmatprep.subr.bf16.mxu0 0
      %4602 = vmatpush1.bf16.msra.mxu0 %v4577
      %4603 = vmatprep.subr.bf16.mxu0 0
      %4604 = vmatpush1.bf16.msra.mxu0 %v4576
      %4605 = vmatprep.subr.bf16.mxu0 0
      %4606 = vmatpush1.bf16.msra.mxu0 %v4575
      %4607 = vmatprep.subr.bf16.mxu0 0
      %4608 = vmatpush2.bf16.msra.mxu0 0
      %4609 = vmatprep.subr.bf16.mxu0 0
      %4610 = vmatpush2.bf16.msra.mxu0 0
      %4611 = vmatprep.subr.bf16.mxu0 0
      %4612 = vmatpush2.bf16.msra.mxu0 0
      %4613 = vmatprep.subr.bf16.mxu0 0
      %4614 = vmatpush2.bf16.msra.mxu0 0
      %4615 = vmatprep.subr.bf16.mxu0 0
      %4616 = vmatpush2.bf16.msra.mxu0 0
      %4617 = vmatprep.subr.bf16.mxu0 0
      %4618 = vmatpush2.bf16.msra.mxu0 0
      %4619 = vmatprep.subr.bf16.mxu0 0
      %4620 = vmatpush2.bf16.msra.mxu0 0
      %4621 = vmatprep.subr.bf16.mxu0 0
      %4622 = vmatpush2.bf16.msra.mxu0 0
      %4623 = vmatprep.mubr.bf16.mxu0 0
      %4624 = vmatmul.mubr.bf16.gmra.mxu0 %v4511
      %v4625 = vpop.f32.mrf.mxu0
      %v4626 = vadd.f32 0.0, %v4625
      %v4627 = vpop.f32.mrf.mxu0
      %v4628 = vpop.f32.mrf.mxu0
      %v4629 = vadd.f32 0.0, %v4628
      %v4630 = vpop.f32.mrf.mxu0
      %4631 = vmatprep.mubr.bf16.mxu0 0
      %4632 = vmatmul.mubr.bf16.gmra.mxu0 %v4512
      %v4633 = vpop.f32.mrf.mxu0
      %v4634 = vadd.f32 0.0, %v4633
      %v4635 = vpop.f32.mrf.mxu0
      %v4636 = vpop.f32.mrf.mxu0
      %v4637 = vadd.f32 0.0, %v4636
      %v4638 = vpop.f32.mrf.mxu0
      %4639 = vmatprep.mubr.bf16.mxu0 0
      %4640 = vmatmul.mubr.bf16.gmra.mxu0 %v4513
      %v4641 = vpop.f32.mrf.mxu0
      %v4642 = vadd.f32 0.0, %v4641
      %v4643 = vpop.f32.mrf.mxu0
      %v4644 = vpop.f32.mrf.mxu0
      %v4645 = vadd.f32 0.0, %v4644
      %v4646 = vpop.f32.mrf.mxu0
      %4647 = vmatprep.mubr.bf16.mxu0 0
      %4648 = vmatmul.mubr.bf16.gmra.mxu0 %v4514
      %v4649 = vpop.f32.mrf.mxu0
      %v4650 = vadd.f32 0.0, %v4649
      %v4651 = vpop.f32.mrf.mxu0
      %v4652 = vpop.f32.mrf.mxu0
      %v4653 = vadd.f32 0.0, %v4652
      %v4654 = vpop.f32.mrf.mxu0
      %4655 = vmatprep.mubr.bf16.mxu0 0
      %4656 = vmatmul.mubr.bf16.gmra.mxu0 %v4515
      %v4657 = vpop.f32.mrf.mxu0
      %v4658 = vadd.f32 0.0, %v4657
      %v4659 = vpop.f32.mrf.mxu0
      %v4660 = vpop.f32.mrf.mxu0
      %v4661 = vadd.f32 0.0, %v4660
      %v4662 = vpop.f32.mrf.mxu0
      %4663 = vmatprep.mubr.bf16.mxu0 0
      %4664 = vmatmul.mubr.bf16.gmra.mxu0 %v4516
      %v4665 = vpop.f32.mrf.mxu0
      %v4666 = vadd.f32 0.0, %v4665
      %v4667 = vpop.f32.mrf.mxu0
      %v4668 = vpop.f32.mrf.mxu0
      %v4669 = vadd.f32 0.0, %v4668
      %v4670 = vpop.f32.mrf.mxu0
      %4671 = vmatprep.mubr.bf16.mxu0 0
      %4672 = vmatmul.mubr.bf16.gmra.mxu0 %v4517
      %v4673 = vpop.f32.mrf.mxu0
      %v4674 = vadd.f32 0.0, %v4673
      %v4675 = vpop.f32.mrf.mxu0
      %v4676 = vpop.f32.mrf.mxu0
      %v4677 = vadd.f32 0.0, %v4676
      %v4678 = vpop.f32.mrf.mxu0
      %4679 = vmatprep.mubr.bf16.mxu0 0
      %4680 = vmatmul.mubr.bf16.gmra.mxu0 %v4518
      %v4681 = vpop.f32.mrf.mxu0
      %v4682 = vadd.f32 0.0, %v4681
      %v4683 = vpop.f32.mrf.mxu0
      %v4684 = vpop.f32.mrf.mxu0
      %v4685 = vadd.f32 0.0, %v4684
      %v4686 = vpop.f32.mrf.mxu0
      %4687 = vmatprep.mubr.bf16.mxu0 0
      %4688 = vmatmul.mubr.bf16.gmra.mxu0 %v4519
      %v4689 = vpop.f32.mrf.mxu0
      %v4690 = vadd.f32 0.0, %v4689
      %v4691 = vpop.f32.mrf.mxu0
      %v4692 = vpop.f32.mrf.mxu0
      %v4693 = vadd.f32 0.0, %v4692
      %v4694 = vpop.f32.mrf.mxu0
      %4695 = vmatprep.mubr.bf16.mxu0 0
      %4696 = vmatmul.mubr.bf16.gmra.mxu0 %v4520
      %v4697 = vpop.f32.mrf.mxu0
      %v4698 = vadd.f32 0.0, %v4697
      %v4699 = vpop.f32.mrf.mxu0
      %v4700 = vpop.f32.mrf.mxu0
      %v4701 = vadd.f32 0.0, %v4700
      %v4702 = vpop.f32.mrf.mxu0
      %4703 = vmatprep.mubr.bf16.mxu0 0
      %4704 = vmatmul.mubr.bf16.gmra.mxu0 %v4521
      %v4705 = vpop.f32.mrf.mxu0
      %v4706 = vadd.f32 0.0, %v4705
      %v4707 = vpop.f32.mrf.mxu0
      %v4708 = vpop.f32.mrf.mxu0
      %v4709 = vadd.f32 0.0, %v4708
      %v4710 = vpop.f32.mrf.mxu0
      %4711 = vmatprep.mubr.bf16.mxu0 0
      %4712 = vmatmul.mubr.bf16.gmra.mxu0 %v4522
      %v4713 = vpop.f32.mrf.mxu0
      %v4714 = vadd.f32 0.0, %v4713
      %v4715 = vpop.f32.mrf.mxu0
      %v4716 = vpop.f32.mrf.mxu0
      %v4717 = vadd.f32 0.0, %v4716
      %v4718 = vpop.f32.mrf.mxu0
      %4719 = vmatprep.mubr.bf16.mxu0 0
      %4720 = vmatmul.mubr.bf16.gmra.mxu0 %v4523
      %v4721 = vpop.f32.mrf.mxu0
      %v4722 = vadd.f32 0.0, %v4721
      %v4723 = vpop.f32.mrf.mxu0
      %v4724 = vpop.f32.mrf.mxu0
      %v4725 = vadd.f32 0.0, %v4724
      %v4726 = vpop.f32.mrf.mxu0
      %4727 = vmatprep.mubr.bf16.mxu0 0
      %4728 = vmatmul.mubr.bf16.gmra.mxu0 %v4524
      %v4729 = vpop.f32.mrf.mxu0
      %v4730 = vadd.f32 0.0, %v4729
      %v4731 = vpop.f32.mrf.mxu0
      %v4732 = vpop.f32.mrf.mxu0
      %v4733 = vadd.f32 0.0, %v4732
      %v4734 = vpop.f32.mrf.mxu0
      %4735 = vmatprep.mubr.bf16.mxu0 0
      %4736 = vmatmul.mubr.bf16.gmra.mxu0 %v4525
      %v4737 = vpop.f32.mrf.mxu0
      %v4738 = vadd.f32 0.0, %v4737
      %v4739 = vpop.f32.mrf.mxu0
      %v4740 = vpop.f32.mrf.mxu0
      %v4741 = vadd.f32 0.0, %v4740
      %v4742 = vpop.f32.mrf.mxu0
      %4743 = vmatprep.mubr.bf16.mxu0 0
      %4744 = vmatmul.mubr.bf16.gmra.mxu0 %v4526
      %v4745 = vpop.f32.mrf.mxu0
      %v4746 = vadd.f32 0.0, %v4745
      %v4747 = vpop.f32.mrf.mxu0
      %v4748 = vpop.f32.mrf.mxu0
      %v4749 = vadd.f32 0.0, %v4748
      %v4750 = vpop.f32.mrf.mxu0
      %4751 = vdwg.mxu0
      %v4752 = vadd.f32 %v3995, %v4626
      %v4753 = vadd.f32 %v3996, %v4629
      %v4754 = vadd.f32 %v3997, %v4634
      %v4755 = vadd.f32 %v3998, %v4637
      %v4756 = vadd.f32 %v3999, %v4642
      %v4757 = vadd.f32 %v4000, %v4645
      %v4758 = vadd.f32 %v4001, %v4650
      %v4759 = vadd.f32 %v4002, %v4653
      %v4760 = vadd.f32 %v4003, %v4658
      %v4761 = vadd.f32 %v4004, %v4661
      %v4762 = vadd.f32 %v4005, %v4666
      %v4763 = vadd.f32 %v4006, %v4669
      %v4764 = vadd.f32 %v4007, %v4674
      %v4765 = vadd.f32 %v4008, %v4677
      %v4766 = vadd.f32 %v4009, %v4682
      %v4767 = vadd.f32 %v4010, %v4685
      %v4768 = vadd.f32 %v4011, %v4690
      %v4769 = vadd.f32 %v4012, %v4693
      %v4770 = vadd.f32 %v4013, %v4698
      %v4771 = vadd.f32 %v4014, %v4701
      %v4772 = vadd.f32 %v4015, %v4706
      %v4773 = vadd.f32 %v4016, %v4709
      %v4774 = vadd.f32 %v4017, %v4714
      %v4775 = vadd.f32 %v4018, %v4717
      %v4776 = vadd.f32 %v4019, %v4722
      %v4777 = vadd.f32 %v4020, %v4725
      %v4778 = vadd.f32 %v4021, %v4730
      %v4779 = vadd.f32 %v4022, %v4733
      %v4780 = vadd.f32 %v4023, %v4738
      %v4781 = vadd.f32 %v4024, %v4741
      %v4782 = vadd.f32 %v4025, %v4746
      %v4783 = vadd.f32 %v4026, %v4749
      %v4784 = vld [vmem:[%s3637] sm:$0xe]
      %v4785 = vld [vmem:[%s3637 + $0xc] sm:$0xe]
      %v4786 = vld [vmem:[%s3637 + $0x18] sm:$0xe]
      %v4787 = vld [vmem:[%s3637 + $0x24] sm:$0xe]
      %v4788 = vld [vmem:[%s3637 + $0x30] sm:$0xe]
      %v4789 = vld [vmem:[%s3637 + $0x3c] sm:$0xe]
      %v4790 = vld [vmem:[%s3637 + $0x48] sm:$0xe]
      %v4791 = vld [vmem:[%s3637 + $0x54] sm:$0xe]
      %v4792 = vld [vmem:[%s3637 + $0x60] sm:$0xe]
      %v4793 = vld [vmem:[%s3637 + $0x6c] sm:$0xe]
      %v4794 = vld [vmem:[%s3637 + $0x78] sm:$0xe]
      %v4795 = vld [vmem:[%s3637 + $0x84] sm:$0xe]
      %v4796 = vld [vmem:[%s3637 + $0x90] sm:$0xe]
      %v4797 = vld [vmem:[%s3637 + $0x9c] sm:$0xe]
      %v4798 = vld [vmem:[%s3637 + $0xa8] sm:$0xe]
      %v4799 = vld [vmem:[%s3637 + $0xb4] sm:$0xe]
      %s4800 = sadd.s32 %s368, 8
      %s4801 = smul.u32 %s4800, 16
      %s4802 = smul.addr %s4801, 4
      %s4803 = scalar_lea.vmem %s251, %s4802
      %v4804 = vld [vmem:[%s4803] sm:$0xf]
      %v4805 = vld [vmem:[%s4803 + $0x4] sm:$0xf]
      %v4806 = vld [vmem:[%s4803 + $0x8] sm:$0xf]
      %v4807 = vld [vmem:[%s4803 + $0xc] sm:$0xf]
      %v4808 = vld [vmem:[%s4803 + $0x10] sm:$0xf]
      %v4809 = vld [vmem:[%s4803 + $0x14] sm:$0xf]
      %v4810 = vld [vmem:[%s4803 + $0x18] sm:$0xf]
      %v4811 = vld [vmem:[%s4803 + $0x1c] sm:$0xf]
      %v4812 = vld [vmem:[%s4803 + $0x20] sm:$0xf]
      %v4813 = vld [vmem:[%s4803 + $0x24] sm:$0xf]
      %v4814 = vld [vmem:[%s4803 + $0x28] sm:$0xf]
      %v4815 = vld [vmem:[%s4803 + $0x2c] sm:$0xf]
      %v4816 = vld [vmem:[%s4803 + $0x30] sm:$0xf]
      %v4817 = vld [vmem:[%s4803 + $0x34] sm:$0xf]
      %v4818 = vld [vmem:[%s4803 + $0x38] sm:$0xf]
      %v4819 = vld [vmem:[%s4803 + $0x3c] sm:$0xf]
      %v4868 = vrot.slane %v4784, 5
      %v4869 = vrot.slane %v4868, 4
      %v4870 = vrot.slane %v4028, 5
      %v4871 = vsel %vm1571, %v4869, %v4870
      %v4872 = vrot.slane %v4870, 4
      %v4873 = vrot.slane %v4029, 5
      %v4874 = vsel %vm1571, %v4872, %v4873
      %v4875 = vrot.slane %v4785, 5
      %v4876 = vrot.slane %v4875, 4
      %v4877 = vrot.slane %v4031, 5
      %v4878 = vsel %vm1571, %v4876, %v4877
      %v4879 = vrot.slane %v4877, 4
      %v4880 = vrot.slane %v4032, 5
      %v4881 = vsel %vm1571, %v4879, %v4880
      %v4882 = vrot.slane %v4786, 5
      %v4883 = vrot.slane %v4882, 4
      %v4884 = vrot.slane %v4034, 5
      %v4885 = vsel %vm1571, %v4883, %v4884
      %v4886 = vrot.slane %v4884, 4
      %v4887 = vrot.slane %v4035, 5
      %v4888 = vsel %vm1571, %v4886, %v4887
      %v4889 = vrot.slane %v4787, 5
      %v4890 = vrot.slane %v4889, 4
      %v4891 = vrot.slane %v4037, 5
      %v4892 = vsel %vm1571, %v4890, %v4891
      %v4893 = vrot.slane %v4891, 4
      %v4894 = vrot.slane %v4038, 5
      %v4895 = vsel %vm1571, %v4893, %v4894
      %v4896 = vrot.slane %v4788, 5
      %v4897 = vrot.slane %v4896, 4
      %v4898 = vrot.slane %v4040, 5
      %v4899 = vsel %vm1571, %v4897, %v4898
      %v4900 = vrot.slane %v4898, 4
      %v4901 = vrot.slane %v4041, 5
      %v4902 = vsel %vm1571, %v4900, %v4901
      %v4903 = vrot.slane %v4789, 5
      %v4904 = vrot.slane %v4903, 4
      %v4905 = vrot.slane %v4043, 5
      %v4906 = vsel %vm1571, %v4904, %v4905
      %v4907 = vrot.slane %v4905, 4
      %v4908 = vrot.slane %v4044, 5
      %v4909 = vsel %vm1571, %v4907, %v4908
      %v4910 = vrot.slane %v4790, 5
      %v4911 = vrot.slane %v4910, 4
      %v4912 = vrot.slane %v4046, 5
      %v4913 = vsel %vm1571, %v4911, %v4912
      %v4914 = vrot.slane %v4912, 4
      %v4915 = vrot.slane %v4047, 5
      %v4916 = vsel %vm1571, %v4914, %v4915
      %v4917 = vrot.slane %v4791, 5
      %v4918 = vrot.slane %v4917, 4
      %v4919 = vrot.slane %v4049, 5
      %v4920 = vsel %vm1571, %v4918, %v4919
      %v4921 = vrot.slane %v4919, 4
      %v4922 = vrot.slane %v4050, 5
      %v4923 = vsel %vm1571, %v4921, %v4922
      %v4924 = vrot.slane %v4792, 5
      %v4925 = vrot.slane %v4924, 4
      %v4926 = vrot.slane %v4052, 5
      %v4927 = vsel %vm1571, %v4925, %v4926
      %v4928 = vrot.slane %v4926, 4
      %v4929 = vrot.slane %v4053, 5
      %v4930 = vsel %vm1571, %v4928, %v4929
      %v4931 = vrot.slane %v4793, 5
      %v4932 = vrot.slane %v4931, 4
      %v4933 = vrot.slane %v4055, 5
      %v4934 = vsel %vm1571, %v4932, %v4933
      %v4935 = vrot.slane %v4933, 4
      %v4936 = vrot.slane %v4056, 5
      %v4937 = vsel %vm1571, %v4935, %v4936
      %v4938 = vrot.slane %v4794, 5
      %v4939 = vrot.slane %v4938, 4
      %v4940 = vrot.slane %v4058, 5
      %v4941 = vsel %vm1571, %v4939, %v4940
      %v4942 = vrot.slane %v4940, 4
      %v4943 = vrot.slane %v4059, 5
      %v4944 = vsel %vm1571, %v4942, %v4943
      %v4945 = vrot.slane %v4795, 5
      %v4946 = vrot.slane %v4945, 4
      %v4947 = vrot.slane %v4061, 5
      %v4948 = vsel %vm1571, %v4946, %v4947
      %v4949 = vrot.slane %v4947, 4
      %v4950 = vrot.slane %v4062, 5
      %v4951 = vsel %vm1571, %v4949, %v4950
      %v4952 = vrot.slane %v4796, 5
      %v4953 = vrot.slane %v4952, 4
      %v4954 = vrot.slane %v4064, 5
      %v4955 = vsel %vm1571, %v4953, %v4954
      %v4956 = vrot.slane %v4954, 4
      %v4957 = vrot.slane %v4065, 5
      %v4958 = vsel %vm1571, %v4956, %v4957
      %v4959 = vrot.slane %v4797, 5
      %v4960 = vrot.slane %v4959, 4
      %v4961 = vrot.slane %v4067, 5
      %v4962 = vsel %vm1571, %v4960, %v4961
      %v4963 = vrot.slane %v4961, 4
      %v4964 = vrot.slane %v4068, 5
      %v4965 = vsel %vm1571, %v4963, %v4964
      %v4966 = vrot.slane %v4798, 5
      %v4967 = vrot.slane %v4966, 4
      %v4968 = vrot.slane %v4070, 5
      %v4969 = vsel %vm1571, %v4967, %v4968
      %v4970 = vrot.slane %v4968, 4
      %v4971 = vrot.slane %v4071, 5
      %v4972 = vsel %vm1571, %v4970, %v4971
      %v4973 = vrot.slane %v4799, 5
      %v4974 = vrot.slane %v4973, 4
      %v4975 = vrot.slane %v4073, 5
      %v4976 = vsel %vm1571, %v4974, %v4975
      %v4977 = vrot.slane %v4975, 4
      %v4978 = vrot.slane %v4074, 5
      %v4979 = vsel %vm1571, %v4977, %v4978
      %v4980 = vunpack.c.l.b16 %v4871
      %v4981 = vunpack.c.l.b16 %v4874
      %v4982 = vunpack.c.l.b16 %v4878
      %v4983 = vunpack.c.l.b16 %v4881
      %v4984 = vunpack.c.l.b16 %v4885
      %v4985 = vunpack.c.l.b16 %v4888
      %v4986 = vunpack.c.l.b16 %v4892
      %v4987 = vunpack.c.l.b16 %v4895
      %v4988 = vunpack.c.l.b16 %v4899
      %v4989 = vunpack.c.l.b16 %v4902
      %v4990 = vunpack.c.l.b16 %v4906
      %v4991 = vunpack.c.l.b16 %v4909
      %v4992 = vunpack.c.l.b16 %v4913
      %v4993 = vunpack.c.l.b16 %v4916
      %v4994 = vunpack.c.l.b16 %v4920
      %v4995 = vunpack.c.l.b16 %v4923
      %v4996 = vunpack.c.l.b16 %v4927
      %v4997 = vunpack.c.l.b16 %v4930
      %v4998 = vunpack.c.l.b16 %v4934
      %v4999 = vunpack.c.l.b16 %v4937
      %v5000 = vunpack.c.l.b16 %v4941
      %v5001 = vunpack.c.l.b16 %v4944
      %v5002 = vunpack.c.l.b16 %v4948
      %v5003 = vunpack.c.l.b16 %v4951
      %v5004 = vunpack.c.l.b16 %v4955
      %v5005 = vunpack.c.l.b16 %v4958
      %v5006 = vunpack.c.l.b16 %v4962
      %v5007 = vunpack.c.l.b16 %v4965
      %v5008 = vunpack.c.l.b16 %v4969
      %v5009 = vunpack.c.l.b16 %v4972
      %v5010 = vunpack.c.l.b16 %v4976
      %v5011 = vunpack.c.l.b16 %v4979
      %v5012 = vpack.c.b16 %v4981, %v4980
      %v5013 = vpack.c.b16 %v4983, %v4982
      %v5014 = vpack.c.b16 %v4985, %v4984
      %v5015 = vpack.c.b16 %v4987, %v4986
      %v5016 = vpack.c.b16 %v4989, %v4988
      %v5017 = vpack.c.b16 %v4991, %v4990
      %v5018 = vpack.c.b16 %v4993, %v4992
      %v5019 = vpack.c.b16 %v4995, %v4994
      %v5020 = vpack.c.b16 %v4997, %v4996
      %v5021 = vpack.c.b16 %v4999, %v4998
      %v5022 = vpack.c.b16 %v5001, %v5000
      %v5023 = vpack.c.b16 %v5003, %v5002
      %v5024 = vpack.c.b16 %v5005, %v5004
      %v5025 = vpack.c.b16 %v5007, %v5006
      %v5026 = vpack.c.b16 %v5009, %v5008
      %v5027 = vpack.c.b16 %v5011, %v5010
      %v5060 = vunpack.c.l.b16 %v4804
      %v5061 = vunpack.c.l.b16 %v4805
      %v5062 = vunpack.c.l.b16 %v4806
      %v5063 = vunpack.c.l.b16 %v4807
      %v5064 = vunpack.c.l.b16 %v4808
      %v5065 = vunpack.c.l.b16 %v4809
      %v5066 = vunpack.c.l.b16 %v4810
      %v5067 = vunpack.c.l.b16 %v4811
      %v5068 = vunpack.c.l.b16 %v4812
      %v5069 = vunpack.c.l.b16 %v4813
      %v5070 = vunpack.c.l.b16 %v4814
      %v5071 = vunpack.c.l.b16 %v4815
      %v5072 = vunpack.c.l.b16 %v4816
      %v5073 = vunpack.c.l.b16 %v4817
      %v5074 = vunpack.c.l.b16 %v4818
      %v5075 = vunpack.c.l.b16 %v4819
      %v5076 = vpack.c.b16 %v5061, %v5060
      %v5077 = vpack.c.b16 %v5063, %v5062
      %v5078 = vpack.c.b16 %v5065, %v5064
      %v5079 = vpack.c.b16 %v5067, %v5066
      %v5080 = vpack.c.b16 %v5069, %v5068
      %v5081 = vpack.c.b16 %v5071, %v5070
      %v5082 = vpack.c.b16 %v5073, %v5072
      %v5083 = vpack.c.b16 %v5075, %v5074
      %5092 = vmatprep.subr.bf16.mxu0 0
      %5093 = vmatpush1.bf16.msra.mxu0 %v5083
      %5094 = vmatprep.subr.bf16.mxu0 0
      %5095 = vmatpush1.bf16.msra.mxu0 %v5082
      %5096 = vmatprep.subr.bf16.mxu0 0
      %5097 = vmatpush1.bf16.msra.mxu0 %v5081
      %5098 = vmatprep.subr.bf16.mxu0 0
      %5099 = vmatpush1.bf16.msra.mxu0 %v5080
      %5100 = vmatprep.subr.bf16.mxu0 0
      %5101 = vmatpush1.bf16.msra.mxu0 %v5079
      %5102 = vmatprep.subr.bf16.mxu0 0
      %5103 = vmatpush1.bf16.msra.mxu0 %v5078
      %5104 = vmatprep.subr.bf16.mxu0 0
      %5105 = vmatpush1.bf16.msra.mxu0 %v5077
      %5106 = vmatprep.subr.bf16.mxu0 0
      %5107 = vmatpush1.bf16.msra.mxu0 %v5076
      %5108 = vmatprep.subr.bf16.mxu0 0
      %5109 = vmatpush2.bf16.msra.mxu0 0
      %5110 = vmatprep.subr.bf16.mxu0 0
      %5111 = vmatpush2.bf16.msra.mxu0 0
      %5112 = vmatprep.subr.bf16.mxu0 0
      %5113 = vmatpush2.bf16.msra.mxu0 0
      %5114 = vmatprep.subr.bf16.mxu0 0
      %5115 = vmatpush2.bf16.msra.mxu0 0
      %5116 = vmatprep.subr.bf16.mxu0 0
      %5117 = vmatpush2.bf16.msra.mxu0 0
      %5118 = vmatprep.subr.bf16.mxu0 0
      %5119 = vmatpush2.bf16.msra.mxu0 0
      %5120 = vmatprep.subr.bf16.mxu0 0
      %5121 = vmatpush2.bf16.msra.mxu0 0
      %5122 = vmatprep.subr.bf16.mxu0 0
      %5123 = vmatpush2.bf16.msra.mxu0 0
      %5124 = vmatprep.mubr.bf16.mxu0 0
      %5125 = vmatmul.mubr.bf16.gmra.mxu0 %v5012
      %v5126 = vpop.f32.mrf.mxu0
      %v5127 = vadd.f32 0.0, %v5126
      %v5128 = vpop.f32.mrf.mxu0
      %v5129 = vpop.f32.mrf.mxu0
      %v5130 = vadd.f32 0.0, %v5129
      %v5131 = vpop.f32.mrf.mxu0
      %5132 = vmatprep.mubr.bf16.mxu0 0
      %5133 = vmatmul.mubr.bf16.gmra.mxu0 %v5013
      %v5134 = vpop.f32.mrf.mxu0
      %v5135 = vadd.f32 0.0, %v5134
      %v5136 = vpop.f32.mrf.mxu0
      %v5137 = vpop.f32.mrf.mxu0
      %v5138 = vadd.f32 0.0, %v5137
      %v5139 = vpop.f32.mrf.mxu0
      %5140 = vmatprep.mubr.bf16.mxu0 0
      %5141 = vmatmul.mubr.bf16.gmra.mxu0 %v5014
      %v5142 = vpop.f32.mrf.mxu0
      %v5143 = vadd.f32 0.0, %v5142
      %v5144 = vpop.f32.mrf.mxu0
      %v5145 = vpop.f32.mrf.mxu0
      %v5146 = vadd.f32 0.0, %v5145
      %v5147 = vpop.f32.mrf.mxu0
      %5148 = vmatprep.mubr.bf16.mxu0 0
      %5149 = vmatmul.mubr.bf16.gmra.mxu0 %v5015
      %v5150 = vpop.f32.mrf.mxu0
      %v5151 = vadd.f32 0.0, %v5150
      %v5152 = vpop.f32.mrf.mxu0
      %v5153 = vpop.f32.mrf.mxu0
      %v5154 = vadd.f32 0.0, %v5153
      %v5155 = vpop.f32.mrf.mxu0
      %5156 = vmatprep.mubr.bf16.mxu0 0
      %5157 = vmatmul.mubr.bf16.gmra.mxu0 %v5016
      %v5158 = vpop.f32.mrf.mxu0
      %v5159 = vadd.f32 0.0, %v5158
      %v5160 = vpop.f32.mrf.mxu0
      %v5161 = vpop.f32.mrf.mxu0
      %v5162 = vadd.f32 0.0, %v5161
      %v5163 = vpop.f32.mrf.mxu0
      %5164 = vmatprep.mubr.bf16.mxu0 0
      %5165 = vmatmul.mubr.bf16.gmra.mxu0 %v5017
      %v5166 = vpop.f32.mrf.mxu0
      %v5167 = vadd.f32 0.0, %v5166
      %v5168 = vpop.f32.mrf.mxu0
      %v5169 = vpop.f32.mrf.mxu0
      %v5170 = vadd.f32 0.0, %v5169
      %v5171 = vpop.f32.mrf.mxu0
      %5172 = vmatprep.mubr.bf16.mxu0 0
      %5173 = vmatmul.mubr.bf16.gmra.mxu0 %v5018
      %v5174 = vpop.f32.mrf.mxu0
      %v5175 = vadd.f32 0.0, %v5174
      %v5176 = vpop.f32.mrf.mxu0
      %v5177 = vpop.f32.mrf.mxu0
      %v5178 = vadd.f32 0.0, %v5177
      %v5179 = vpop.f32.mrf.mxu0
      %5180 = vmatprep.mubr.bf16.mxu0 0
      %5181 = vmatmul.mubr.bf16.gmra.mxu0 %v5019
      %v5182 = vpop.f32.mrf.mxu0
      %v5183 = vadd.f32 0.0, %v5182
      %v5184 = vpop.f32.mrf.mxu0
      %v5185 = vpop.f32.mrf.mxu0
      %v5186 = vadd.f32 0.0, %v5185
      %v5187 = vpop.f32.mrf.mxu0
      %5188 = vmatprep.mubr.bf16.mxu0 0
      %5189 = vmatmul.mubr.bf16.gmra.mxu0 %v5020
      %v5190 = vpop.f32.mrf.mxu0
      %v5191 = vadd.f32 0.0, %v5190
      %v5192 = vpop.f32.mrf.mxu0
      %v5193 = vpop.f32.mrf.mxu0
      %v5194 = vadd.f32 0.0, %v5193
      %v5195 = vpop.f32.mrf.mxu0
      %5196 = vmatprep.mubr.bf16.mxu0 0
      %5197 = vmatmul.mubr.bf16.gmra.mxu0 %v5021
      %v5198 = vpop.f32.mrf.mxu0
      %v5199 = vadd.f32 0.0, %v5198
      %v5200 = vpop.f32.mrf.mxu0
      %v5201 = vpop.f32.mrf.mxu0
      %v5202 = vadd.f32 0.0, %v5201
      %v5203 = vpop.f32.mrf.mxu0
      %5204 = vmatprep.mubr.bf16.mxu0 0
      %5205 = vmatmul.mubr.bf16.gmra.mxu0 %v5022
      %v5206 = vpop.f32.mrf.mxu0
      %v5207 = vadd.f32 0.0, %v5206
      %v5208 = vpop.f32.mrf.mxu0
      %v5209 = vpop.f32.mrf.mxu0
      %v5210 = vadd.f32 0.0, %v5209
      %v5211 = vpop.f32.mrf.mxu0
      %5212 = vmatprep.mubr.bf16.mxu0 0
      %5213 = vmatmul.mubr.bf16.gmra.mxu0 %v5023
      %v5214 = vpop.f32.mrf.mxu0
      %v5215 = vadd.f32 0.0, %v5214
      %v5216 = vpop.f32.mrf.mxu0
      %v5217 = vpop.f32.mrf.mxu0
      %v5218 = vadd.f32 0.0, %v5217
      %v5219 = vpop.f32.mrf.mxu0
      %5220 = vmatprep.mubr.bf16.mxu0 0
      %5221 = vmatmul.mubr.bf16.gmra.mxu0 %v5024
      %v5222 = vpop.f32.mrf.mxu0
      %v5223 = vadd.f32 0.0, %v5222
      %v5224 = vpop.f32.mrf.mxu0
      %v5225 = vpop.f32.mrf.mxu0
      %v5226 = vadd.f32 0.0, %v5225
      %v5227 = vpop.f32.mrf.mxu0
      %5228 = vmatprep.mubr.bf16.mxu0 0
      %5229 = vmatmul.mubr.bf16.gmra.mxu0 %v5025
      %v5230 = vpop.f32.mrf.mxu0
      %v5231 = vadd.f32 0.0, %v5230
      %v5232 = vpop.f32.mrf.mxu0
      %v5233 = vpop.f32.mrf.mxu0
      %v5234 = vadd.f32 0.0, %v5233
      %v5235 = vpop.f32.mrf.mxu0
      %5236 = vmatprep.mubr.bf16.mxu0 0
      %5237 = vmatmul.mubr.bf16.gmra.mxu0 %v5026
      %v5238 = vpop.f32.mrf.mxu0
      %v5239 = vadd.f32 0.0, %v5238
      %v5240 = vpop.f32.mrf.mxu0
      %v5241 = vpop.f32.mrf.mxu0
      %v5242 = vadd.f32 0.0, %v5241
      %v5243 = vpop.f32.mrf.mxu0
      %5244 = vmatprep.mubr.bf16.mxu0 0
      %5245 = vmatmul.mubr.bf16.gmra.mxu0 %v5027
      %v5246 = vpop.f32.mrf.mxu0
      %v5247 = vadd.f32 0.0, %v5246
      %v5248 = vpop.f32.mrf.mxu0
      %v5249 = vpop.f32.mrf.mxu0
      %v5250 = vadd.f32 0.0, %v5249
      %v5251 = vpop.f32.mrf.mxu0
      %5252 = vdwg.mxu0
      %v5253 = vadd.f32 %v4752, %v5127
      %v5254 = vadd.f32 %v4753, %v5130
      %v5255 = vadd.f32 %v4754, %v5135
      %v5256 = vadd.f32 %v4755, %v5138
      %v5257 = vadd.f32 %v4756, %v5143
      %v5258 = vadd.f32 %v4757, %v5146
      %v5259 = vadd.f32 %v4758, %v5151
      %v5260 = vadd.f32 %v4759, %v5154
      %v5261 = vadd.f32 %v4760, %v5159
      %v5262 = vadd.f32 %v4761, %v5162
      %v5263 = vadd.f32 %v4762, %v5167
      %v5264 = vadd.f32 %v4763, %v5170
      %v5265 = vadd.f32 %v4764, %v5175
      %v5266 = vadd.f32 %v4765, %v5178
      %v5267 = vadd.f32 %v4766, %v5183
      %v5268 = vadd.f32 %v4767, %v5186
      %v5269 = vadd.f32 %v4768, %v5191
      %v5270 = vadd.f32 %v4769, %v5194
      %v5271 = vadd.f32 %v4770, %v5199
      %v5272 = vadd.f32 %v4771, %v5202
      %v5273 = vadd.f32 %v4772, %v5207
      %v5274 = vadd.f32 %v4773, %v5210
      %v5275 = vadd.f32 %v4774, %v5215
      %v5276 = vadd.f32 %v4775, %v5218
      %v5277 = vadd.f32 %v4776, %v5223
      %v5278 = vadd.f32 %v4777, %v5226
      %v5279 = vadd.f32 %v4778, %v5231
      %v5280 = vadd.f32 %v4779, %v5234
      %v5281 = vadd.f32 %v4780, %v5239
      %v5282 = vadd.f32 %v4781, %v5242
      %v5283 = vadd.f32 %v4782, %v5247
      %v5284 = vadd.f32 %v4783, %v5250
      %5285 = vst [vmem:[#allocation2] sm:$0xff] %v5253
      %5286 = vst [vmem:[#allocation2 + $0x8] sm:$0xff] %v5254
      %5287 = vst [vmem:[#allocation2 + $0x10] sm:$0xff] %v5255
      %5288 = vst [vmem:[#allocation2 + $0x18] sm:$0xff] %v5256
      %5289 = vst [vmem:[#allocation2 + $0x20] sm:$0xff] %v5257
      %5290 = vst [vmem:[#allocation2 + $0x28] sm:$0xff] %v5258
      %5291 = vst [vmem:[#allocation2 + $0x30] sm:$0xff] %v5259
      %5292 = vst [vmem:[#allocation2 + $0x38] sm:$0xff] %v5260
      %5293 = vst [vmem:[#allocation2 + $0x40] sm:$0xff] %v5261
      %5294 = vst [vmem:[#allocation2 + $0x48] sm:$0xff] %v5262
      %5295 = vst [vmem:[#allocation2 + $0x50] sm:$0xff] %v5263
      %5296 = vst [vmem:[#allocation2 + $0x58] sm:$0xff] %v5264
      %5297 = vst [vmem:[#allocation2 + $0x60] sm:$0xff] %v5265
      %5298 = vst [vmem:[#allocation2 + $0x68] sm:$0xff] %v5266
      %5299 = vst [vmem:[#allocation2 + $0x70] sm:$0xff] %v5267
      %5300 = vst [vmem:[#allocation2 + $0x78] sm:$0xff] %v5268
      %5301 = vst [vmem:[#allocation2 + $0x80] sm:$0xff] %v5269
      %5302 = vst [vmem:[#allocation2 + $0x88] sm:$0xff] %v5270
      %5303 = vst [vmem:[#allocation2 + $0x90] sm:$0xff] %v5271
      %5304 = vst [vmem:[#allocation2 + $0x98] sm:$0xff] %v5272
      %5305 = vst [vmem:[#allocation2 + $0xa0] sm:$0xff] %v5273
      %5306 = vst [vmem:[#allocation2 + $0xa8] sm:$0xff] %v5274
      %5307 = vst [vmem:[#allocation2 + $0xb0] sm:$0xff] %v5275
      %5308 = vst [vmem:[#allocation2 + $0xb8] sm:$0xff] %v5276
      %5309 = vst [vmem:[#allocation2 + $0xc0] sm:$0xff] %v5277
      %5310 = vst [vmem:[#allocation2 + $0xc8] sm:$0xff] %v5278
      %5311 = vst [vmem:[#allocation2 + $0xd0] sm:$0xff] %v5279
      %5312 = vst [vmem:[#allocation2 + $0xd8] sm:$0xff] %v5280
      %5313 = vst [vmem:[#allocation2 + $0xe0] sm:$0xff] %v5281
      %5314 = vst [vmem:[#allocation2 + $0xe8] sm:$0xff] %v5282
      %5315 = vst [vmem:[#allocation2 + $0xf0] sm:$0xff] %v5283
      %5316 = vst [vmem:[#allocation2 + $0xf8] sm:$0xff] %v5284
      %p5317 = scmp.eq.s32.totalorder %s23, 2
      // Predicated region
      $region37: #{tpu_custom_call.1} parent=31 // pred_check
        %p5318 = pneg %p5317
      $region38: #{tpu_custom_call.1} parent=31 // pred_check_branch
        %5320 = sbr.rel (%p5318) target = $region40
      $region39: #{tpu_custom_call.1} parent=31 // pred_region
        %v5321 = vld [vmem:[#allocation2] sm:$0xff]
        %v5322 = vld [vmem:[#allocation2 + $0x8] sm:$0xff]
        %v5323 = vld [vmem:[#allocation2 + $0x10] sm:$0xff]
        %v5324 = vld [vmem:[#allocation2 + $0x18] sm:$0xff]
        %v5325 = vld [vmem:[#allocation2 + $0x20] sm:$0xff]
        %v5326 = vld [vmem:[#allocation2 + $0x28] sm:$0xff]
        %v5327 = vld [vmem:[#allocation2 + $0x30] sm:$0xff]
        %v5328 = vld [vmem:[#allocation2 + $0x38] sm:$0xff]
        %v5329 = vld [vmem:[#allocation2 + $0x40] sm:$0xff]
        %v5330 = vld [vmem:[#allocation2 + $0x48] sm:$0xff]
        %v5331 = vld [vmem:[#allocation2 + $0x50] sm:$0xff]
        %v5332 = vld [vmem:[#allocation2 + $0x58] sm:$0xff]
        %v5333 = vld [vmem:[#allocation2 + $0x60] sm:$0xff]
        %v5334 = vld [vmem:[#allocation2 + $0x68] sm:$0xff]
        %v5335 = vld [vmem:[#allocation2 + $0x70] sm:$0xff]
        %v5336 = vld [vmem:[#allocation2 + $0x78] sm:$0xff]
        %v5337 = vld [vmem:[#allocation2 + $0x80] sm:$0xff]
        %v5338 = vld [vmem:[#allocation2 + $0x88] sm:$0xff]
        %v5339 = vld [vmem:[#allocation2 + $0x90] sm:$0xff]
        %v5340 = vld [vmem:[#allocation2 + $0x98] sm:$0xff]
        %v5341 = vld [vmem:[#allocation2 + $0xa0] sm:$0xff]
        %v5342 = vld [vmem:[#allocation2 + $0xa8] sm:$0xff]
        %v5343 = vld [vmem:[#allocation2 + $0xb0] sm:$0xff]
        %v5344 = vld [vmem:[#allocation2 + $0xb8] sm:$0xff]
        %v5345 = vld [vmem:[#allocation2 + $0xc0] sm:$0xff]
        %v5346 = vld [vmem:[#allocation2 + $0xc8] sm:$0xff]
        %v5347 = vld [vmem:[#allocation2 + $0xd0] sm:$0xff]
        %v5348 = vld [vmem:[#allocation2 + $0xd8] sm:$0xff]
        %v5349 = vld [vmem:[#allocation2 + $0xe0] sm:$0xff]
        %v5350 = vld [vmem:[#allocation2 + $0xe8] sm:$0xff]
        %v5351 = vld [vmem:[#allocation2 + $0xf0] sm:$0xff]
        %v5352 = vld [vmem:[#allocation2 + $0xf8] sm:$0xff]
        %v5353 = vld [vmem:[%s254] sm:$0x1]
        %v5355 = vlaneseq
        %v5356 = vshrl.u32 %v5355, 7
        %v5357 = vsub.s32 0, %v5356
        %v5358 = vrot.slane %v5353, %v5357
        %v5360 = vadd.f32 %v5321, %v5358
        %v5361 = vadd.f32 %v5322, %v5358
        %v5362 = vadd.f32 %v5323, %v5358
        %v5363 = vadd.f32 %v5324, %v5358
        %v5364 = vadd.f32 %v5325, %v5358
        %v5365 = vadd.f32 %v5326, %v5358
        %v5366 = vadd.f32 %v5327, %v5358
        %v5367 = vadd.f32 %v5328, %v5358
        %v5368 = vadd.f32 %v5329, %v5358
        %v5369 = vadd.f32 %v5330, %v5358
        %v5370 = vadd.f32 %v5331, %v5358
        %v5371 = vadd.f32 %v5332, %v5358
        %v5372 = vadd.f32 %v5333, %v5358
        %v5373 = vadd.f32 %v5334, %v5358
        %v5374 = vadd.f32 %v5335, %v5358
        %v5375 = vadd.f32 %v5336, %v5358
        %v5376 = vadd.f32 %v5337, %v5358
        %v5377 = vadd.f32 %v5338, %v5358
        %v5378 = vadd.f32 %v5339, %v5358
        %v5379 = vadd.f32 %v5340, %v5358
        %v5380 = vadd.f32 %v5341, %v5358
        %v5381 = vadd.f32 %v5342, %v5358
        %v5382 = vadd.f32 %v5343, %v5358
        %v5383 = vadd.f32 %v5344, %v5358
        %v5384 = vadd.f32 %v5345, %v5358
        %v5385 = vadd.f32 %v5346, %v5358
        %v5386 = vadd.f32 %v5347, %v5358
        %v5387 = vadd.f32 %v5348, %v5358
        %v5388 = vadd.f32 %v5349, %v5358
        %v5389 = vadd.f32 %v5350, %v5358
        %v5390 = vadd.f32 %v5351, %v5358
        %v5391 = vadd.f32 %v5352, %v5358
        %vm5392 = vcmask 64512
        %5393 = vst.msk [vmem:[%s266] sm:$0xff] %vm5392, %v5360
        %5394 = vst.msk [vmem:[%s266 + $0x8] sm:$0xff] %vm5392, %v5361
        %5395 = vst.msk [vmem:[%s266 + $0x10] sm:$0xff] %vm5392, %v5362
        %5396 = vst.msk [vmem:[%s266 + $0x18] sm:$0xff] %vm5392, %v5363
        %5397 = vst.msk [vmem:[%s266 + $0x20] sm:$0xff] %vm5392, %v5364
        %5398 = vst.msk [vmem:[%s266 + $0x28] sm:$0xff] %vm5392, %v5365
        %5399 = vst.msk [vmem:[%s266 + $0x30] sm:$0xff] %vm5392, %v5366
        %5400 = vst.msk [vmem:[%s266 + $0x38] sm:$0xff] %vm5392, %v5367
        %5401 = vst.msk [vmem:[%s266 + $0x40] sm:$0xff] %vm5392, %v5368
        %5402 = vst.msk [vmem:[%s266 + $0x48] sm:$0xff] %vm5392, %v5369
        %5403 = vst.msk [vmem:[%s266 + $0x50] sm:$0xff] %vm5392, %v5370
        %5404 = vst.msk [vmem:[%s266 + $0x58] sm:$0xff] %vm5392, %v5371
        %5405 = vst.msk [vmem:[%s266 + $0x60] sm:$0xff] %vm5392, %v5372
        %5406 = vst.msk [vmem:[%s266 + $0x68] sm:$0xff] %vm5392, %v5373
        %5407 = vst.msk [vmem:[%s266 + $0x70] sm:$0xff] %vm5392, %v5374
        %5408 = vst.msk [vmem:[%s266 + $0x78] sm:$0xff] %vm5392, %v5375
        %5409 = vst.msk [vmem:[%s266 + $0x80] sm:$0xff] %vm5392, %v5376
        %5410 = vst.msk [vmem:[%s266 + $0x88] sm:$0xff] %vm5392, %v5377
        %5411 = vst.msk [vmem:[%s266 + $0x90] sm:$0xff] %vm5392, %v5378
        %5412 = vst.msk [vmem:[%s266 + $0x98] sm:$0xff] %vm5392, %v5379
        %5413 = vst.msk [vmem:[%s266 + $0xa0] sm:$0xff] %vm5392, %v5380
        %5414 = vst.msk [vmem:[%s266 + $0xa8] sm:$0xff] %vm5392, %v5381
        %5415 = vst.msk [vmem:[%s266 + $0xb0] sm:$0xff] %vm5392, %v5382
        %5416 = vst.msk [vmem:[%s266 + $0xb8] sm:$0xff] %vm5392, %v5383
        %5417 = vst.msk [vmem:[%s266 + $0xc0] sm:$0xff] %vm5392, %v5384
        %5418 = vst.msk [vmem:[%s266 + $0xc8] sm:$0xff] %vm5392, %v5385
        %5419 = vst.msk [vmem:[%s266 + $0xd0] sm:$0xff] %vm5392, %v5386
        %5420 = vst.msk [vmem:[%s266 + $0xd8] sm:$0xff] %vm5392, %v5387
        %5421 = vst.msk [vmem:[%s266 + $0xe0] sm:$0xff] %vm5392, %v5388
        %5422 = vst.msk [vmem:[%s266 + $0xe8] sm:$0xff] %vm5392, %v5389
        %5423 = vst.msk [vmem:[%s266 + $0xf0] sm:$0xff] %vm5392, %v5390
        %5424 = vst.msk [vmem:[%s266 + $0xf8] sm:$0xff] %vm5392, %v5391
      $region40: #{tpu_custom_call.1} parent=31 // pred_fallthru
        _
      %p5425 = scmp.lt.s32.totalorder %s20, 1
      %s5426 = scalar_select %p5425, %s20, 1
      %p5427 = scmp.lt.s32.totalorder %s22, 7
      %s5428 = scalar_select %p5427, %s22, 7
      %p5429 = scmp.lt.s32.totalorder %s21, 0
      %s5430 = scalar_select %p5429, %s21, 0
      %s5431 = smul.addr %s5428, 32
      %s5432 = sadd.s32 %s5430, %s5431
      %s5433 = smul.addr %s5426, 256
      %s5434 = sadd.s32 %s5432, %s5433
      %s5435 = smul.addr %s5434, 8
      %s5436 = scalar_lea.vmem %s3, %s5435
      // Predicated region
      $region41: #{tpu_custom_call.1} parent=31 // pred_check
        %p5437 = pneg %p144
      $region42: #{tpu_custom_call.1} parent=31 // pred_check_branch
        %5439 = sbr.rel (%p5437) target = $region44
      $region43: #{tpu_custom_call.1} parent=31 // pred_region
        _
      $region44: #{tpu_custom_call.1} parent=31 // pred_fallthru
        _
    $region32: #{tpu_custom_call.1} parent=5 // pred_fallthru
      _
    %p5440 = scmp.le.s32.totalorder 2, %s9
    // Predicated region
    $region45: #{tpu_custom_call.1} parent=5 // pred_check
      %p5441 = pneg %p5440
    $region46: #{tpu_custom_call.1} parent=5 // pred_check_branch
      %5443 = sbr.rel (%p5441) target = $region48
    $region47: #{tpu_custom_call.1} parent=5 // pred_region
      %s5444 = ssub.s32 %s9, 2
      // Predicated region
      $region49: #{tpu_custom_call.1} parent=47 // pred_check
        %p5445 = pneg %p150
      $region50: #{tpu_custom_call.1} parent=47 // pred_check_branch
        %5447 = sbr.rel (%p5445) target = $region52
      $region51: #{tpu_custom_call.1} parent=47 // pred_region
        %p5448 = scmp.lt.s32.totalorder %s24, 1
        %s5449 = scalar_select %p5448, %s24, 1
        %p5450 = scmp.lt.s32.totalorder %s26, 7
        %s5451 = scalar_select %p5450, %s26, 7
        %p5452 = scmp.lt.s32.totalorder %s25, 0
        %s5453 = scalar_select %p5452, %s25, 0
        %s5454 = smul.addr %s5451, 32
        %s5455 = sadd.s32 %s5453, %s5454
        %s5456 = smul.addr %s5449, 256
        %s5457 = sadd.s32 %s5455, %s5456
        %s5458 = smul.addr %s5457, 8
        %s5459 = scalar_lea.vmem %s3, %s5458
      $region52: #{tpu_custom_call.1} parent=47 // pred_fallthru
        _
    $region48: #{tpu_custom_call.1} parent=5 // pred_fallthru
      _
  $region6: #{tpu_custom_call.1} parent=0 // loop_footer
    %s13 = sadd.s32 1, %s9
  $region7: #{tpu_custom_call.1} parent=0 // loop_footer_branch
    %8 = sbr.rel target = $region3
  $region8: #{tpu_custom_call.1} parent=0 // loop_exit
    _

</llo_original>
